<compile_context>
chip_gen: v5e
topology: v5e:2x2
jax: 0.10.0
libtpu: 0.0.40
codegen_flags: <defaults>
</compile_context>

<pallas_src>
import jax
import jax.numpy as jnp
from jax.experimental import pallas as pl
from jax.experimental.pallas import tpu as pltpu

SELU_ALPHA = 1.6732632423543772
SELU_SCALE = 1.0507009873554805

IN_FEATURES = 2 * 137 * 3     # 822
OUT_FEATURES = 10 * 137 * 3   # 4110

# Output-feature tiling of the last (dominant, 512x4110) layer.
# 2 tiles of 2176 (= 17*128): only ~0.7 us of grid overhead, perfect 2-way
# split across v7x's two TensorCores, 5.9% dead columns.
NUM_TILES = 2
TILE_N = 2176                 # multiple of 128
N_PADDED = NUM_TILES * TILE_N  # 4352 >= 4110


def _selu(x):
    # torch.selu: scale * (max(0, x) + min(0, alpha * (exp(x) - 1)))
    return SELU_SCALE * jnp.where(x > 0, x, SELU_ALPHA * (jnp.exp(x) - 1.0))


def _round_up(n, m):
    return (n + m - 1) // m * m


def mlp_kernel(x_ref, w1_ref, b1_ref, w2_ref, b2_ref, w3_ref, b3_ref, o_ref):
    """Fused 3-layer MLP with SELU, tiled over the last layer's output columns.

    Every grid step is self-contained: layers 1-2 are recomputed (cheap at
    Bp=8; their weight blocks have constant index so they are DMA'd only once
    per core), then one w3 output tile is produced.  All dots are bf16 x bf16
    with f32 accumulation; bias-add and SELU are f32.
    """
    h = jnp.dot(x_ref[...], w1_ref[...], preferred_element_type=jnp.float32)
    h = _selu(h + b1_ref[...])
    h = jnp.dot(h.astype(jnp.bfloat16), w2_ref[...],
                preferred_element_type=jnp.float32)
    h2 = _selu(h + b2_ref[...])
    o_ref[...] = (
        jnp.dot(h2.astype(jnp.bfloat16), w3_ref[...],
                preferred_element_type=jnp.float32)
        + b3_ref[...]
    )


def prepare_params(params):
    """One-time (NOT per-call) padding + bf16 cast of the weights.

    Weights are stored transposed to (in_features, out_features), zero-padded
    to (8,128)-aligned shapes (exact zeros on the padded contraction rows),
    and cast to bf16 for HBM streaming.  Biases stay f32.
    """
    w1, b1 = params["w1"], params["b1"]
    w2, b2 = params["w2"], params["b2"]
    w3, b3 = params["w3"], params["b3"]
    hidden = w1.shape[1]

    Kp = _round_up(IN_FEATURES, 128)
    Hp = _round_up(hidden, 128)
    Np = N_PADDED

    pad2 = lambda a, shape, dt: (
        jnp.zeros(shape, dt).at[: a.shape[0], : a.shape[1]].set(a.astype(dt))
    )
    return {
        "w1": pad2(w1, (Kp, Hp), jnp.bfloat16),
        "b1": pad2(b1[None, :], (1, Hp), jnp.float32),
        "w2": pad2(w2, (Hp, Hp), jnp.bfloat16),
        "b2": pad2(b2[None, :], (1, Hp), jnp.float32),
        "w3": pad2(w3, (Hp, Np), jnp.bfloat16),
        "b3": pad2(b3[None, :], (1, Np), jnp.float32),
    }


@jax.jit
def pose_interpolator_fc_forward(x, padded):
    """x: (B, 2, 137, 3) float32 -> (B, 10, 137, 3) float32.

    `padded` comes from prepare_params (already padded + bf16); the only
    per-call host-side work is flattening, padding and bf16-casting x (a few
    KB).
    """
    B = x.shape[0]
    Kp, Hp = padded["w1"].shape
    Np = padded["w3"].shape[1]
    Bp = _round_up(max(B, 8), 8)

    # Flatten exactly like torch .view(batch, 2*137*3) (row-major), cast the
    # (tiny) activation side to bf16 so every dot is native bf16 x bf16.
    x2 = x.reshape(B, IN_FEATURES)
    xp = jnp.zeros((Bp, Kp), jnp.bfloat16).at[:B, :IN_FEATURES].set(
        x2.astype(jnp.bfloat16))

    # Advisory cost hint so XLA schedules the pad / slice around the call.
    flops = 2 * Bp * (Kp * Hp + Hp * Hp + Hp * Np)
    bytes_accessed = (
        (Kp * Hp + Hp * Hp + Hp * Np) * 2          # bf16 weights
        + (Hp + Hp + Np) * 4                       # f32 biases
        + Bp * Kp * 2                              # bf16 input
        + Bp * Np * 4                              # f32 output
    )
    cost = pl.CostEstimate(flops=flops, transcendentals=2 * Bp * Hp,
                           bytes_accessed=bytes_accessed)

    out_p = pl.pallas_call(
        mlp_kernel,
        out_shape=jax.ShapeDtypeStruct((Bp, Np), jnp.float32),
        grid=(NUM_TILES,),
        in_specs=[
            pl.BlockSpec((Bp, Kp), lambda n: (0, 0)),       # x (bf16)
            pl.BlockSpec((Kp, Hp), lambda n: (0, 0)),       # w1 (bf16)
            pl.BlockSpec((1, Hp), lambda n: (0, 0)),        # b1 (f32)
            pl.BlockSpec((Hp, Hp), lambda n: (0, 0)),       # w2 (bf16)
            pl.BlockSpec((1, Hp), lambda n: (0, 0)),        # b2 (f32)
            pl.BlockSpec((Hp, TILE_N), lambda n: (0, n)),   # w3 tile (bf16)
            pl.BlockSpec((1, TILE_N), lambda n: (0, n)),    # b3 tile (f32)
        ],
        out_specs=pl.BlockSpec((Bp, TILE_N), lambda n: (0, n)),
        compiler_params=pltpu.CompilerParams(
            # Every step is self-contained -> safe to mark parallel; on v7x
            # the two w3 halves run on the two TensorCores, on v5e/v6e the
            # axis simply runs as 2 sequential steps.
            dimension_semantics=("parallel",),
            # Footprint ~7.5 MiB double-buffered; 32 MiB fits every chip
            # generation (incl. v7x's 64 MiB physical VMEM).
            vmem_limit_bytes=32 << 20,
        ),
        cost_estimate=cost,
    )(xp, padded["w1"], padded["b1"], padded["w2"], padded["b2"],
      padded["w3"], padded["b3"])

    out = out_p[:B, :OUT_FEATURES]
    return out.reshape(B, 10, 137, 3)


def init_params(key, hidden_dim):
    """Deterministic synthetic parameters matching the nn.Linear shapes
    (stored already transposed to (in_features, out_features)), in f32."""
    k1, k2, k3, k4, k5, k6 = jax.random.split(key, 6)
    s = 0.02
    return {
        "w1": s * jax.random.normal(k1, (IN_FEATURES, hidden_dim), jnp.float32),
        "b1": s * jax.random.normal(k2, (hidden_dim,), jnp.float32),
        "w2": s * jax.random.normal(k3, (hidden_dim, hidden_dim), jnp.float32),
        "b2": s * jax.random.normal(k4, (hidden_dim,), jnp.float32),
        "w3": s * jax.random.normal(k5, (hidden_dim, OUT_FEATURES), jnp.float32),
        "b3": s * jax.random.normal(k6, (OUT_FEATURES,), jnp.float32),
    }


def _reference_forward(x, params):
    """Pure-JAX f32 reference reproducing the PyTorch forward."""
    B = x.shape[0]
    h = x.reshape(B, IN_FEATURES)
    h = _selu(h @ params["w1"] + params["b1"])
    h = _selu(h @ params["w2"] + params["b2"])
    h = h @ params["w3"] + params["b3"]
    return h.reshape(B, 10, 137, 3)


if __name__ == "__main__":
    key = jax.random.PRNGKey(0)
    kx, kp = jax.random.split(key)

    batch = 2
    hidden_dim = 512  # module default

    x = jax.random.normal(kx, (batch, 2, 137, 3), jnp.float32)
    params = init_params(kp, hidden_dim)

    # One-time weight prep (padding + bf16 cast) — NOT inside the per-call path.
    padded = jax.block_until_ready(prepare_params(params))

    out = pose_interpolator_fc_forward(x, padded)
    out = jax.block_until_ready(out)
    assert out.shape == (batch, 10, 137, 3), out.shape

    ref = _reference_forward(x, params)
    # bf16 weights AND bf16-cast activations (f32 accumulation / f32 SELU /
    # f32 bias) -> small, bounded drift vs. the f32 reference.
    err = float(jnp.max(jnp.abs(out - ref)))
    assert err < 3e-2, err

    print("KERNEL_OK")
</pallas_src>

<mosaic_0001>
module attributes {stable_mosaic.version = 11 : i64} {
  func.func @mlp_kernel(%arg0: i32, %arg1: memref<8x896xbf16, #tpu.memory_space<vmem>>, %arg2: memref<896x512xbf16, #tpu.memory_space<vmem>>, %arg3: memref<1x512xf32, #tpu.memory_space<vmem>>, %arg4: memref<512x512xbf16, #tpu.memory_space<vmem>>, %arg5: memref<1x512xf32, #tpu.memory_space<vmem>>, %arg6: memref<512x2176xbf16, #tpu.memory_space<vmem>>, %arg7: memref<1x2176xf32, #tpu.memory_space<vmem>>, %arg8: memref<8x2176xf32, #tpu.memory_space<vmem>>) attributes {dimension_semantics = [#tpu.dimension_semantics<parallel>], iteration_bounds = array<i64: 2>, scalar_prefetch = 0 : i64, scratch_operands = 0 : i64, tpu.core_type = #tpu.core_type<tc>, window_params = [{pipeline_mode = #tpu.pipeline_mode<synchronous>, transform_indices = @transform_0, window_bounds = array<i64: 8, 896>}, {pipeline_mode = #tpu.pipeline_mode<synchronous>, transform_indices = @transform_1, window_bounds = array<i64: 896, 512>}, {pipeline_mode = #tpu.pipeline_mode<synchronous>, transform_indices = @transform_2, window_bounds = array<i64: 1, 512>}, {pipeline_mode = #tpu.pipeline_mode<synchronous>, transform_indices = @transform_3, window_bounds = array<i64: 512, 512>}, {pipeline_mode = #tpu.pipeline_mode<synchronous>, transform_indices = @transform_4, window_bounds = array<i64: 1, 512>}, {transform_indices = @transform_5, window_bounds = array<i64: 512, 2176>}, {transform_indices = @transform_6, window_bounds = array<i64: 1, 2176>}, {transform_indices = @transform_7, window_bounds = array<i64: 8, 2176>}]} {
    %c0 = arith.constant 0 : index
    %c0_0 = arith.constant 0 : index
    %0 = vector.load %arg1[%c0, %c0_0] : memref<8x896xbf16, #tpu.memory_space<vmem>>, vector<8x896xbf16>
    %c0_1 = arith.constant 0 : index
    %c0_2 = arith.constant 0 : index
    %1 = vector.load %arg2[%c0_1, %c0_2] : memref<896x512xbf16, #tpu.memory_space<vmem>>, vector<896x512xbf16>
    %cst = arith.constant dense<0.000000e+00> : vector<8x512xf32>
    %2 = tpu.matmul %0, %1, %cst {dimension_numbers = #tpu.dot_dimension_numbers<[1], [0], [0], [1], [0, 0, 1, 1], [], []>} : vector<8x896xbf16>, vector<896x512xbf16>, vector<8x512xf32> -> vector<8x512xf32>
    %c0_3 = arith.constant 0 : index
    %c0_4 = arith.constant 0 : index
    %3 = vector.load %arg3[%c0_3, %c0_4] : memref<1x512xf32, #tpu.memory_space<vmem>>, vector<1x512xf32>
    %4 = vector.broadcast %3 : vector<1x512xf32> to vector<8x512xf32>
    %5 = arith.addf %2, %4 : vector<8x512xf32>
    %cst_5 = arith.constant 0.000000e+00 : f32
    %6 = vector.broadcast %cst_5 : f32 to vector<8x512xf32>
    %7 = arith.cmpf ogt, %5, %6 : vector<8x512xf32>
    %8 = math.exp %5 : vector<8x512xf32>
    %cst_6 = arith.constant 1.000000e+00 : f32
    %9 = vector.broadcast %cst_6 : f32 to vector<8x512xf32>
    %10 = arith.subf %8, %9 : vector<8x512xf32>
    %cst_7 = arith.constant 1.67326319 : f32
    %11 = vector.broadcast %cst_7 : f32 to vector<8x512xf32>
    %12 = arith.mulf %11, %10 : vector<8x512xf32>
    %13 = arith.select %7, %5, %12 : vector<8x512xi1>, vector<8x512xf32>
    %cst_8 = arith.constant 1.05070102 : f32
    %14 = vector.broadcast %cst_8 : f32 to vector<8x512xf32>
    %15 = arith.mulf %14, %13 : vector<8x512xf32>
    %16 = arith.truncf %15 : vector<8x512xf32> to vector<8x512xbf16>
    %c0_9 = arith.constant 0 : index
    %c0_10 = arith.constant 0 : index
    %17 = vector.load %arg4[%c0_9, %c0_10] : memref<512x512xbf16, #tpu.memory_space<vmem>>, vector<512x512xbf16>
    %cst_11 = arith.constant dense<0.000000e+00> : vector<8x512xf32>
    %18 = tpu.matmul %16, %17, %cst_11 {dimension_numbers = #tpu.dot_dimension_numbers<[1], [0], [0], [1], [0, 0, 1, 1], [], []>} : vector<8x512xbf16>, vector<512x512xbf16>, vector<8x512xf32> -> vector<8x512xf32>
    %c0_12 = arith.constant 0 : index
    %c0_13 = arith.constant 0 : index
    %19 = vector.load %arg5[%c0_12, %c0_13] : memref<1x512xf32, #tpu.memory_space<vmem>>, vector<1x512xf32>
    %20 = vector.broadcast %19 : vector<1x512xf32> to vector<8x512xf32>
    %21 = arith.addf %18, %20 : vector<8x512xf32>
    %cst_14 = arith.constant 0.000000e+00 : f32
    %22 = vector.broadcast %cst_14 : f32 to vector<8x512xf32>
    %23 = arith.cmpf ogt, %21, %22 : vector<8x512xf32>
    %24 = math.exp %21 : vector<8x512xf32>
    %cst_15 = arith.constant 1.000000e+00 : f32
    %25 = vector.broadcast %cst_15 : f32 to vector<8x512xf32>
    %26 = arith.subf %24, %25 : vector<8x512xf32>
    %cst_16 = arith.constant 1.67326319 : f32
    %27 = vector.broadcast %cst_16 : f32 to vector<8x512xf32>
    %28 = arith.mulf %27, %26 : vector<8x512xf32>
    %29 = arith.select %23, %21, %28 : vector<8x512xi1>, vector<8x512xf32>
    %cst_17 = arith.constant 1.05070102 : f32
    %30 = vector.broadcast %cst_17 : f32 to vector<8x512xf32>
    %31 = arith.mulf %30, %29 : vector<8x512xf32>
    %32 = arith.truncf %31 : vector<8x512xf32> to vector<8x512xbf16>
    %c0_18 = arith.constant 0 : index
    %c0_19 = arith.constant 0 : index
    %33 = vector.load %arg6[%c0_18, %c0_19] : memref<512x2176xbf16, #tpu.memory_space<vmem>>, vector<512x2176xbf16>
    %cst_20 = arith.constant dense<0.000000e+00> : vector<8x2176xf32>
    %34 = tpu.matmul %32, %33, %cst_20 {dimension_numbers = #tpu.dot_dimension_numbers<[1], [0], [0], [1], [0, 0, 1, 1], [], []>} : vector<8x512xbf16>, vector<512x2176xbf16>, vector<8x2176xf32> -> vector<8x2176xf32>
    %c0_21 = arith.constant 0 : index
    %c0_22 = arith.constant 0 : index
    %35 = vector.load %arg7[%c0_21, %c0_22] : memref<1x2176xf32, #tpu.memory_space<vmem>>, vector<1x2176xf32>
    %36 = vector.broadcast %35 : vector<1x2176xf32> to vector<8x2176xf32>
    %37 = arith.addf %34, %36 : vector<8x2176xf32>
    %c0_23 = arith.constant 0 : index
    %c0_24 = arith.constant 0 : index
    %38 = vector.load %arg8[%c0_23, %c0_24] : memref<8x2176xf32, #tpu.memory_space<vmem>>, vector<8x2176xf32>
    tpu.vector_store %arg8[%c0_23, %c0_24], %37 {strides = array<i32>} : memref<8x2176xf32, #tpu.memory_space<vmem>>, vector<8x2176xf32>,
    return
  }
  func.func @transform_0(%arg0: i32) -> (i32, i32) {
    %c0_i32 = arith.constant 0 : i32
    %c0_i32_0 = arith.constant 0 : i32
    %c0_i32_1 = arith.constant 0 : i32
    return %c0_i32, %c0_i32_0 : i32, i32
  }
  func.func @transform_1(%arg0: i32) -> (i32, i32) {
    %c0_i32 = arith.constant 0 : i32
    %c0_i32_0 = arith.constant 0 : i32
    %c0_i32_1 = arith.constant 0 : i32
    return %c0_i32, %c0_i32_0 : i32, i32
  }
  func.func @transform_2(%arg0: i32) -> (i32, i32) {
    %c0_i32 = arith.constant 0 : i32
    %c0_i32_0 = arith.constant 0 : i32
    %c0_i32_1 = arith.constant 0 : i32
    return %c0_i32, %c0_i32_0 : i32, i32
  }
  func.func @transform_3(%arg0: i32) -> (i32, i32) {
    %c0_i32 = arith.constant 0 : i32
    %c0_i32_0 = arith.constant 0 : i32
    %c0_i32_1 = arith.constant 0 : i32
    return %c0_i32, %c0_i32_0 : i32, i32
  }
  func.func @transform_4(%arg0: i32) -> (i32, i32) {
    %c0_i32 = arith.constant 0 : i32
    %c0_i32_0 = arith.constant 0 : i32
    %c0_i32_1 = arith.constant 0 : i32
    return %c0_i32, %c0_i32_0 : i32, i32
  }
  func.func @transform_5(%arg0: i32) -> (i32, i32) {
    %c0_i32 = arith.constant 0 : i32
    %c0_i32_0 = arith.constant 0 : i32
    return %c0_i32, %arg0 : i32, i32
  }
  func.func @transform_6(%arg0: i32) -> (i32, i32) {
    %c0_i32 = arith.constant 0 : i32
    %c0_i32_0 = arith.constant 0 : i32
    return %c0_i32, %arg0 : i32, i32
  }
  func.func @transform_7(%arg0: i32) -> (i32, i32) {
    %c0_i32 = arith.constant 0 : i32
    %c0_i32_0 = arith.constant 0 : i32
    return %c0_i32, %arg0 : i32, i32
  }
}

</mosaic_0001>

<llo_original>
// kernel: pose_interpolator_fc_forward.1
$region0: #{pose_interpolator_fc_forward.1}
  #allocation0 [shape = 'u32[]', space=smem, size = 0x4, offset = 0x4, fixed_abs, tag = 'smem constant byte address 0x4 - core index']
  #allocation1 [shape = 'u32[72,128]{1,0:T(1,128)}', space=vmem, size = 0x9000, scoped, tag = 'internal scratch']
  %s0 = inlined_call_operand.vmem [shape: bf16[8,896], index: 0, kind: input, shape index: {}]
  %s1 = inlined_call_operand.hbm [shape: bf16[896,512], index: 1, kind: input, shape index: {}]
  %s2 = inlined_call_operand.hbm [shape: f32[1,512], index: 2, kind: input, shape index: {}]
  %s3 = inlined_call_operand.hbm [shape: bf16[512,512], index: 3, kind: input, shape index: {}]
  %s4 = inlined_call_operand.hbm [shape: f32[1,512], index: 4, kind: input, shape index: {}]
  %s5 = inlined_call_operand.hbm [shape: bf16[512,4352], index: 5, kind: input, shape index: {}]
  %s6 = inlined_call_operand.hbm [shape: f32[1,4352], index: 6, kind: input, shape index: {}]
  %s7 = inlined_call_operand.vmem [shape: f32[8,4352], index: 7, kind: output, shape index: {}]
  %s8 = sld [smem:[#allocation0]]
  $region85: #{pose_interpolator_fc_forward.1} parent=0
    _
  %s10 = ssub.s32 1, %s8
  %s11 = scalar_select 0, %s10, %s8
  $region1: #{pose_interpolator_fc_forward.1} parent=0
    #allocation2 [shape = 'u8[917504]{0}', space=vmem, size = 0xe0000, scoped, tag = 'input window, operand 1, single buffered']
    #allocation3 [shape = 's32[2]{0}', space=sflag, size = 0x8, scoped, tag = 'scoped memory for pose_interpolator_fc_forward.1']
    #allocation4 [shape = 'u8[2048]{0}', space=vmem, size = 0x800, scoped, tag = 'input window, operand 2, single buffered']
    #allocation5 [shape = 's32[1]{0}', space=sflag, size = 0x4, scoped, tag = 'scoped memory for pose_interpolator_fc_forward.1']
    #allocation6 [shape = 'u8[524288]{0}', space=vmem, size = 0x80000, scoped, tag = 'input window, operand 3, single buffered']
    #allocation7 [shape = 'u8[2048]{0}', space=vmem, size = 0x800, scoped, tag = 'input window, operand 4, single buffered']
    #allocation8 [shape = 's32[1]{0}', space=sflag, size = 0x4, scoped, tag = 'scoped memory for pose_interpolator_fc_forward.1']
    #allocation9 [shape = 'u8[4456448]{0}', space=vmem, size = 0x440000, scoped, tag = 'input window, operand 5']
    #allocation10 [shape = 'u8[17408]{0}', space=vmem, size = 0x4400, scoped, tag = 'input window, operand 6']
    %12 = vsyncpa [#allocation3], 0
    %13 = vsyncpa [#allocation5], 0
    %14 = vsyncpa [#allocation8], 0
    loop: start=0, step=1, limit=4
    $region2: #{pose_interpolator_fc_forward.1} parent=1 // loop_pre_header
      _
    $region3: #{pose_interpolator_fc_forward.1} parent=1 // loop_header
      %s16 = sphi 0, %s20
      %p17 = scmp.ge.s32.totalorder %s16, 4
      %s24 = sphi 0, %s24
      %s26 = sphi 0, %s24
      %s27 = sphi 0, %s26
      %s41 = sphi 0, %s27
      %s45 = sphi 0, %s45
      %s47 = sphi 0, %s45
      %s48 = sphi 0, %s47
      %s62 = sphi 0, %s48
      %s66 = sphi 0, %s66
      %s68 = sphi 0, %s66
      %s69 = sphi 0, %s68
      %s83 = sphi 0, %s69
      %s87 = sphi 0, %s87
      %s89 = sphi 0, %s87
      %s90 = sphi 0, %s89
      %s104 = sphi 0, %s90
      %s108 = sphi 0, %s108
      %s110 = sphi 0, %s108
      %s111 = sphi 0, %s110
      %s125 = sphi 0, %s111
      %s131 = sphi 0, %s133
      %s134 = sphi 0, %s131
      %s135 = sphi 0, %s134
      %s151 = sphi 0, %s135
      %s157 = sphi 0, %s159
      %s160 = sphi 0, %s157
      %s161 = sphi 0, %s160
      %s177 = sphi 0, %s161
      %s183 = sphi 0, %s185
      %s186 = sphi 0, %s183
      %s187 = sphi 0, %s186
      %s203 = sphi 0, %s187
    $region4: #{pose_interpolator_fc_forward.1} parent=1 // loop_header_branch
      %19 = sbr.rel (%p17) target = $region8
    $region5: #{pose_interpolator_fc_forward.1} parent=1 // loop_body
      %s21 = ssub.s32 %s16, 1
      %s22 = ssub.s32 %s16, 2
      %s23 = sadd.s32 %s16, 1
      %s25 = sadd.s32 %s24, 1
      %p28 = scmp.eq.s32.totalorder %s16, 1
      %p29 = scmp.ne.s32.totalorder %s24, %s26
      %p30 = scmp.eq.s32.totalorder %s16, 0
      %p31 = por %p29, %p30
      %p32 = scmp.ne.s32.totalorder %s24, %s26
      %p33 = scmp.eq.s32.totalorder %s21, 1
      %p34 = por %p32, %p33
      %p35 = scmp.ne.s32.totalorder %s26, %s27
      %p36 = scmp.eq.s32.totalorder %s21, 0
      %p37 = por %p35, %p36
      %p38 = scmp.ne.s32.totalorder %s26, %s27
      %p39 = scmp.eq.s32.totalorder %s22, 1
      %p40 = por %p38, %p39
      %p42 = scmp.ne.s32.totalorder %s27, %s41
      %p43 = scmp.eq.s32.totalorder %s22, 0
      %p44 = por %p42, %p43
      %s46 = sadd.s32 %s45, 1
      %p49 = scmp.eq.s32.totalorder %s16, 1
      %p50 = scmp.ne.s32.totalorder %s45, %s47
      %p51 = scmp.eq.s32.totalorder %s16, 0
      %p52 = por %p50, %p51
      %p53 = scmp.ne.s32.totalorder %s45, %s47
      %p54 = scmp.eq.s32.totalorder %s21, 1
      %p55 = por %p53, %p54
      %p56 = scmp.ne.s32.totalorder %s47, %s48
      %p57 = scmp.eq.s32.totalorder %s21, 0
      %p58 = por %p56, %p57
      %p59 = scmp.ne.s32.totalorder %s47, %s48
      %p60 = scmp.eq.s32.totalorder %s22, 1
      %p61 = por %p59, %p60
      %p63 = scmp.ne.s32.totalorder %s48, %s62
      %p64 = scmp.eq.s32.totalorder %s22, 0
      %p65 = por %p63, %p64
      %s67 = sadd.s32 %s66, 1
      %p70 = scmp.eq.s32.totalorder %s16, 1
      %p71 = scmp.ne.s32.totalorder %s66, %s68
      %p72 = scmp.eq.s32.totalorder %s16, 0
      %p73 = por %p71, %p72
      %p74 = scmp.ne.s32.totalorder %s66, %s68
      %p75 = scmp.eq.s32.totalorder %s21, 1
      %p76 = por %p74, %p75
      %p77 = scmp.ne.s32.totalorder %s68, %s69
      %p78 = scmp.eq.s32.totalorder %s21, 0
      %p79 = por %p77, %p78
      %p80 = scmp.ne.s32.totalorder %s68, %s69
      %p81 = scmp.eq.s32.totalorder %s22, 1
      %p82 = por %p80, %p81
      %p84 = scmp.ne.s32.totalorder %s69, %s83
      %p85 = scmp.eq.s32.totalorder %s22, 0
      %p86 = por %p84, %p85
      %s88 = sadd.s32 %s87, 1
      %p91 = scmp.eq.s32.totalorder %s16, 1
      %p92 = scmp.ne.s32.totalorder %s87, %s89
      %p93 = scmp.eq.s32.totalorder %s16, 0
      %p94 = por %p92, %p93
      %p95 = scmp.ne.s32.totalorder %s87, %s89
      %p96 = scmp.eq.s32.totalorder %s21, 1
      %p97 = por %p95, %p96
      %p98 = scmp.ne.s32.totalorder %s89, %s90
      %p99 = scmp.eq.s32.totalorder %s21, 0
      %p100 = por %p98, %p99
      %p101 = scmp.ne.s32.totalorder %s89, %s90
      %p102 = scmp.eq.s32.totalorder %s22, 1
      %p103 = por %p101, %p102
      %p105 = scmp.ne.s32.totalorder %s90, %s104
      %p106 = scmp.eq.s32.totalorder %s22, 0
      %p107 = por %p105, %p106
      %s109 = sadd.s32 %s108, 1
      %p112 = scmp.eq.s32.totalorder %s16, 1
      %p113 = scmp.ne.s32.totalorder %s108, %s110
      %p114 = scmp.eq.s32.totalorder %s16, 0
      %p115 = por %p113, %p114
      %p116 = scmp.ne.s32.totalorder %s108, %s110
      %p117 = scmp.eq.s32.totalorder %s21, 1
      %p118 = por %p116, %p117
      %p119 = scmp.ne.s32.totalorder %s110, %s111
      %p120 = scmp.eq.s32.totalorder %s21, 0
      %p121 = por %p119, %p120
      %p122 = scmp.ne.s32.totalorder %s110, %s111
      %p123 = scmp.eq.s32.totalorder %s22, 1
      %p124 = por %p122, %p123
      %p126 = scmp.ne.s32.totalorder %s111, %s125
      %p127 = scmp.eq.s32.totalorder %s22, 0
      %p128 = por %p126, %p127
      %s129 = ssub.s32 %s16, %s23
      %p130 = scmp.eq.s32.totalorder %s129, 0
      %s132 = sadd.s32 %s131, 1
      %s133 = scalar_select %p130, %s131, %s132
      %p136 = pneg %p130
      %p137 = scmp.eq.s32.totalorder %s16, 1
      %p138 = por %p136, %p137
      %p139 = scmp.ne.s32.totalorder %s131, %s134
      %p140 = scmp.eq.s32.totalorder %s16, 0
      %p141 = por %p139, %p140
      %p142 = scmp.ne.s32.totalorder %s131, %s134
      %p143 = scmp.eq.s32.totalorder %s21, 1
      %p144 = por %p142, %p143
      %p145 = scmp.ne.s32.totalorder %s134, %s135
      %p146 = scmp.eq.s32.totalorder %s21, 0
      %p147 = por %p145, %p146
      %p148 = scmp.ne.s32.totalorder %s134, %s135
      %p149 = scmp.eq.s32.totalorder %s22, 1
      %p150 = por %p148, %p149
      %p152 = scmp.ne.s32.totalorder %s135, %s151
      %p153 = scmp.eq.s32.totalorder %s22, 0
      %p154 = por %p152, %p153
      %s155 = ssub.s32 %s16, %s23
      %p156 = scmp.eq.s32.totalorder %s155, 0
      %s158 = sadd.s32 %s157, 1
      %s159 = scalar_select %p156, %s157, %s158
      %p162 = pneg %p156
      %p163 = scmp.eq.s32.totalorder %s16, 1
      %p164 = por %p162, %p163
      %p165 = scmp.ne.s32.totalorder %s157, %s160
      %p166 = scmp.eq.s32.totalorder %s16, 0
      %p167 = por %p165, %p166
      %p168 = scmp.ne.s32.totalorder %s157, %s160
      %p169 = scmp.eq.s32.totalorder %s21, 1
      %p170 = por %p168, %p169
      %p171 = scmp.ne.s32.totalorder %s160, %s161
      %p172 = scmp.eq.s32.totalorder %s21, 0
      %p173 = por %p171, %p172
      %p174 = scmp.ne.s32.totalorder %s160, %s161
      %p175 = scmp.eq.s32.totalorder %s22, 1
      %p176 = por %p174, %p175
      %p178 = scmp.ne.s32.totalorder %s161, %s177
      %p179 = scmp.eq.s32.totalorder %s22, 0
      %p180 = por %p178, %p179
      %s181 = ssub.s32 %s16, %s23
      %p182 = scmp.eq.s32.totalorder %s181, 0
      %s184 = sadd.s32 %s183, 1
      %s185 = scalar_select %p182, %s183, %s184
      %p188 = pneg %p182
      %p189 = scmp.eq.s32.totalorder %s16, 1
      %p190 = por %p188, %p189
      %p191 = scmp.ne.s32.totalorder %s183, %s186
      %p192 = scmp.eq.s32.totalorder %s16, 0
      %p193 = por %p191, %p192
      %p194 = scmp.ne.s32.totalorder %s183, %s186
      %p195 = scmp.eq.s32.totalorder %s21, 1
      %p196 = por %p194, %p195
      %p197 = scmp.ne.s32.totalorder %s186, %s187
      %p198 = scmp.eq.s32.totalorder %s21, 0
      %p199 = por %p197, %p198
      %p200 = scmp.ne.s32.totalorder %s186, %s187
      %p201 = scmp.eq.s32.totalorder %s22, 1
      %p202 = por %p200, %p201
      %p204 = scmp.ne.s32.totalorder %s187, %s203
      %p205 = scmp.eq.s32.totalorder %s22, 0
      %p206 = por %p204, %p205
      %p207 = scmp.le.s32.totalorder 1, %s16
      %p208 = scmp.lt.s32.totalorder %s16, 3
      %p209 = pnand %p207, %p208
      %p210 = pneg %p209
      // Predicated region
      $region9: #{pose_interpolator_fc_forward.1} parent=5 // pred_check
        _
      $region10: #{pose_interpolator_fc_forward.1} parent=5 // pred_check_branch
        %212 = sbr.rel (%p209) target = $region12
      $region11: #{pose_interpolator_fc_forward.1} parent=5 // pred_region
        %s213 = ssub.s32 %s16, 1
        // Predicated region
        $region13: #{pose_interpolator_fc_forward.1} parent=11 // pred_check
          %p214 = pneg %p37
        $region14: #{pose_interpolator_fc_forward.1} parent=11 // pred_check_branch
          %216 = sbr.rel (%p214) target = $region16
        $region15: #{pose_interpolator_fc_forward.1} parent=11 // pred_region
          _
        $region16: #{pose_interpolator_fc_forward.1} parent=11 // pred_fallthru
          _
        // Predicated region
        $region17: #{pose_interpolator_fc_forward.1} parent=11 // pred_check
          %p217 = pneg %p58
        $region18: #{pose_interpolator_fc_forward.1} parent=11 // pred_check_branch
          %219 = sbr.rel (%p217) target = $region20
        $region19: #{pose_interpolator_fc_forward.1} parent=11 // pred_region
          %221 = vsyncadd [#allocation3], 0
          %s222 = sshll.u32 %s1, 4
          %s223 = int_to_ptr.hbm [resolvable:$true] %s222
          %s224 = sshll.u32 [#allocation2], 4
          %s225 = int_to_ptr.vmem [resolvable:$true] %s224
          %230 = dma.hbm_to_vmem [thread:$0]  %s223, 28672, %s225, [#allocation3], 256, 256, 16
        $region20: #{pose_interpolator_fc_forward.1} parent=11 // pred_fallthru
          _
        // Predicated region
        $region21: #{pose_interpolator_fc_forward.1} parent=11 // pred_check
          %p231 = pneg %p79
        $region22: #{pose_interpolator_fc_forward.1} parent=11 // pred_check_branch
          %233 = sbr.rel (%p231) target = $region24
        $region23: #{pose_interpolator_fc_forward.1} parent=11 // pred_region
          %235 = vsyncadd [#allocation5], 0
          %s237 = sshll.u32 %s2, 4
          %s238 = int_to_ptr.hbm [resolvable:$true] %s237
          %s239 = sshll.u32 [#allocation4], 4
          %s240 = int_to_ptr.vmem [resolvable:$true] %s239
          %242 = dma.hbm_to_vmem [thread:$0]  %s238, 64, %s240, [#allocation5]
        $region24: #{pose_interpolator_fc_forward.1} parent=11 // pred_fallthru
          _
        // Predicated region
        $region25: #{pose_interpolator_fc_forward.1} parent=11 // pred_check
          %p243 = pneg %p100
        $region26: #{pose_interpolator_fc_forward.1} parent=11 // pred_check_branch
          %245 = sbr.rel (%p243) target = $region28
        $region27: #{pose_interpolator_fc_forward.1} parent=11 // pred_region
          %247 = vsyncadd [#allocation5], 0
          %s248 = sshll.u32 %s3, 4
          %s249 = int_to_ptr.hbm [resolvable:$true] %s248
          %s250 = sshll.u32 [#allocation6], 4
          %s251 = int_to_ptr.vmem [resolvable:$true] %s250
          %256 = dma.hbm_to_vmem [thread:$0]  %s249, 16384, %s251, [#allocation5], 256, 256, 16
        $region28: #{pose_interpolator_fc_forward.1} parent=11 // pred_fallthru
          _
        // Predicated region
        $region29: #{pose_interpolator_fc_forward.1} parent=11 // pred_check
          %p257 = pneg %p121
        $region30: #{pose_interpolator_fc_forward.1} parent=11 // pred_check_branch
          %259 = sbr.rel (%p257) target = $region32
        $region31: #{pose_interpolator_fc_forward.1} parent=11 // pred_region
          %261 = vsyncadd [#allocation8], 0
          %s263 = sshll.u32 %s4, 4
          %s264 = int_to_ptr.hbm [resolvable:$true] %s263
          %s265 = sshll.u32 [#allocation7], 4
          %s266 = int_to_ptr.vmem [resolvable:$true] %s265
          %268 = dma.hbm_to_vmem [thread:$0]  %s264, 64, %s266, [#allocation8]
        $region32: #{pose_interpolator_fc_forward.1} parent=11 // pred_fallthru
          _
      $region12: #{pose_interpolator_fc_forward.1} parent=5 // pred_fallthru
        _
      %p269 = scmp.lt.s32.totalorder %s16, 2
      // Predicated region
      $region33: #{pose_interpolator_fc_forward.1} parent=5 // pred_check
        %p270 = pneg %p269
      $region34: #{pose_interpolator_fc_forward.1} parent=5 // pred_check_branch
        %272 = sbr.rel (%p270) target = $region36
      $region35: #{pose_interpolator_fc_forward.1} parent=5 // pred_region
        // Predicated region
        $region37: #{pose_interpolator_fc_forward.1} parent=35 // pred_check
          %p273 = pneg %p141
        $region38: #{pose_interpolator_fc_forward.1} parent=35 // pred_check_branch
          %275 = sbr.rel (%p273) target = $region40
        $region39: #{pose_interpolator_fc_forward.1} parent=35 // pred_region
          %s276 = sand.u32 %s16, 1
          %s277 = scalar_lea.sflag [#allocation3], %s276
          %s278 = sand.u32 %s131, 1
          %s279 = smul.addr %s278, 4352
          %s280 = scalar_lea.vmem [#allocation9], %s279
          %s281 = smul.u32 17, %s16
          %283 = vsyncadd %s277, 0
          %s284 = smul.addr %s281, 4
          %s285 = scalar_lea.hbm %s5, %s284
          %s286 = sshll.u32 %s285, 4
          %s287 = int_to_ptr.hbm [resolvable:$true] %s286
          %s288 = sshll.u32 %s280, 4
          %s289 = int_to_ptr.vmem [resolvable:$true] %s288
          %294 = dma.hbm_to_vmem [thread:$0]  %s287, 69632, %s289, %s277, 2176, 1088, 68
        $region40: #{pose_interpolator_fc_forward.1} parent=35 // pred_fallthru
          _
        // Predicated region
        $region41: #{pose_interpolator_fc_forward.1} parent=35 // pred_check
          %p295 = pneg %p167
        $region42: #{pose_interpolator_fc_forward.1} parent=35 // pred_check_branch
          %297 = sbr.rel (%p295) target = $region44
        $region43: #{pose_interpolator_fc_forward.1} parent=35 // pred_region
          %s298 = sand.u32 %s16, 1
          %s299 = scalar_lea.sflag [#allocation3], %s298
          %s300 = sand.u32 %s157, 1
          %s301 = smul.addr %s300, 17
          %s302 = scalar_lea.vmem [#allocation10], %s301
          %s303 = smul.u32 17, %s16
          %305 = vsyncadd %s299, 0
          %s306 = scalar_lea.hbm %s6, %s303
          %s308 = sshll.u32 %s306, 4
          %s309 = int_to_ptr.hbm [resolvable:$true] %s308
          %s310 = sshll.u32 %s302, 4
          %s311 = int_to_ptr.vmem [resolvable:$true] %s310
          %313 = dma.hbm_to_vmem [thread:$0]  %s309, 272, %s311, %s299
        $region44: #{pose_interpolator_fc_forward.1} parent=35 // pred_fallthru
          _
      $region36: #{pose_interpolator_fc_forward.1} parent=5 // pred_fallthru
        _
      %p314 = scmp.le.s32.totalorder 1, %s16
      %p315 = scmp.lt.s32.totalorder %s16, 3
      %p316 = pnand %p314, %p315
      %p317 = pneg %p316
      // Predicated region
      $region45: #{pose_interpolator_fc_forward.1} parent=5 // pred_check
        _
      $region46: #{pose_interpolator_fc_forward.1} parent=5 // pred_check_branch
        %319 = sbr.rel (%p316) target = $region48
      $region47: #{pose_interpolator_fc_forward.1} parent=5 // pred_region
        %s320 = ssub.s32 %s16, 1
        // Predicated region
        $region49: #{pose_interpolator_fc_forward.1} parent=47 // pred_check
          %p321 = pneg %p58
        $region50: #{pose_interpolator_fc_forward.1} parent=47 // pred_check_branch
          %323 = sbr.rel (%p321) target = $region52
        $region51: #{pose_interpolator_fc_forward.1} parent=47 // pred_region
          %325 = dma.done [#allocation3], 28672
        $region52: #{pose_interpolator_fc_forward.1} parent=47 // pred_fallthru
          _
        // Predicated region
        $region53: #{pose_interpolator_fc_forward.1} parent=47 // pred_check
          %p326 = pneg %p79
        $region54: #{pose_interpolator_fc_forward.1} parent=47 // pred_check_branch
          %328 = sbr.rel (%p326) target = $region56
        $region55: #{pose_interpolator_fc_forward.1} parent=47 // pred_region
          %330 = dma.done [#allocation5], 64
        $region56: #{pose_interpolator_fc_forward.1} parent=47 // pred_fallthru
          _
        // Predicated region
        $region57: #{pose_interpolator_fc_forward.1} parent=47 // pred_check
          %p331 = pneg %p100
        $region58: #{pose_interpolator_fc_forward.1} parent=47 // pred_check_branch
          %333 = sbr.rel (%p331) target = $region60
        $region59: #{pose_interpolator_fc_forward.1} parent=47 // pred_region
          %335 = dma.done [#allocation5], 16384
        $region60: #{pose_interpolator_fc_forward.1} parent=47 // pred_fallthru
          _
        // Predicated region
        $region61: #{pose_interpolator_fc_forward.1} parent=47 // pred_check
          %p336 = pneg %p121
        $region62: #{pose_interpolator_fc_forward.1} parent=47 // pred_check_branch
          %338 = sbr.rel (%p336) target = $region64
        $region63: #{pose_interpolator_fc_forward.1} parent=47 // pred_region
          %340 = dma.done [#allocation8], 64
        $region64: #{pose_interpolator_fc_forward.1} parent=47 // pred_fallthru
          _
        %s341 = sand.u32 %s21, 1
        %s342 = scalar_lea.sflag [#allocation3], %s341
        %s343 = sand.u32 %s134, 1
        %s344 = smul.addr %s343, 4352
        %s345 = scalar_lea.vmem [#allocation9], %s344
        // Predicated region
        $region65: #{pose_interpolator_fc_forward.1} parent=47 // pred_check
          %p346 = pneg %p147
        $region66: #{pose_interpolator_fc_forward.1} parent=47 // pred_check_branch
          %348 = sbr.rel (%p346) target = $region68
        $region67: #{pose_interpolator_fc_forward.1} parent=47 // pred_region
          %350 = dma.done %s342, 69632
        $region68: #{pose_interpolator_fc_forward.1} parent=47 // pred_fallthru
          _
        %s351 = sand.u32 %s21, 1
        %s352 = scalar_lea.sflag [#allocation3], %s351
        %s353 = sand.u32 %s160, 1
        %s354 = smul.addr %s353, 17
        %s355 = scalar_lea.vmem [#allocation10], %s354
        // Predicated region
        $region69: #{pose_interpolator_fc_forward.1} parent=47 // pred_check
          %p356 = pneg %p173
        $region70: #{pose_interpolator_fc_forward.1} parent=47 // pred_check_branch
          %358 = sbr.rel (%p356) target = $region72
        $region71: #{pose_interpolator_fc_forward.1} parent=47 // pred_region
          %360 = dma.done %s352, 272
        $region72: #{pose_interpolator_fc_forward.1} parent=47 // pred_fallthru
          _
        %p361 = pneg %p37
        %p362 = pneg %p34
        %p363 = pneg %p58
        %p364 = pneg %p55
        %p365 = pneg %p79
        %p366 = pneg %p76
        %p367 = pneg %p100
        %p368 = pneg %p97
        %p369 = pneg %p121
        %p370 = pneg %p118
        %s371 = sand.u32 %s21, 1
        %s372 = scalar_lea.sflag [#allocation3], %s371
        %s373 = sand.u32 %s134, 1
        %s374 = smul.addr %s373, 4352
        %s375 = scalar_lea.vmem [#allocation9], %s374
        %p376 = pneg %p147
        %p377 = pneg %p144
        %s378 = sand.u32 %s21, 1
        %s379 = scalar_lea.sflag [#allocation3], %s378
        %s380 = sand.u32 %s160, 1
        %s381 = smul.addr %s380, 17
        %s382 = scalar_lea.vmem [#allocation10], %s381
        %p383 = pneg %p173
        %p384 = pneg %p170
        %p385 = pneg %p199
        %p386 = pneg %p196
        %s387 = smul.u32 17, %s21
        %p388 = scmp.lt.s32.totalorder %s387, 33
        %s389 = scalar_select %p388, %s387, 33
        %s390 = smul.addr %s389, 8
        %s391 = scalar_lea.vmem %s7, %s390
        %s392 = smul.u32 17, %s21
        %s393 = smul.u32 17, %s21
        %s394 = smul.u32 17, %s21
        %p395 = scmp.lt.s32.totalorder %s394, 33
        %s396 = scalar_select %p395, %s394, 33
        %s397 = smul.addr %s396, 8
        %s398 = scalar_lea.vmem %s7, %s397
        %s399 = smul.u32 17, %s21
        %v400 = vld [vmem:[%s0] sm:$0xff]
        %v401 = vld [vmem:[%s0 + $0x8] sm:$0xff]
        %v402 = vld [vmem:[%s0 + $0x10] sm:$0xff]
        %v403 = vld [vmem:[%s0 + $0x18] sm:$0xf]
        %v404 = vld [vmem:[#allocation2] sm:$0xff]
        %v405 = vld [vmem:[#allocation2 + $0x8] sm:$0xff]
        %v406 = vld [vmem:[#allocation2 + $0x10] sm:$0xff]
        %v407 = vld [vmem:[#allocation2 + $0x18] sm:$0xff]
        %v408 = vld [vmem:[#allocation2 + $0x20] sm:$0xff]
        %v409 = vld [vmem:[#allocation2 + $0x28] sm:$0xff]
        %v410 = vld [vmem:[#allocation2 + $0x30] sm:$0xff]
        %v411 = vld [vmem:[#allocation2 + $0x38] sm:$0xff]
        %v412 = vld [vmem:[#allocation2 + $0x40] sm:$0xff]
        %v413 = vld [vmem:[#allocation2 + $0x48] sm:$0xff]
        %v414 = vld [vmem:[#allocation2 + $0x50] sm:$0xff]
        %v415 = vld [vmem:[#allocation2 + $0x58] sm:$0xff]
        %v416 = vld [vmem:[#allocation2 + $0x60] sm:$0xff]
        %v417 = vld [vmem:[#allocation2 + $0x68] sm:$0xff]
        %v418 = vld [vmem:[#allocation2 + $0x70] sm:$0xff]
        %v419 = vld [vmem:[#allocation2 + $0x78] sm:$0xff]
        %v420 = vld [vmem:[#allocation2 + $0x80] sm:$0xff]
        %v421 = vld [vmem:[#allocation2 + $0x88] sm:$0xff]
        %v422 = vld [vmem:[#allocation2 + $0x90] sm:$0xff]
        %v423 = vld [vmem:[#allocation2 + $0x98] sm:$0xff]
        %v424 = vld [vmem:[#allocation2 + $0xa0] sm:$0xff]
        %v425 = vld [vmem:[#allocation2 + $0xa8] sm:$0xff]
        %v426 = vld [vmem:[#allocation2 + $0xb0] sm:$0xff]
        %v427 = vld [vmem:[#allocation2 + $0xb8] sm:$0xff]
        %v428 = vld [vmem:[#allocation2 + $0xc0] sm:$0xff]
        %v429 = vld [vmem:[#allocation2 + $0xc8] sm:$0xff]
        %v430 = vld [vmem:[#allocation2 + $0xd0] sm:$0xff]
        %v431 = vld [vmem:[#allocation2 + $0xd8] sm:$0xff]
        %v432 = vld [vmem:[#allocation2 + $0xe0] sm:$0xff]
        %v433 = vld [vmem:[#allocation2 + $0xe8] sm:$0xff]
        %v434 = vld [vmem:[#allocation2 + $0xf0] sm:$0xff]
        %v435 = vld [vmem:[#allocation2 + $0xf8] sm:$0xff]
        %v436 = vld [vmem:[#allocation2 + $0x100] sm:$0xff]
        %v437 = vld [vmem:[#allocation2 + $0x108] sm:$0xff]
        %v438 = vld [vmem:[#allocation2 + $0x110] sm:$0xff]
        %v439 = vld [vmem:[#allocation2 + $0x118] sm:$0xff]
        %v440 = vld [vmem:[#allocation2 + $0x120] sm:$0xff]
        %v441 = vld [vmem:[#allocation2 + $0x128] sm:$0xff]
        %v442 = vld [vmem:[#allocation2 + $0x130] sm:$0xff]
        %v443 = vld [vmem:[#allocation2 + $0x138] sm:$0xff]
        %v444 = vld [vmem:[#allocation2 + $0x140] sm:$0xff]
        %v445 = vld [vmem:[#allocation2 + $0x148] sm:$0xff]
        %v446 = vld [vmem:[#allocation2 + $0x150] sm:$0xff]
        %v447 = vld [vmem:[#allocation2 + $0x158] sm:$0xff]
        %v448 = vld [vmem:[#allocation2 + $0x160] sm:$0xff]
        %v449 = vld [vmem:[#allocation2 + $0x168] sm:$0xff]
        %v450 = vld [vmem:[#allocation2 + $0x170] sm:$0xff]
        %v451 = vld [vmem:[#allocation2 + $0x178] sm:$0xff]
        %v452 = vld [vmem:[#allocation2 + $0x180] sm:$0xff]
        %v453 = vld [vmem:[#allocation2 + $0x188] sm:$0xff]
        %v454 = vld [vmem:[#allocation2 + $0x190] sm:$0xff]
        %v455 = vld [vmem:[#allocation2 + $0x198] sm:$0xff]
        %v456 = vld [vmem:[#allocation2 + $0x1a0] sm:$0xff]
        %v457 = vld [vmem:[#allocation2 + $0x1a8] sm:$0xff]
        %v458 = vld [vmem:[#allocation2 + $0x1b0] sm:$0xff]
        %v459 = vld [vmem:[#allocation2 + $0x1b8] sm:$0xff]
        %v460 = vld [vmem:[#allocation2 + $0x1c0] sm:$0xff]
        %v461 = vld [vmem:[#allocation2 + $0x1c8] sm:$0xff]
        %v462 = vld [vmem:[#allocation2 + $0x1d0] sm:$0xff]
        %v463 = vld [vmem:[#allocation2 + $0x1d8] sm:$0xff]
        %v464 = vld [vmem:[#allocation2 + $0x1e0] sm:$0xff]
        %v465 = vld [vmem:[#allocation2 + $0x1e8] sm:$0xff]
        %v466 = vld [vmem:[#allocation2 + $0x1f0] sm:$0xff]
        %v467 = vld [vmem:[#allocation2 + $0x1f8] sm:$0xff]
        %v468 = vld [vmem:[#allocation2 + $0x200] sm:$0xff]
        %v469 = vld [vmem:[#allocation2 + $0x208] sm:$0xff]
        %v470 = vld [vmem:[#allocation2 + $0x210] sm:$0xff]
        %v471 = vld [vmem:[#allocation2 + $0x218] sm:$0xff]
        %v472 = vld [vmem:[#allocation2 + $0x220] sm:$0xff]
        %v473 = vld [vmem:[#allocation2 + $0x228] sm:$0xff]
        %v474 = vld [vmem:[#allocation2 + $0x230] sm:$0xff]
        %v475 = vld [vmem:[#allocation2 + $0x238] sm:$0xff]
        %v476 = vld [vmem:[#allocation2 + $0x240] sm:$0xff]
        %v477 = vld [vmem:[#allocation2 + $0x248] sm:$0xff]
        %v478 = vld [vmem:[#allocation2 + $0x250] sm:$0xff]
        %v479 = vld [vmem:[#allocation2 + $0x258] sm:$0xff]
        %v480 = vld [vmem:[#allocation2 + $0x260] sm:$0xff]
        %v481 = vld [vmem:[#allocation2 + $0x268] sm:$0xff]
        %v482 = vld [vmem:[#allocation2 + $0x270] sm:$0xff]
        %v483 = vld [vmem:[#allocation2 + $0x278] sm:$0xff]
        %v484 = vld [vmem:[#allocation2 + $0x280] sm:$0xff]
        %v485 = vld [vmem:[#allocation2 + $0x288] sm:$0xff]
        %v486 = vld [vmem:[#allocation2 + $0x290] sm:$0xff]
        %v487 = vld [vmem:[#allocation2 + $0x298] sm:$0xff]
        %v488 = vld [vmem:[#allocation2 + $0x2a0] sm:$0xff]
        %v489 = vld [vmem:[#allocation2 + $0x2a8] sm:$0xff]
        %v490 = vld [vmem:[#allocation2 + $0x2b0] sm:$0xff]
        %v491 = vld [vmem:[#allocation2 + $0x2b8] sm:$0xff]
        %v492 = vld [vmem:[#allocation2 + $0x2c0] sm:$0xff]
        %v493 = vld [vmem:[#allocation2 + $0x2c8] sm:$0xff]
        %v494 = vld [vmem:[#allocation2 + $0x2d0] sm:$0xff]
        %v495 = vld [vmem:[#allocation2 + $0x2d8] sm:$0xff]
        %v496 = vld [vmem:[#allocation2 + $0x2e0] sm:$0xff]
        %v497 = vld [vmem:[#allocation2 + $0x2e8] sm:$0xff]
        %v498 = vld [vmem:[#allocation2 + $0x2f0] sm:$0xff]
        %v499 = vld [vmem:[#allocation2 + $0x2f8] sm:$0xff]
        %v500 = vld [vmem:[#allocation2 + $0x300] sm:$0xff]
        %v501 = vld [vmem:[#allocation2 + $0x308] sm:$0xff]
        %v502 = vld [vmem:[#allocation2 + $0x310] sm:$0xff]
        %v503 = vld [vmem:[#allocation2 + $0x318] sm:$0xff]
        %v504 = vld [vmem:[#allocation2 + $0x320] sm:$0xff]
        %v505 = vld [vmem:[#allocation2 + $0x328] sm:$0xff]
        %v506 = vld [vmem:[#allocation2 + $0x330] sm:$0xff]
        %v507 = vld [vmem:[#allocation2 + $0x338] sm:$0xff]
        %v508 = vld [vmem:[#allocation2 + $0x340] sm:$0xff]
        %v509 = vld [vmem:[#allocation2 + $0x348] sm:$0xff]
        %v510 = vld [vmem:[#allocation2 + $0x350] sm:$0xff]
        %v511 = vld [vmem:[#allocation2 + $0x358] sm:$0xff]
        %v512 = vld [vmem:[#allocation2 + $0x360] sm:$0xff]
        %v513 = vld [vmem:[#allocation2 + $0x368] sm:$0xff]
        %v514 = vld [vmem:[#allocation2 + $0x370] sm:$0xff]
        %v515 = vld [vmem:[#allocation2 + $0x378] sm:$0xff]
        %v516 = vld [vmem:[#allocation2 + $0x380] sm:$0xff]
        %v517 = vld [vmem:[#allocation2 + $0x388] sm:$0xff]
        %v518 = vld [vmem:[#allocation2 + $0x390] sm:$0xff]
        %v519 = vld [vmem:[#allocation2 + $0x398] sm:$0xff]
        %v520 = vld [vmem:[#allocation2 + $0x3a0] sm:$0xff]
        %v521 = vld [vmem:[#allocation2 + $0x3a8] sm:$0xff]
        %v522 = vld [vmem:[#allocation2 + $0x3b0] sm:$0xff]
        %v523 = vld [vmem:[#allocation2 + $0x3b8] sm:$0xff]
        %v524 = vld [vmem:[#allocation2 + $0x3c0] sm:$0xff]
        %v525 = vld [vmem:[#allocation2 + $0x3c8] sm:$0xff]
        %v526 = vld [vmem:[#allocation2 + $0x3d0] sm:$0xff]
        %v527 = vld [vmem:[#allocation2 + $0x3d8] sm:$0xff]
        %v528 = vld [vmem:[#allocation2 + $0x3e0] sm:$0xff]
        %v529 = vld [vmem:[#allocation2 + $0x3e8] sm:$0xff]
        %v530 = vld [vmem:[#allocation2 + $0x3f0] sm:$0xff]
        %v531 = vld [vmem:[#allocation2 + $0x3f8] sm:$0xff]
        %v532 = vld [vmem:[#allocation2 + $0x400] sm:$0xff]
        %v533 = vld [vmem:[#allocation2 + $0x408] sm:$0xff]
        %v534 = vld [vmem:[#allocation2 + $0x410] sm:$0xff]
        %v535 = vld [vmem:[#allocation2 + $0x418] sm:$0xff]
        %v536 = vld [vmem:[#allocation2 + $0x420] sm:$0xff]
        %v537 = vld [vmem:[#allocation2 + $0x428] sm:$0xff]
        %v538 = vld [vmem:[#allocation2 + $0x430] sm:$0xff]
        %v539 = vld [vmem:[#allocation2 + $0x438] sm:$0xff]
        %v540 = vld [vmem:[#allocation2 + $0x440] sm:$0xff]
        %v541 = vld [vmem:[#allocation2 + $0x448] sm:$0xff]
        %v542 = vld [vmem:[#allocation2 + $0x450] sm:$0xff]
        %v543 = vld [vmem:[#allocation2 + $0x458] sm:$0xff]
        %v544 = vld [vmem:[#allocation2 + $0x460] sm:$0xff]
        %v545 = vld [vmem:[#allocation2 + $0x468] sm:$0xff]
        %v546 = vld [vmem:[#allocation2 + $0x470] sm:$0xff]
        %v547 = vld [vmem:[#allocation2 + $0x478] sm:$0xff]
        %v548 = vld [vmem:[#allocation2 + $0x480] sm:$0xff]
        %v549 = vld [vmem:[#allocation2 + $0x488] sm:$0xff]
        %v550 = vld [vmem:[#allocation2 + $0x490] sm:$0xff]
        %v551 = vld [vmem:[#allocation2 + $0x498] sm:$0xff]
        %v552 = vld [vmem:[#allocation2 + $0x4a0] sm:$0xff]
        %v553 = vld [vmem:[#allocation2 + $0x4a8] sm:$0xff]
        %v554 = vld [vmem:[#allocation2 + $0x4b0] sm:$0xff]
        %v555 = vld [vmem:[#allocation2 + $0x4b8] sm:$0xff]
        %v556 = vld [vmem:[#allocation2 + $0x4c0] sm:$0xff]
        %v557 = vld [vmem:[#allocation2 + $0x4c8] sm:$0xff]
        %v558 = vld [vmem:[#allocation2 + $0x4d0] sm:$0xff]
        %v559 = vld [vmem:[#allocation2 + $0x4d8] sm:$0xff]
        %v560 = vld [vmem:[#allocation2 + $0x4e0] sm:$0xff]
        %v561 = vld [vmem:[#allocation2 + $0x4e8] sm:$0xff]
        %v562 = vld [vmem:[#allocation2 + $0x4f0] sm:$0xff]
        %v563 = vld [vmem:[#allocation2 + $0x4f8] sm:$0xff]
        %v564 = vld [vmem:[#allocation2 + $0x500] sm:$0xff]
        %v565 = vld [vmem:[#allocation2 + $0x508] sm:$0xff]
        %v566 = vld [vmem:[#allocation2 + $0x510] sm:$0xff]
        %v567 = vld [vmem:[#allocation2 + $0x518] sm:$0xff]
        %v568 = vld [vmem:[#allocation2 + $0x520] sm:$0xff]
        %v569 = vld [vmem:[#allocation2 + $0x528] sm:$0xff]
        %v570 = vld [vmem:[#allocation2 + $0x530] sm:$0xff]
        %v571 = vld [vmem:[#allocation2 + $0x538] sm:$0xff]
        %v572 = vld [vmem:[#allocation2 + $0x540] sm:$0xff]
        %v573 = vld [vmem:[#allocation2 + $0x548] sm:$0xff]
        %v574 = vld [vmem:[#allocation2 + $0x550] sm:$0xff]
        %v575 = vld [vmem:[#allocation2 + $0x558] sm:$0xff]
        %v576 = vld [vmem:[#allocation2 + $0x560] sm:$0xff]
        %v577 = vld [vmem:[#allocation2 + $0x568] sm:$0xff]
        %v578 = vld [vmem:[#allocation2 + $0x570] sm:$0xff]
        %v579 = vld [vmem:[#allocation2 + $0x578] sm:$0xff]
        %v580 = vld [vmem:[#allocation2 + $0x580] sm:$0xff]
        %v581 = vld [vmem:[#allocation2 + $0x588] sm:$0xff]
        %v582 = vld [vmem:[#allocation2 + $0x590] sm:$0xff]
        %v583 = vld [vmem:[#allocation2 + $0x598] sm:$0xff]
        %v584 = vld [vmem:[#allocation2 + $0x5a0] sm:$0xff]
        %v585 = vld [vmem:[#allocation2 + $0x5a8] sm:$0xff]
        %v586 = vld [vmem:[#allocation2 + $0x5b0] sm:$0xff]
        %v587 = vld [vmem:[#allocation2 + $0x5b8] sm:$0xff]
        %v588 = vld [vmem:[#allocation2 + $0x5c0] sm:$0xff]
        %v589 = vld [vmem:[#allocation2 + $0x5c8] sm:$0xff]
        %v590 = vld [vmem:[#allocation2 + $0x5d0] sm:$0xff]
        %v591 = vld [vmem:[#allocation2 + $0x5d8] sm:$0xff]
        %v592 = vld [vmem:[#allocation2 + $0x5e0] sm:$0xff]
        %v593 = vld [vmem:[#allocation2 + $0x5e8] sm:$0xff]
        %v594 = vld [vmem:[#allocation2 + $0x5f0] sm:$0xff]
        %v595 = vld [vmem:[#allocation2 + $0x5f8] sm:$0xff]
        %v596 = vld [vmem:[#allocation2 + $0x600] sm:$0xff]
        %v597 = vld [vmem:[#allocation2 + $0x608] sm:$0xff]
        %v598 = vld [vmem:[#allocation2 + $0x610] sm:$0xff]
        %v599 = vld [vmem:[#allocation2 + $0x618] sm:$0xff]
        %v600 = vld [vmem:[#allocation2 + $0x620] sm:$0xff]
        %v601 = vld [vmem:[#allocation2 + $0x628] sm:$0xff]
        %v602 = vld [vmem:[#allocation2 + $0x630] sm:$0xff]
        %v603 = vld [vmem:[#allocation2 + $0x638] sm:$0xff]
        %v604 = vld [vmem:[#allocation2 + $0x640] sm:$0xff]
        %v605 = vld [vmem:[#allocation2 + $0x648] sm:$0xff]
        %v606 = vld [vmem:[#allocation2 + $0x650] sm:$0xff]
        %v607 = vld [vmem:[#allocation2 + $0x658] sm:$0xff]
        %v608 = vld [vmem:[#allocation2 + $0x660] sm:$0xff]
        %v609 = vld [vmem:[#allocation2 + $0x668] sm:$0xff]
        %v610 = vld [vmem:[#allocation2 + $0x670] sm:$0xff]
        %v611 = vld [vmem:[#allocation2 + $0x678] sm:$0xff]
        %v612 = vld [vmem:[#allocation2 + $0x680] sm:$0xff]
        %v613 = vld [vmem:[#allocation2 + $0x688] sm:$0xff]
        %v614 = vld [vmem:[#allocation2 + $0x690] sm:$0xff]
        %v615 = vld [vmem:[#allocation2 + $0x698] sm:$0xff]
        %v616 = vld [vmem:[#allocation2 + $0x6a0] sm:$0xff]
        %v617 = vld [vmem:[#allocation2 + $0x6a8] sm:$0xff]
        %v618 = vld [vmem:[#allocation2 + $0x6b0] sm:$0xff]
        %v619 = vld [vmem:[#allocation2 + $0x6b8] sm:$0xff]
        %v620 = vld [vmem:[#allocation2 + $0x6c0] sm:$0xff]
        %v621 = vld [vmem:[#allocation2 + $0x6c8] sm:$0xff]
        %v622 = vld [vmem:[#allocation2 + $0x6d0] sm:$0xff]
        %v623 = vld [vmem:[#allocation2 + $0x6d8] sm:$0xff]
        %v624 = vld [vmem:[#allocation2 + $0x6e0] sm:$0xff]
        %v625 = vld [vmem:[#allocation2 + $0x6e8] sm:$0xff]
        %v626 = vld [vmem:[#allocation2 + $0x6f0] sm:$0xff]
        %v627 = vld [vmem:[#allocation2 + $0x6f8] sm:$0xff]
        %v628 = vld [vmem:[#allocation4] sm:$0xf]
        %v630 = vperm.slane %v628, 0
        %v631 = vperm.slane %v628, 1
        %v632 = vperm.slane %v628, 2
        %v633 = vperm.slane %v628, 3
        %v642 = vunpack.c.l.b16 %v400
        %v643 = vunpack.c.h.b16 %v400
        %v644 = vunpack.c.l.b16 %v401
        %v645 = vunpack.c.h.b16 %v401
        %v646 = vunpack.c.l.b16 %v402
        %v647 = vunpack.c.h.b16 %v402
        %v648 = vunpack.c.l.b16 %v403
        %v649 = vpack.c.b16 %v642, %v642
        %v650 = vpack.c.b16 %v643, %v643
        %v651 = vpack.c.b16 %v644, %v644
        %v652 = vpack.c.b16 %v645, %v645
        %v653 = vpack.c.b16 %v646, %v646
        %v654 = vpack.c.b16 %v647, %v647
        %v655 = vpack.c.b16 %v648, %v648
        %v887 = vunpack.c.l.b16 %v404
        %v888 = vunpack.c.h.b16 %v404
        %v889 = vunpack.c.l.b16 %v405
        %v890 = vunpack.c.h.b16 %v405
        %v891 = vunpack.c.l.b16 %v406
        %v892 = vunpack.c.h.b16 %v406
        %v893 = vunpack.c.l.b16 %v407
        %v894 = vunpack.c.h.b16 %v407
        %v895 = vunpack.c.l.b16 %v408
        %v896 = vunpack.c.h.b16 %v408
        %v897 = vunpack.c.l.b16 %v409
        %v898 = vunpack.c.h.b16 %v409
        %v899 = vunpack.c.l.b16 %v410
        %v900 = vunpack.c.h.b16 %v410
        %v901 = vunpack.c.l.b16 %v411
        %v902 = vunpack.c.h.b16 %v411
        %v903 = vunpack.c.l.b16 %v412
        %v904 = vunpack.c.h.b16 %v412
        %v905 = vunpack.c.l.b16 %v413
        %v906 = vunpack.c.h.b16 %v413
        %v907 = vunpack.c.l.b16 %v414
        %v908 = vunpack.c.h.b16 %v414
        %v909 = vunpack.c.l.b16 %v415
        %v910 = vunpack.c.h.b16 %v415
        %v911 = vunpack.c.l.b16 %v416
        %v912 = vunpack.c.h.b16 %v416
        %v913 = vunpack.c.l.b16 %v417
        %v914 = vunpack.c.h.b16 %v417
        %v915 = vunpack.c.l.b16 %v418
        %v916 = vunpack.c.h.b16 %v418
        %v917 = vunpack.c.l.b16 %v419
        %v918 = vunpack.c.h.b16 %v419
        %v919 = vunpack.c.l.b16 %v420
        %v920 = vunpack.c.h.b16 %v420
        %v921 = vunpack.c.l.b16 %v421
        %v922 = vunpack.c.h.b16 %v421
        %v923 = vunpack.c.l.b16 %v422
        %v924 = vunpack.c.h.b16 %v422
        %v925 = vunpack.c.l.b16 %v423
        %v926 = vunpack.c.h.b16 %v423
        %v927 = vunpack.c.l.b16 %v424
        %v928 = vunpack.c.h.b16 %v424
        %v929 = vunpack.c.l.b16 %v425
        %v930 = vunpack.c.h.b16 %v425
        %v931 = vunpack.c.l.b16 %v426
        %v932 = vunpack.c.h.b16 %v426
        %v933 = vunpack.c.l.b16 %v427
        %v934 = vunpack.c.h.b16 %v427
        %v935 = vunpack.c.l.b16 %v428
        %v936 = vunpack.c.h.b16 %v428
        %v937 = vunpack.c.l.b16 %v429
        %v938 = vunpack.c.h.b16 %v429
        %v939 = vunpack.c.l.b16 %v430
        %v940 = vunpack.c.h.b16 %v430
        %v941 = vunpack.c.l.b16 %v431
        %v942 = vunpack.c.h.b16 %v431
        %v943 = vunpack.c.l.b16 %v432
        %v944 = vunpack.c.h.b16 %v432
        %v945 = vunpack.c.l.b16 %v433
        %v946 = vunpack.c.h.b16 %v433
        %v947 = vunpack.c.l.b16 %v434
        %v948 = vunpack.c.h.b16 %v434
        %v949 = vunpack.c.l.b16 %v435
        %v950 = vunpack.c.h.b16 %v435
        %v951 = vunpack.c.l.b16 %v436
        %v952 = vunpack.c.h.b16 %v436
        %v953 = vunpack.c.l.b16 %v437
        %v954 = vunpack.c.h.b16 %v437
        %v955 = vunpack.c.l.b16 %v438
        %v956 = vunpack.c.h.b16 %v438
        %v957 = vunpack.c.l.b16 %v439
        %v958 = vunpack.c.h.b16 %v439
        %v959 = vunpack.c.l.b16 %v440
        %v960 = vunpack.c.h.b16 %v440
        %v961 = vunpack.c.l.b16 %v441
        %v962 = vunpack.c.h.b16 %v441
        %v963 = vunpack.c.l.b16 %v442
        %v964 = vunpack.c.h.b16 %v442
        %v965 = vunpack.c.l.b16 %v443
        %v966 = vunpack.c.h.b16 %v443
        %v967 = vunpack.c.l.b16 %v444
        %v968 = vunpack.c.h.b16 %v444
        %v969 = vunpack.c.l.b16 %v445
        %v970 = vunpack.c.h.b16 %v445
        %v971 = vunpack.c.l.b16 %v446
        %v972 = vunpack.c.h.b16 %v446
        %v973 = vunpack.c.l.b16 %v447
        %v974 = vunpack.c.h.b16 %v447
        %v975 = vunpack.c.l.b16 %v448
        %v976 = vunpack.c.h.b16 %v448
        %v977 = vunpack.c.l.b16 %v449
        %v978 = vunpack.c.h.b16 %v449
        %v979 = vunpack.c.l.b16 %v450
        %v980 = vunpack.c.h.b16 %v450
        %v981 = vunpack.c.l.b16 %v451
        %v982 = vunpack.c.h.b16 %v451
        %v983 = vunpack.c.l.b16 %v452
        %v984 = vunpack.c.h.b16 %v452
        %v985 = vunpack.c.l.b16 %v453
        %v986 = vunpack.c.h.b16 %v453
        %v987 = vunpack.c.l.b16 %v454
        %v988 = vunpack.c.h.b16 %v454
        %v989 = vunpack.c.l.b16 %v455
        %v990 = vunpack.c.h.b16 %v455
        %v991 = vunpack.c.l.b16 %v456
        %v992 = vunpack.c.h.b16 %v456
        %v993 = vunpack.c.l.b16 %v457
        %v994 = vunpack.c.h.b16 %v457
        %v995 = vunpack.c.l.b16 %v458
        %v996 = vunpack.c.h.b16 %v458
        %v997 = vunpack.c.l.b16 %v459
        %v998 = vunpack.c.h.b16 %v459
        %v999 = vunpack.c.l.b16 %v460
        %v1000 = vunpack.c.h.b16 %v460
        %v1001 = vunpack.c.l.b16 %v461
        %v1002 = vunpack.c.h.b16 %v461
        %v1003 = vunpack.c.l.b16 %v462
        %v1004 = vunpack.c.h.b16 %v462
        %v1005 = vunpack.c.l.b16 %v463
        %v1006 = vunpack.c.h.b16 %v463
        %v1007 = vunpack.c.l.b16 %v464
        %v1008 = vunpack.c.h.b16 %v464
        %v1009 = vunpack.c.l.b16 %v465
        %v1010 = vunpack.c.h.b16 %v465
        %v1011 = vunpack.c.l.b16 %v466
        %v1012 = vunpack.c.h.b16 %v466
        %v1013 = vunpack.c.l.b16 %v467
        %v1014 = vunpack.c.h.b16 %v467
        %v1015 = vunpack.c.l.b16 %v468
        %v1016 = vunpack.c.h.b16 %v468
        %v1017 = vunpack.c.l.b16 %v469
        %v1018 = vunpack.c.h.b16 %v469
        %v1019 = vunpack.c.l.b16 %v470
        %v1020 = vunpack.c.h.b16 %v470
        %v1021 = vunpack.c.l.b16 %v471
        %v1022 = vunpack.c.h.b16 %v471
        %v1023 = vunpack.c.l.b16 %v472
        %v1024 = vunpack.c.h.b16 %v472
        %v1025 = vunpack.c.l.b16 %v473
        %v1026 = vunpack.c.h.b16 %v473
        %v1027 = vunpack.c.l.b16 %v474
        %v1028 = vunpack.c.h.b16 %v474
        %v1029 = vunpack.c.l.b16 %v475
        %v1030 = vunpack.c.h.b16 %v475
        %v1031 = vunpack.c.l.b16 %v476
        %v1032 = vunpack.c.h.b16 %v476
        %v1033 = vunpack.c.l.b16 %v477
        %v1034 = vunpack.c.h.b16 %v477
        %v1035 = vunpack.c.l.b16 %v478
        %v1036 = vunpack.c.h.b16 %v478
        %v1037 = vunpack.c.l.b16 %v479
        %v1038 = vunpack.c.h.b16 %v479
        %v1039 = vunpack.c.l.b16 %v480
        %v1040 = vunpack.c.h.b16 %v480
        %v1041 = vunpack.c.l.b16 %v481
        %v1042 = vunpack.c.h.b16 %v481
        %v1043 = vunpack.c.l.b16 %v482
        %v1044 = vunpack.c.h.b16 %v482
        %v1045 = vunpack.c.l.b16 %v483
        %v1046 = vunpack.c.h.b16 %v483
        %v1047 = vunpack.c.l.b16 %v484
        %v1048 = vunpack.c.h.b16 %v484
        %v1049 = vunpack.c.l.b16 %v485
        %v1050 = vunpack.c.h.b16 %v485
        %v1051 = vunpack.c.l.b16 %v486
        %v1052 = vunpack.c.h.b16 %v486
        %v1053 = vunpack.c.l.b16 %v487
        %v1054 = vunpack.c.h.b16 %v487
        %v1055 = vunpack.c.l.b16 %v488
        %v1056 = vunpack.c.h.b16 %v488
        %v1057 = vunpack.c.l.b16 %v489
        %v1058 = vunpack.c.h.b16 %v489
        %v1059 = vunpack.c.l.b16 %v490
        %v1060 = vunpack.c.h.b16 %v490
        %v1061 = vunpack.c.l.b16 %v491
        %v1062 = vunpack.c.h.b16 %v491
        %v1063 = vunpack.c.l.b16 %v492
        %v1064 = vunpack.c.h.b16 %v492
        %v1065 = vunpack.c.l.b16 %v493
        %v1066 = vunpack.c.h.b16 %v493
        %v1067 = vunpack.c.l.b16 %v494
        %v1068 = vunpack.c.h.b16 %v494
        %v1069 = vunpack.c.l.b16 %v495
        %v1070 = vunpack.c.h.b16 %v495
        %v1071 = vunpack.c.l.b16 %v496
        %v1072 = vunpack.c.h.b16 %v496
        %v1073 = vunpack.c.l.b16 %v497
        %v1074 = vunpack.c.h.b16 %v497
        %v1075 = vunpack.c.l.b16 %v498
        %v1076 = vunpack.c.h.b16 %v498
        %v1077 = vunpack.c.l.b16 %v499
        %v1078 = vunpack.c.h.b16 %v499
        %v1079 = vunpack.c.l.b16 %v500
        %v1080 = vunpack.c.h.b16 %v500
        %v1081 = vunpack.c.l.b16 %v501
        %v1082 = vunpack.c.h.b16 %v501
        %v1083 = vunpack.c.l.b16 %v502
        %v1084 = vunpack.c.h.b16 %v502
        %v1085 = vunpack.c.l.b16 %v503
        %v1086 = vunpack.c.h.b16 %v503
        %v1087 = vunpack.c.l.b16 %v504
        %v1088 = vunpack.c.h.b16 %v504
        %v1089 = vunpack.c.l.b16 %v505
        %v1090 = vunpack.c.h.b16 %v505
        %v1091 = vunpack.c.l.b16 %v506
        %v1092 = vunpack.c.h.b16 %v506
        %v1093 = vunpack.c.l.b16 %v507
        %v1094 = vunpack.c.h.b16 %v507
        %v1095 = vunpack.c.l.b16 %v508
        %v1096 = vunpack.c.h.b16 %v508
        %v1097 = vunpack.c.l.b16 %v509
        %v1098 = vunpack.c.h.b16 %v509
        %v1099 = vunpack.c.l.b16 %v510
        %v1100 = vunpack.c.h.b16 %v510
        %v1101 = vunpack.c.l.b16 %v511
        %v1102 = vunpack.c.h.b16 %v511
        %v1103 = vunpack.c.l.b16 %v512
        %v1104 = vunpack.c.h.b16 %v512
        %v1105 = vunpack.c.l.b16 %v513
        %v1106 = vunpack.c.h.b16 %v513
        %v1107 = vunpack.c.l.b16 %v514
        %v1108 = vunpack.c.h.b16 %v514
        %v1109 = vunpack.c.l.b16 %v515
        %v1110 = vunpack.c.h.b16 %v515
        %v1111 = vunpack.c.l.b16 %v516
        %v1112 = vunpack.c.h.b16 %v516
        %v1113 = vunpack.c.l.b16 %v517
        %v1114 = vunpack.c.h.b16 %v517
        %v1115 = vunpack.c.l.b16 %v518
        %v1116 = vunpack.c.h.b16 %v518
        %v1117 = vunpack.c.l.b16 %v519
        %v1118 = vunpack.c.h.b16 %v519
        %v1119 = vunpack.c.l.b16 %v520
        %v1120 = vunpack.c.h.b16 %v520
        %v1121 = vunpack.c.l.b16 %v521
        %v1122 = vunpack.c.h.b16 %v521
        %v1123 = vunpack.c.l.b16 %v522
        %v1124 = vunpack.c.h.b16 %v522
        %v1125 = vunpack.c.l.b16 %v523
        %v1126 = vunpack.c.h.b16 %v523
        %v1127 = vunpack.c.l.b16 %v524
        %v1128 = vunpack.c.h.b16 %v524
        %v1129 = vunpack.c.l.b16 %v525
        %v1130 = vunpack.c.h.b16 %v525
        %v1131 = vunpack.c.l.b16 %v526
        %v1132 = vunpack.c.h.b16 %v526
        %v1133 = vunpack.c.l.b16 %v527
        %v1134 = vunpack.c.h.b16 %v527
        %v1135 = vunpack.c.l.b16 %v528
        %v1136 = vunpack.c.h.b16 %v528
        %v1137 = vunpack.c.l.b16 %v529
        %v1138 = vunpack.c.h.b16 %v529
        %v1139 = vunpack.c.l.b16 %v530
        %v1140 = vunpack.c.h.b16 %v530
        %v1141 = vunpack.c.l.b16 %v531
        %v1142 = vunpack.c.h.b16 %v531
        %v1143 = vunpack.c.l.b16 %v532
        %v1144 = vunpack.c.h.b16 %v532
        %v1145 = vunpack.c.l.b16 %v533
        %v1146 = vunpack.c.h.b16 %v533
        %v1147 = vunpack.c.l.b16 %v534
        %v1148 = vunpack.c.h.b16 %v534
        %v1149 = vunpack.c.l.b16 %v535
        %v1150 = vunpack.c.h.b16 %v535
        %v1151 = vunpack.c.l.b16 %v536
        %v1152 = vunpack.c.h.b16 %v536
        %v1153 = vunpack.c.l.b16 %v537
        %v1154 = vunpack.c.h.b16 %v537
        %v1155 = vunpack.c.l.b16 %v538
        %v1156 = vunpack.c.h.b16 %v538
        %v1157 = vunpack.c.l.b16 %v539
        %v1158 = vunpack.c.h.b16 %v539
        %v1159 = vunpack.c.l.b16 %v540
        %v1160 = vunpack.c.h.b16 %v540
        %v1161 = vunpack.c.l.b16 %v541
        %v1162 = vunpack.c.h.b16 %v541
        %v1163 = vunpack.c.l.b16 %v542
        %v1164 = vunpack.c.h.b16 %v542
        %v1165 = vunpack.c.l.b16 %v543
        %v1166 = vunpack.c.h.b16 %v543
        %v1167 = vunpack.c.l.b16 %v544
        %v1168 = vunpack.c.h.b16 %v544
        %v1169 = vunpack.c.l.b16 %v545
        %v1170 = vunpack.c.h.b16 %v545
        %v1171 = vunpack.c.l.b16 %v546
        %v1172 = vunpack.c.h.b16 %v546
        %v1173 = vunpack.c.l.b16 %v547
        %v1174 = vunpack.c.h.b16 %v547
        %v1175 = vunpack.c.l.b16 %v548
        %v1176 = vunpack.c.h.b16 %v548
        %v1177 = vunpack.c.l.b16 %v549
        %v1178 = vunpack.c.h.b16 %v549
        %v1179 = vunpack.c.l.b16 %v550
        %v1180 = vunpack.c.h.b16 %v550
        %v1181 = vunpack.c.l.b16 %v551
        %v1182 = vunpack.c.h.b16 %v551
        %v1183 = vunpack.c.l.b16 %v552
        %v1184 = vunpack.c.h.b16 %v552
        %v1185 = vunpack.c.l.b16 %v553
        %v1186 = vunpack.c.h.b16 %v553
        %v1187 = vunpack.c.l.b16 %v554
        %v1188 = vunpack.c.h.b16 %v554
        %v1189 = vunpack.c.l.b16 %v555
        %v1190 = vunpack.c.h.b16 %v555
        %v1191 = vunpack.c.l.b16 %v556
        %v1192 = vunpack.c.h.b16 %v556
        %v1193 = vunpack.c.l.b16 %v557
        %v1194 = vunpack.c.h.b16 %v557
        %v1195 = vunpack.c.l.b16 %v558
        %v1196 = vunpack.c.h.b16 %v558
        %v1197 = vunpack.c.l.b16 %v559
        %v1198 = vunpack.c.h.b16 %v559
        %v1199 = vunpack.c.l.b16 %v560
        %v1200 = vunpack.c.h.b16 %v560
        %v1201 = vunpack.c.l.b16 %v561
        %v1202 = vunpack.c.h.b16 %v561
        %v1203 = vunpack.c.l.b16 %v562
        %v1204 = vunpack.c.h.b16 %v562
        %v1205 = vunpack.c.l.b16 %v563
        %v1206 = vunpack.c.h.b16 %v563
        %v1207 = vunpack.c.l.b16 %v564
        %v1208 = vunpack.c.h.b16 %v564
        %v1209 = vunpack.c.l.b16 %v565
        %v1210 = vunpack.c.h.b16 %v565
        %v1211 = vunpack.c.l.b16 %v566
        %v1212 = vunpack.c.h.b16 %v566
        %v1213 = vunpack.c.l.b16 %v567
        %v1214 = vunpack.c.h.b16 %v567
        %v1215 = vunpack.c.l.b16 %v568
        %v1216 = vunpack.c.h.b16 %v568
        %v1217 = vunpack.c.l.b16 %v569
        %v1218 = vunpack.c.h.b16 %v569
        %v1219 = vunpack.c.l.b16 %v570
        %v1220 = vunpack.c.h.b16 %v570
        %v1221 = vunpack.c.l.b16 %v571
        %v1222 = vunpack.c.h.b16 %v571
        %v1223 = vunpack.c.l.b16 %v572
        %v1224 = vunpack.c.h.b16 %v572
        %v1225 = vunpack.c.l.b16 %v573
        %v1226 = vunpack.c.h.b16 %v573
        %v1227 = vunpack.c.l.b16 %v574
        %v1228 = vunpack.c.h.b16 %v574
        %v1229 = vunpack.c.l.b16 %v575
        %v1230 = vunpack.c.h.b16 %v575
        %v1231 = vunpack.c.l.b16 %v576
        %v1232 = vunpack.c.h.b16 %v576
        %v1233 = vunpack.c.l.b16 %v577
        %v1234 = vunpack.c.h.b16 %v577
        %v1235 = vunpack.c.l.b16 %v578
        %v1236 = vunpack.c.h.b16 %v578
        %v1237 = vunpack.c.l.b16 %v579
        %v1238 = vunpack.c.h.b16 %v579
        %v1239 = vunpack.c.l.b16 %v580
        %v1240 = vunpack.c.h.b16 %v580
        %v1241 = vunpack.c.l.b16 %v581
        %v1242 = vunpack.c.h.b16 %v581
        %v1243 = vunpack.c.l.b16 %v582
        %v1244 = vunpack.c.h.b16 %v582
        %v1245 = vunpack.c.l.b16 %v583
        %v1246 = vunpack.c.h.b16 %v583
        %v1247 = vunpack.c.l.b16 %v584
        %v1248 = vunpack.c.h.b16 %v584
        %v1249 = vunpack.c.l.b16 %v585
        %v1250 = vunpack.c.h.b16 %v585
        %v1251 = vunpack.c.l.b16 %v586
        %v1252 = vunpack.c.h.b16 %v586
        %v1253 = vunpack.c.l.b16 %v587
        %v1254 = vunpack.c.h.b16 %v587
        %v1255 = vunpack.c.l.b16 %v588
        %v1256 = vunpack.c.h.b16 %v588
        %v1257 = vunpack.c.l.b16 %v589
        %v1258 = vunpack.c.h.b16 %v589
        %v1259 = vunpack.c.l.b16 %v590
        %v1260 = vunpack.c.h.b16 %v590
        %v1261 = vunpack.c.l.b16 %v591
        %v1262 = vunpack.c.h.b16 %v591
        %v1263 = vunpack.c.l.b16 %v592
        %v1264 = vunpack.c.h.b16 %v592
        %v1265 = vunpack.c.l.b16 %v593
        %v1266 = vunpack.c.h.b16 %v593
        %v1267 = vunpack.c.l.b16 %v594
        %v1268 = vunpack.c.h.b16 %v594
        %v1269 = vunpack.c.l.b16 %v595
        %v1270 = vunpack.c.h.b16 %v595
        %v1271 = vunpack.c.l.b16 %v596
        %v1272 = vunpack.c.h.b16 %v596
        %v1273 = vunpack.c.l.b16 %v597
        %v1274 = vunpack.c.h.b16 %v597
        %v1275 = vunpack.c.l.b16 %v598
        %v1276 = vunpack.c.h.b16 %v598
        %v1277 = vunpack.c.l.b16 %v599
        %v1278 = vunpack.c.h.b16 %v599
        %v1279 = vunpack.c.l.b16 %v600
        %v1280 = vunpack.c.h.b16 %v600
        %v1281 = vunpack.c.l.b16 %v601
        %v1282 = vunpack.c.h.b16 %v601
        %v1283 = vunpack.c.l.b16 %v602
        %v1284 = vunpack.c.h.b16 %v602
        %v1285 = vunpack.c.l.b16 %v603
        %v1286 = vunpack.c.h.b16 %v603
        %v1287 = vunpack.c.l.b16 %v604
        %v1288 = vunpack.c.h.b16 %v604
        %v1289 = vunpack.c.l.b16 %v605
        %v1290 = vunpack.c.h.b16 %v605
        %v1291 = vunpack.c.l.b16 %v606
        %v1292 = vunpack.c.h.b16 %v606
        %v1293 = vunpack.c.l.b16 %v607
        %v1294 = vunpack.c.h.b16 %v607
        %v1295 = vunpack.c.l.b16 %v608
        %v1296 = vunpack.c.h.b16 %v608
        %v1297 = vunpack.c.l.b16 %v609
        %v1298 = vunpack.c.h.b16 %v609
        %v1299 = vunpack.c.l.b16 %v610
        %v1300 = vunpack.c.h.b16 %v610
        %v1301 = vunpack.c.l.b16 %v611
        %v1302 = vunpack.c.h.b16 %v611
        %v1303 = vunpack.c.l.b16 %v612
        %v1304 = vunpack.c.h.b16 %v612
        %v1305 = vunpack.c.l.b16 %v613
        %v1306 = vunpack.c.h.b16 %v613
        %v1307 = vunpack.c.l.b16 %v614
        %v1308 = vunpack.c.h.b16 %v614
        %v1309 = vunpack.c.l.b16 %v615
        %v1310 = vunpack.c.h.b16 %v615
        %v1311 = vunpack.c.l.b16 %v616
        %v1312 = vunpack.c.h.b16 %v616
        %v1313 = vunpack.c.l.b16 %v617
        %v1314 = vunpack.c.h.b16 %v617
        %v1315 = vunpack.c.l.b16 %v618
        %v1316 = vunpack.c.h.b16 %v618
        %v1317 = vunpack.c.l.b16 %v619
        %v1318 = vunpack.c.h.b16 %v619
        %v1319 = vunpack.c.l.b16 %v620
        %v1320 = vunpack.c.h.b16 %v620
        %v1321 = vunpack.c.l.b16 %v621
        %v1322 = vunpack.c.h.b16 %v621
        %v1323 = vunpack.c.l.b16 %v622
        %v1324 = vunpack.c.h.b16 %v622
        %v1325 = vunpack.c.l.b16 %v623
        %v1326 = vunpack.c.h.b16 %v623
        %v1327 = vunpack.c.l.b16 %v624
        %v1328 = vunpack.c.h.b16 %v624
        %v1329 = vunpack.c.l.b16 %v625
        %v1330 = vunpack.c.h.b16 %v625
        %v1331 = vunpack.c.l.b16 %v626
        %v1332 = vunpack.c.h.b16 %v626
        %v1333 = vunpack.c.l.b16 %v627
        %v1334 = vunpack.c.h.b16 %v627
        %v1335 = vpack.c.b16 %v891, %v887
        %v1336 = vpack.c.b16 %v892, %v888
        %v1337 = vpack.c.b16 %v893, %v889
        %v1338 = vpack.c.b16 %v894, %v890
        %v1339 = vpack.c.b16 %v899, %v895
        %v1340 = vpack.c.b16 %v900, %v896
        %v1341 = vpack.c.b16 %v901, %v897
        %v1342 = vpack.c.b16 %v902, %v898
        %v1343 = vpack.c.b16 %v907, %v903
        %v1344 = vpack.c.b16 %v908, %v904
        %v1345 = vpack.c.b16 %v909, %v905
        %v1346 = vpack.c.b16 %v910, %v906
        %v1347 = vpack.c.b16 %v915, %v911
        %v1348 = vpack.c.b16 %v916, %v912
        %v1349 = vpack.c.b16 %v917, %v913
        %v1350 = vpack.c.b16 %v918, %v914
        %v1351 = vpack.c.b16 %v923, %v919
        %v1352 = vpack.c.b16 %v924, %v920
        %v1353 = vpack.c.b16 %v925, %v921
        %v1354 = vpack.c.b16 %v926, %v922
        %v1355 = vpack.c.b16 %v931, %v927
        %v1356 = vpack.c.b16 %v932, %v928
        %v1357 = vpack.c.b16 %v933, %v929
        %v1358 = vpack.c.b16 %v934, %v930
        %v1359 = vpack.c.b16 %v939, %v935
        %v1360 = vpack.c.b16 %v940, %v936
        %v1361 = vpack.c.b16 %v941, %v937
        %v1362 = vpack.c.b16 %v942, %v938
        %v1363 = vpack.c.b16 %v947, %v943
        %v1364 = vpack.c.b16 %v948, %v944
        %v1365 = vpack.c.b16 %v949, %v945
        %v1366 = vpack.c.b16 %v950, %v946
        %v1367 = vpack.c.b16 %v955, %v951
        %v1368 = vpack.c.b16 %v956, %v952
        %v1369 = vpack.c.b16 %v957, %v953
        %v1370 = vpack.c.b16 %v958, %v954
        %v1371 = vpack.c.b16 %v963, %v959
        %v1372 = vpack.c.b16 %v964, %v960
        %v1373 = vpack.c.b16 %v965, %v961
        %v1374 = vpack.c.b16 %v966, %v962
        %v1375 = vpack.c.b16 %v971, %v967
        %v1376 = vpack.c.b16 %v972, %v968
        %v1377 = vpack.c.b16 %v973, %v969
        %v1378 = vpack.c.b16 %v974, %v970
        %v1379 = vpack.c.b16 %v979, %v975
        %v1380 = vpack.c.b16 %v980, %v976
        %v1381 = vpack.c.b16 %v981, %v977
        %v1382 = vpack.c.b16 %v982, %v978
        %v1383 = vpack.c.b16 %v987, %v983
        %v1384 = vpack.c.b16 %v988, %v984
        %v1385 = vpack.c.b16 %v989, %v985
        %v1386 = vpack.c.b16 %v990, %v986
        %v1387 = vpack.c.b16 %v995, %v991
        %v1388 = vpack.c.b16 %v996, %v992
        %v1389 = vpack.c.b16 %v997, %v993
        %v1390 = vpack.c.b16 %v998, %v994
        %v1391 = vpack.c.b16 %v1003, %v999
        %v1392 = vpack.c.b16 %v1004, %v1000
        %v1393 = vpack.c.b16 %v1005, %v1001
        %v1394 = vpack.c.b16 %v1006, %v1002
        %v1395 = vpack.c.b16 %v1011, %v1007
        %v1396 = vpack.c.b16 %v1012, %v1008
        %v1397 = vpack.c.b16 %v1013, %v1009
        %v1398 = vpack.c.b16 %v1014, %v1010
        %v1399 = vpack.c.b16 %v1019, %v1015
        %v1400 = vpack.c.b16 %v1020, %v1016
        %v1401 = vpack.c.b16 %v1021, %v1017
        %v1402 = vpack.c.b16 %v1022, %v1018
        %v1403 = vpack.c.b16 %v1027, %v1023
        %v1404 = vpack.c.b16 %v1028, %v1024
        %v1405 = vpack.c.b16 %v1029, %v1025
        %v1406 = vpack.c.b16 %v1030, %v1026
        %v1407 = vpack.c.b16 %v1035, %v1031
        %v1408 = vpack.c.b16 %v1036, %v1032
        %v1409 = vpack.c.b16 %v1037, %v1033
        %v1410 = vpack.c.b16 %v1038, %v1034
        %v1411 = vpack.c.b16 %v1043, %v1039
        %v1412 = vpack.c.b16 %v1044, %v1040
        %v1413 = vpack.c.b16 %v1045, %v1041
        %v1414 = vpack.c.b16 %v1046, %v1042
        %v1415 = vpack.c.b16 %v1051, %v1047
        %v1416 = vpack.c.b16 %v1052, %v1048
        %v1417 = vpack.c.b16 %v1053, %v1049
        %v1418 = vpack.c.b16 %v1054, %v1050
        %v1419 = vpack.c.b16 %v1059, %v1055
        %v1420 = vpack.c.b16 %v1060, %v1056
        %v1421 = vpack.c.b16 %v1061, %v1057
        %v1422 = vpack.c.b16 %v1062, %v1058
        %v1423 = vpack.c.b16 %v1067, %v1063
        %v1424 = vpack.c.b16 %v1068, %v1064
        %v1425 = vpack.c.b16 %v1069, %v1065
        %v1426 = vpack.c.b16 %v1070, %v1066
        %v1427 = vpack.c.b16 %v1075, %v1071
        %v1428 = vpack.c.b16 %v1076, %v1072
        %v1429 = vpack.c.b16 %v1077, %v1073
        %v1430 = vpack.c.b16 %v1078, %v1074
        %v1431 = vpack.c.b16 %v1083, %v1079
        %v1432 = vpack.c.b16 %v1084, %v1080
        %v1433 = vpack.c.b16 %v1085, %v1081
        %v1434 = vpack.c.b16 %v1086, %v1082
        %v1435 = vpack.c.b16 %v1091, %v1087
        %v1436 = vpack.c.b16 %v1092, %v1088
        %v1437 = vpack.c.b16 %v1093, %v1089
        %v1438 = vpack.c.b16 %v1094, %v1090
        %v1439 = vpack.c.b16 %v1099, %v1095
        %v1440 = vpack.c.b16 %v1100, %v1096
        %v1441 = vpack.c.b16 %v1101, %v1097
        %v1442 = vpack.c.b16 %v1102, %v1098
        %v1443 = vpack.c.b16 %v1107, %v1103
        %v1444 = vpack.c.b16 %v1108, %v1104
        %v1445 = vpack.c.b16 %v1109, %v1105
        %v1446 = vpack.c.b16 %v1110, %v1106
        %v1447 = vpack.c.b16 %v1115, %v1111
        %v1448 = vpack.c.b16 %v1116, %v1112
        %v1449 = vpack.c.b16 %v1117, %v1113
        %v1450 = vpack.c.b16 %v1118, %v1114
        %v1451 = vpack.c.b16 %v1123, %v1119
        %v1452 = vpack.c.b16 %v1124, %v1120
        %v1453 = vpack.c.b16 %v1125, %v1121
        %v1454 = vpack.c.b16 %v1126, %v1122
        %v1455 = vpack.c.b16 %v1131, %v1127
        %v1456 = vpack.c.b16 %v1132, %v1128
        %v1457 = vpack.c.b16 %v1133, %v1129
        %v1458 = vpack.c.b16 %v1134, %v1130
        %v1459 = vpack.c.b16 %v1139, %v1135
        %v1460 = vpack.c.b16 %v1140, %v1136
        %v1461 = vpack.c.b16 %v1141, %v1137
        %v1462 = vpack.c.b16 %v1142, %v1138
        %v1463 = vpack.c.b16 %v1147, %v1143
        %v1464 = vpack.c.b16 %v1148, %v1144
        %v1465 = vpack.c.b16 %v1149, %v1145
        %v1466 = vpack.c.b16 %v1150, %v1146
        %v1467 = vpack.c.b16 %v1155, %v1151
        %v1468 = vpack.c.b16 %v1156, %v1152
        %v1469 = vpack.c.b16 %v1157, %v1153
        %v1470 = vpack.c.b16 %v1158, %v1154
        %v1471 = vpack.c.b16 %v1163, %v1159
        %v1472 = vpack.c.b16 %v1164, %v1160
        %v1473 = vpack.c.b16 %v1165, %v1161
        %v1474 = vpack.c.b16 %v1166, %v1162
        %v1475 = vpack.c.b16 %v1171, %v1167
        %v1476 = vpack.c.b16 %v1172, %v1168
        %v1477 = vpack.c.b16 %v1173, %v1169
        %v1478 = vpack.c.b16 %v1174, %v1170
        %v1479 = vpack.c.b16 %v1179, %v1175
        %v1480 = vpack.c.b16 %v1180, %v1176
        %v1481 = vpack.c.b16 %v1181, %v1177
        %v1482 = vpack.c.b16 %v1182, %v1178
        %v1483 = vpack.c.b16 %v1187, %v1183
        %v1484 = vpack.c.b16 %v1188, %v1184
        %v1485 = vpack.c.b16 %v1189, %v1185
        %v1486 = vpack.c.b16 %v1190, %v1186
        %v1487 = vpack.c.b16 %v1195, %v1191
        %v1488 = vpack.c.b16 %v1196, %v1192
        %v1489 = vpack.c.b16 %v1197, %v1193
        %v1490 = vpack.c.b16 %v1198, %v1194
        %v1491 = vpack.c.b16 %v1203, %v1199
        %v1492 = vpack.c.b16 %v1204, %v1200
        %v1493 = vpack.c.b16 %v1205, %v1201
        %v1494 = vpack.c.b16 %v1206, %v1202
        %v1495 = vpack.c.b16 %v1211, %v1207
        %v1496 = vpack.c.b16 %v1212, %v1208
        %v1497 = vpack.c.b16 %v1213, %v1209
        %v1498 = vpack.c.b16 %v1214, %v1210
        %v1499 = vpack.c.b16 %v1219, %v1215
        %v1500 = vpack.c.b16 %v1220, %v1216
        %v1501 = vpack.c.b16 %v1221, %v1217
        %v1502 = vpack.c.b16 %v1222, %v1218
        %v1503 = vpack.c.b16 %v1227, %v1223
        %v1504 = vpack.c.b16 %v1228, %v1224
        %v1505 = vpack.c.b16 %v1229, %v1225
        %v1506 = vpack.c.b16 %v1230, %v1226
        %v1507 = vpack.c.b16 %v1235, %v1231
        %v1508 = vpack.c.b16 %v1236, %v1232
        %v1509 = vpack.c.b16 %v1237, %v1233
        %v1510 = vpack.c.b16 %v1238, %v1234
        %v1511 = vpack.c.b16 %v1243, %v1239
        %v1512 = vpack.c.b16 %v1244, %v1240
        %v1513 = vpack.c.b16 %v1245, %v1241
        %v1514 = vpack.c.b16 %v1246, %v1242
        %v1515 = vpack.c.b16 %v1251, %v1247
        %v1516 = vpack.c.b16 %v1252, %v1248
        %v1517 = vpack.c.b16 %v1253, %v1249
        %v1518 = vpack.c.b16 %v1254, %v1250
        %v1519 = vpack.c.b16 %v1259, %v1255
        %v1520 = vpack.c.b16 %v1260, %v1256
        %v1521 = vpack.c.b16 %v1261, %v1257
        %v1522 = vpack.c.b16 %v1262, %v1258
        %v1523 = vpack.c.b16 %v1267, %v1263
        %v1524 = vpack.c.b16 %v1268, %v1264
        %v1525 = vpack.c.b16 %v1269, %v1265
        %v1526 = vpack.c.b16 %v1270, %v1266
        %v1527 = vpack.c.b16 %v1275, %v1271
        %v1528 = vpack.c.b16 %v1276, %v1272
        %v1529 = vpack.c.b16 %v1277, %v1273
        %v1530 = vpack.c.b16 %v1278, %v1274
        %v1531 = vpack.c.b16 %v1283, %v1279
        %v1532 = vpack.c.b16 %v1284, %v1280
        %v1533 = vpack.c.b16 %v1285, %v1281
        %v1534 = vpack.c.b16 %v1286, %v1282
        %v1535 = vpack.c.b16 %v1291, %v1287
        %v1536 = vpack.c.b16 %v1292, %v1288
        %v1537 = vpack.c.b16 %v1293, %v1289
        %v1538 = vpack.c.b16 %v1294, %v1290
        %v1539 = vpack.c.b16 %v1299, %v1295
        %v1540 = vpack.c.b16 %v1300, %v1296
        %v1541 = vpack.c.b16 %v1301, %v1297
        %v1542 = vpack.c.b16 %v1302, %v1298
        %v1543 = vpack.c.b16 %v1307, %v1303
        %v1544 = vpack.c.b16 %v1308, %v1304
        %v1545 = vpack.c.b16 %v1309, %v1305
        %v1546 = vpack.c.b16 %v1310, %v1306
        %v1547 = vpack.c.b16 %v1315, %v1311
        %v1548 = vpack.c.b16 %v1316, %v1312
        %v1549 = vpack.c.b16 %v1317, %v1313
        %v1550 = vpack.c.b16 %v1318, %v1314
        %v1551 = vpack.c.b16 %v1323, %v1319
        %v1552 = vpack.c.b16 %v1324, %v1320
        %v1553 = vpack.c.b16 %v1325, %v1321
        %v1554 = vpack.c.b16 %v1326, %v1322
        %v1555 = vpack.c.b16 %v1331, %v1327
        %v1556 = vpack.c.b16 %v1332, %v1328
        %v1557 = vpack.c.b16 %v1333, %v1329
        %v1558 = vpack.c.b16 %v1334, %v1330
        %1783 = vmatpush.bf16.msra.mxu0 %v1363
        %1784 = vmatpush.bf16.msra.mxu0 %v1359
        %1785 = vmatpush.bf16.msra.mxu0 %v1355
        %1786 = vmatpush.bf16.msra.mxu0 %v1351
        %1787 = vmatpush.bf16.msra.mxu0 %v1347
        %1788 = vmatpush.bf16.msra.mxu0 %v1343
        %1789 = vmatpush.bf16.msra.mxu0 %v1339
        %1790 = vmatpush.bf16.msra.mxu0 %v1335
        %1791 = vmatmul.bf16.gmra.mxu0 %v649
        %v1792 = vpop.f32.mrf.mxu0
        %v1793 = vadd.f32 %v630, %v1792
        %v1794 = vpop.f32.mrf.mxu0
        %1795 = vdwg.mxu0
        %1796 = vmatpush.bf16.msra.mxu0 %v1395
        %1797 = vmatpush.bf16.msra.mxu0 %v1391
        %1798 = vmatpush.bf16.msra.mxu0 %v1387
        %1799 = vmatpush.bf16.msra.mxu0 %v1383
        %1800 = vmatpush.bf16.msra.mxu0 %v1379
        %1801 = vmatpush.bf16.msra.mxu0 %v1375
        %1802 = vmatpush.bf16.msra.mxu0 %v1371
        %1803 = vmatpush.bf16.msra.mxu0 %v1367
        %1804 = vmatmul.bf16.gmra.mxu0 %v650
        %v1805 = vpop.f32.mrf.mxu0
        %v1806 = vadd.f32 %v1793, %v1805
        %v1807 = vpop.f32.mrf.mxu0
        %1808 = vdwg.mxu0
        %1809 = vmatpush.bf16.msra.mxu0 %v1427
        %1810 = vmatpush.bf16.msra.mxu0 %v1423
        %1811 = vmatpush.bf16.msra.mxu0 %v1419
        %1812 = vmatpush.bf16.msra.mxu0 %v1415
        %1813 = vmatpush.bf16.msra.mxu0 %v1411
        %1814 = vmatpush.bf16.msra.mxu0 %v1407
        %1815 = vmatpush.bf16.msra.mxu0 %v1403
        %1816 = vmatpush.bf16.msra.mxu0 %v1399
        %1817 = vmatmul.bf16.gmra.mxu0 %v651
        %v1818 = vpop.f32.mrf.mxu0
        %v1819 = vadd.f32 %v1806, %v1818
        %v1820 = vpop.f32.mrf.mxu0
        %1821 = vdwg.mxu0
        %1822 = vmatpush.bf16.msra.mxu0 %v1459
        %1823 = vmatpush.bf16.msra.mxu0 %v1455
        %1824 = vmatpush.bf16.msra.mxu0 %v1451
        %1825 = vmatpush.bf16.msra.mxu0 %v1447
        %1826 = vmatpush.bf16.msra.mxu0 %v1443
        %1827 = vmatpush.bf16.msra.mxu0 %v1439
        %1828 = vmatpush.bf16.msra.mxu0 %v1435
        %1829 = vmatpush.bf16.msra.mxu0 %v1431
        %1830 = vmatmul.bf16.gmra.mxu0 %v652
        %v1831 = vpop.f32.mrf.mxu0
        %v1832 = vadd.f32 %v1819, %v1831
        %v1833 = vpop.f32.mrf.mxu0
        %1834 = vdwg.mxu0
        %1835 = vmatpush.bf16.msra.mxu0 %v1491
        %1836 = vmatpush.bf16.msra.mxu0 %v1487
        %1837 = vmatpush.bf16.msra.mxu0 %v1483
        %1838 = vmatpush.bf16.msra.mxu0 %v1479
        %1839 = vmatpush.bf16.msra.mxu0 %v1475
        %1840 = vmatpush.bf16.msra.mxu0 %v1471
        %1841 = vmatpush.bf16.msra.mxu0 %v1467
        %1842 = vmatpush.bf16.msra.mxu0 %v1463
        %1843 = vmatmul.bf16.gmra.mxu0 %v653
        %v1844 = vpop.f32.mrf.mxu0
        %v1845 = vadd.f32 %v1832, %v1844
        %v1846 = vpop.f32.mrf.mxu0
        %1847 = vdwg.mxu0
        %1848 = vmatpush.bf16.msra.mxu0 %v1523
        %1849 = vmatpush.bf16.msra.mxu0 %v1519
        %1850 = vmatpush.bf16.msra.mxu0 %v1515
        %1851 = vmatpush.bf16.msra.mxu0 %v1511
        %1852 = vmatpush.bf16.msra.mxu0 %v1507
        %1853 = vmatpush.bf16.msra.mxu0 %v1503
        %1854 = vmatpush.bf16.msra.mxu0 %v1499
        %1855 = vmatpush.bf16.msra.mxu0 %v1495
        %1856 = vmatmul.bf16.gmra.mxu0 %v654
        %v1857 = vpop.f32.mrf.mxu0
        %v1858 = vadd.f32 %v1845, %v1857
        %v1859 = vpop.f32.mrf.mxu0
        %1860 = vdwg.mxu0
        %1861 = vmatpush.bf16.msra.mxu0 %v1555
        %1862 = vmatpush.bf16.msra.mxu0 %v1551
        %1863 = vmatpush.bf16.msra.mxu0 %v1547
        %1864 = vmatpush.bf16.msra.mxu0 %v1543
        %1865 = vmatpush.bf16.msra.mxu0 %v1539
        %1866 = vmatpush.bf16.msra.mxu0 %v1535
        %1867 = vmatpush.bf16.msra.mxu0 %v1531
        %1868 = vmatpush.bf16.msra.mxu0 %v1527
        %1869 = vmatmul.bf16.gmra.mxu0 %v655
        %v1870 = vpop.f32.mrf.mxu0
        %v1871 = vadd.f32 %v1858, %v1870
        %v1872 = vpop.f32.mrf.mxu0
        %1873 = vdwg.mxu0
        %1874 = vmatpush.bf16.msra.mxu0 %v1364
        %1875 = vmatpush.bf16.msra.mxu0 %v1360
        %1876 = vmatpush.bf16.msra.mxu0 %v1356
        %1877 = vmatpush.bf16.msra.mxu0 %v1352
        %1878 = vmatpush.bf16.msra.mxu0 %v1348
        %1879 = vmatpush.bf16.msra.mxu0 %v1344
        %1880 = vmatpush.bf16.msra.mxu0 %v1340
        %1881 = vmatpush.bf16.msra.mxu0 %v1336
        %1882 = vmatmul.bf16.gmra.mxu0 %v649
        %v1883 = vpop.f32.mrf.mxu0
        %v1884 = vadd.f32 %v631, %v1883
        %v1885 = vpop.f32.mrf.mxu0
        %1886 = vdwg.mxu0
        %1887 = vmatpush.bf16.msra.mxu0 %v1396
        %1888 = vmatpush.bf16.msra.mxu0 %v1392
        %1889 = vmatpush.bf16.msra.mxu0 %v1388
        %1890 = vmatpush.bf16.msra.mxu0 %v1384
        %1891 = vmatpush.bf16.msra.mxu0 %v1380
        %1892 = vmatpush.bf16.msra.mxu0 %v1376
        %1893 = vmatpush.bf16.msra.mxu0 %v1372
        %1894 = vmatpush.bf16.msra.mxu0 %v1368
        %1895 = vmatmul.bf16.gmra.mxu0 %v650
        %v1896 = vpop.f32.mrf.mxu0
        %v1897 = vadd.f32 %v1884, %v1896
        %v1898 = vpop.f32.mrf.mxu0
        %1899 = vdwg.mxu0
        %1900 = vmatpush.bf16.msra.mxu0 %v1428
        %1901 = vmatpush.bf16.msra.mxu0 %v1424
        %1902 = vmatpush.bf16.msra.mxu0 %v1420
        %1903 = vmatpush.bf16.msra.mxu0 %v1416
        %1904 = vmatpush.bf16.msra.mxu0 %v1412
        %1905 = vmatpush.bf16.msra.mxu0 %v1408
        %1906 = vmatpush.bf16.msra.mxu0 %v1404
        %1907 = vmatpush.bf16.msra.mxu0 %v1400
        %1908 = vmatmul.bf16.gmra.mxu0 %v651
        %v1909 = vpop.f32.mrf.mxu0
        %v1910 = vadd.f32 %v1897, %v1909
        %v1911 = vpop.f32.mrf.mxu0
        %1912 = vdwg.mxu0
        %1913 = vmatpush.bf16.msra.mxu0 %v1460
        %1914 = vmatpush.bf16.msra.mxu0 %v1456
        %1915 = vmatpush.bf16.msra.mxu0 %v1452
        %1916 = vmatpush.bf16.msra.mxu0 %v1448
        %1917 = vmatpush.bf16.msra.mxu0 %v1444
        %1918 = vmatpush.bf16.msra.mxu0 %v1440
        %1919 = vmatpush.bf16.msra.mxu0 %v1436
        %1920 = vmatpush.bf16.msra.mxu0 %v1432
        %1921 = vmatmul.bf16.gmra.mxu0 %v652
        %v1922 = vpop.f32.mrf.mxu0
        %v1923 = vadd.f32 %v1910, %v1922
        %v1924 = vpop.f32.mrf.mxu0
        %1925 = vdwg.mxu0
        %1926 = vmatpush.bf16.msra.mxu0 %v1492
        %1927 = vmatpush.bf16.msra.mxu0 %v1488
        %1928 = vmatpush.bf16.msra.mxu0 %v1484
        %1929 = vmatpush.bf16.msra.mxu0 %v1480
        %1930 = vmatpush.bf16.msra.mxu0 %v1476
        %1931 = vmatpush.bf16.msra.mxu0 %v1472
        %1932 = vmatpush.bf16.msra.mxu0 %v1468
        %1933 = vmatpush.bf16.msra.mxu0 %v1464
        %1934 = vmatmul.bf16.gmra.mxu0 %v653
        %v1935 = vpop.f32.mrf.mxu0
        %v1936 = vadd.f32 %v1923, %v1935
        %v1937 = vpop.f32.mrf.mxu0
        %1938 = vdwg.mxu0
        %1939 = vmatpush.bf16.msra.mxu0 %v1524
        %1940 = vmatpush.bf16.msra.mxu0 %v1520
        %1941 = vmatpush.bf16.msra.mxu0 %v1516
        %1942 = vmatpush.bf16.msra.mxu0 %v1512
        %1943 = vmatpush.bf16.msra.mxu0 %v1508
        %1944 = vmatpush.bf16.msra.mxu0 %v1504
        %1945 = vmatpush.bf16.msra.mxu0 %v1500
        %1946 = vmatpush.bf16.msra.mxu0 %v1496
        %1947 = vmatmul.bf16.gmra.mxu0 %v654
        %v1948 = vpop.f32.mrf.mxu0
        %v1949 = vadd.f32 %v1936, %v1948
        %v1950 = vpop.f32.mrf.mxu0
        %1951 = vdwg.mxu0
        %1952 = vmatpush.bf16.msra.mxu0 %v1556
        %1953 = vmatpush.bf16.msra.mxu0 %v1552
        %1954 = vmatpush.bf16.msra.mxu0 %v1548
        %1955 = vmatpush.bf16.msra.mxu0 %v1544
        %1956 = vmatpush.bf16.msra.mxu0 %v1540
        %1957 = vmatpush.bf16.msra.mxu0 %v1536
        %1958 = vmatpush.bf16.msra.mxu0 %v1532
        %1959 = vmatpush.bf16.msra.mxu0 %v1528
        %1960 = vmatmul.bf16.gmra.mxu0 %v655
        %v1961 = vpop.f32.mrf.mxu0
        %v1962 = vadd.f32 %v1949, %v1961
        %v1963 = vpop.f32.mrf.mxu0
        %1964 = vdwg.mxu0
        %1965 = vmatpush.bf16.msra.mxu0 %v1365
        %1966 = vmatpush.bf16.msra.mxu0 %v1361
        %1967 = vmatpush.bf16.msra.mxu0 %v1357
        %1968 = vmatpush.bf16.msra.mxu0 %v1353
        %1969 = vmatpush.bf16.msra.mxu0 %v1349
        %1970 = vmatpush.bf16.msra.mxu0 %v1345
        %1971 = vmatpush.bf16.msra.mxu0 %v1341
        %1972 = vmatpush.bf16.msra.mxu0 %v1337
        %1973 = vmatmul.bf16.gmra.mxu0 %v649
        %v1974 = vpop.f32.mrf.mxu0
        %v1975 = vadd.f32 %v632, %v1974
        %v1976 = vpop.f32.mrf.mxu0
        %1977 = vdwg.mxu0
        %1978 = vmatpush.bf16.msra.mxu0 %v1397
        %1979 = vmatpush.bf16.msra.mxu0 %v1393
        %1980 = vmatpush.bf16.msra.mxu0 %v1389
        %1981 = vmatpush.bf16.msra.mxu0 %v1385
        %1982 = vmatpush.bf16.msra.mxu0 %v1381
        %1983 = vmatpush.bf16.msra.mxu0 %v1377
        %1984 = vmatpush.bf16.msra.mxu0 %v1373
        %1985 = vmatpush.bf16.msra.mxu0 %v1369
        %1986 = vmatmul.bf16.gmra.mxu0 %v650
        %v1987 = vpop.f32.mrf.mxu0
        %v1988 = vadd.f32 %v1975, %v1987
        %v1989 = vpop.f32.mrf.mxu0
        %1990 = vdwg.mxu0
        %1991 = vmatpush.bf16.msra.mxu0 %v1429
        %1992 = vmatpush.bf16.msra.mxu0 %v1425
        %1993 = vmatpush.bf16.msra.mxu0 %v1421
        %1994 = vmatpush.bf16.msra.mxu0 %v1417
        %1995 = vmatpush.bf16.msra.mxu0 %v1413
        %1996 = vmatpush.bf16.msra.mxu0 %v1409
        %1997 = vmatpush.bf16.msra.mxu0 %v1405
        %1998 = vmatpush.bf16.msra.mxu0 %v1401
        %1999 = vmatmul.bf16.gmra.mxu0 %v651
        %v2000 = vpop.f32.mrf.mxu0
        %v2001 = vadd.f32 %v1988, %v2000
        %v2002 = vpop.f32.mrf.mxu0
        %2003 = vdwg.mxu0
        %2004 = vmatpush.bf16.msra.mxu0 %v1461
        %2005 = vmatpush.bf16.msra.mxu0 %v1457
        %2006 = vmatpush.bf16.msra.mxu0 %v1453
        %2007 = vmatpush.bf16.msra.mxu0 %v1449
        %2008 = vmatpush.bf16.msra.mxu0 %v1445
        %2009 = vmatpush.bf16.msra.mxu0 %v1441
        %2010 = vmatpush.bf16.msra.mxu0 %v1437
        %2011 = vmatpush.bf16.msra.mxu0 %v1433
        %2012 = vmatmul.bf16.gmra.mxu0 %v652
        %v2013 = vpop.f32.mrf.mxu0
        %v2014 = vadd.f32 %v2001, %v2013
        %v2015 = vpop.f32.mrf.mxu0
        %2016 = vdwg.mxu0
        %2017 = vmatpush.bf16.msra.mxu0 %v1493
        %2018 = vmatpush.bf16.msra.mxu0 %v1489
        %2019 = vmatpush.bf16.msra.mxu0 %v1485
        %2020 = vmatpush.bf16.msra.mxu0 %v1481
        %2021 = vmatpush.bf16.msra.mxu0 %v1477
        %2022 = vmatpush.bf16.msra.mxu0 %v1473
        %2023 = vmatpush.bf16.msra.mxu0 %v1469
        %2024 = vmatpush.bf16.msra.mxu0 %v1465
        %2025 = vmatmul.bf16.gmra.mxu0 %v653
        %v2026 = vpop.f32.mrf.mxu0
        %v2027 = vadd.f32 %v2014, %v2026
        %v2028 = vpop.f32.mrf.mxu0
        %2029 = vdwg.mxu0
        %2030 = vmatpush.bf16.msra.mxu0 %v1525
        %2031 = vmatpush.bf16.msra.mxu0 %v1521
        %2032 = vmatpush.bf16.msra.mxu0 %v1517
        %2033 = vmatpush.bf16.msra.mxu0 %v1513
        %2034 = vmatpush.bf16.msra.mxu0 %v1509
        %2035 = vmatpush.bf16.msra.mxu0 %v1505
        %2036 = vmatpush.bf16.msra.mxu0 %v1501
        %2037 = vmatpush.bf16.msra.mxu0 %v1497
        %2038 = vmatmul.bf16.gmra.mxu0 %v654
        %v2039 = vpop.f32.mrf.mxu0
        %v2040 = vadd.f32 %v2027, %v2039
        %v2041 = vpop.f32.mrf.mxu0
        %2042 = vdwg.mxu0
        %2043 = vmatpush.bf16.msra.mxu0 %v1557
        %2044 = vmatpush.bf16.msra.mxu0 %v1553
        %2045 = vmatpush.bf16.msra.mxu0 %v1549
        %2046 = vmatpush.bf16.msra.mxu0 %v1545
        %2047 = vmatpush.bf16.msra.mxu0 %v1541
        %2048 = vmatpush.bf16.msra.mxu0 %v1537
        %2049 = vmatpush.bf16.msra.mxu0 %v1533
        %2050 = vmatpush.bf16.msra.mxu0 %v1529
        %2051 = vmatmul.bf16.gmra.mxu0 %v655
        %v2052 = vpop.f32.mrf.mxu0
        %v2053 = vadd.f32 %v2040, %v2052
        %v2054 = vpop.f32.mrf.mxu0
        %2055 = vdwg.mxu0
        %2056 = vmatpush.bf16.msra.mxu0 %v1366
        %2057 = vmatpush.bf16.msra.mxu0 %v1362
        %2058 = vmatpush.bf16.msra.mxu0 %v1358
        %2059 = vmatpush.bf16.msra.mxu0 %v1354
        %2060 = vmatpush.bf16.msra.mxu0 %v1350
        %2061 = vmatpush.bf16.msra.mxu0 %v1346
        %2062 = vmatpush.bf16.msra.mxu0 %v1342
        %2063 = vmatpush.bf16.msra.mxu0 %v1338
        %2064 = vmatmul.bf16.gmra.mxu0 %v649
        %v2065 = vpop.f32.mrf.mxu0
        %v2066 = vadd.f32 %v633, %v2065
        %v2067 = vpop.f32.mrf.mxu0
        %2068 = vdwg.mxu0
        %2069 = vmatpush.bf16.msra.mxu0 %v1398
        %2070 = vmatpush.bf16.msra.mxu0 %v1394
        %2071 = vmatpush.bf16.msra.mxu0 %v1390
        %2072 = vmatpush.bf16.msra.mxu0 %v1386
        %2073 = vmatpush.bf16.msra.mxu0 %v1382
        %2074 = vmatpush.bf16.msra.mxu0 %v1378
        %2075 = vmatpush.bf16.msra.mxu0 %v1374
        %2076 = vmatpush.bf16.msra.mxu0 %v1370
        %2077 = vmatmul.bf16.gmra.mxu0 %v650
        %v2078 = vpop.f32.mrf.mxu0
        %v2079 = vadd.f32 %v2066, %v2078
        %v2080 = vpop.f32.mrf.mxu0
        %2081 = vdwg.mxu0
        %2082 = vmatpush.bf16.msra.mxu0 %v1430
        %2083 = vmatpush.bf16.msra.mxu0 %v1426
        %2084 = vmatpush.bf16.msra.mxu0 %v1422
        %2085 = vmatpush.bf16.msra.mxu0 %v1418
        %2086 = vmatpush.bf16.msra.mxu0 %v1414
        %2087 = vmatpush.bf16.msra.mxu0 %v1410
        %2088 = vmatpush.bf16.msra.mxu0 %v1406
        %2089 = vmatpush.bf16.msra.mxu0 %v1402
        %2090 = vmatmul.bf16.gmra.mxu0 %v651
        %v2091 = vpop.f32.mrf.mxu0
        %v2092 = vadd.f32 %v2079, %v2091
        %v2093 = vpop.f32.mrf.mxu0
        %2094 = vdwg.mxu0
        %2095 = vmatpush.bf16.msra.mxu0 %v1462
        %2096 = vmatpush.bf16.msra.mxu0 %v1458
        %2097 = vmatpush.bf16.msra.mxu0 %v1454
        %2098 = vmatpush.bf16.msra.mxu0 %v1450
        %2099 = vmatpush.bf16.msra.mxu0 %v1446
        %2100 = vmatpush.bf16.msra.mxu0 %v1442
        %2101 = vmatpush.bf16.msra.mxu0 %v1438
        %2102 = vmatpush.bf16.msra.mxu0 %v1434
        %2103 = vmatmul.bf16.gmra.mxu0 %v652
        %v2104 = vpop.f32.mrf.mxu0
        %v2105 = vadd.f32 %v2092, %v2104
        %v2106 = vpop.f32.mrf.mxu0
        %2107 = vdwg.mxu0
        %2108 = vmatpush.bf16.msra.mxu0 %v1494
        %2109 = vmatpush.bf16.msra.mxu0 %v1490
        %2110 = vmatpush.bf16.msra.mxu0 %v1486
        %2111 = vmatpush.bf16.msra.mxu0 %v1482
        %2112 = vmatpush.bf16.msra.mxu0 %v1478
        %2113 = vmatpush.bf16.msra.mxu0 %v1474
        %2114 = vmatpush.bf16.msra.mxu0 %v1470
        %2115 = vmatpush.bf16.msra.mxu0 %v1466
        %2116 = vmatmul.bf16.gmra.mxu0 %v653
        %v2117 = vpop.f32.mrf.mxu0
        %v2118 = vadd.f32 %v2105, %v2117
        %v2119 = vpop.f32.mrf.mxu0
        %2120 = vdwg.mxu0
        %2121 = vmatpush.bf16.msra.mxu0 %v1526
        %2122 = vmatpush.bf16.msra.mxu0 %v1522
        %2123 = vmatpush.bf16.msra.mxu0 %v1518
        %2124 = vmatpush.bf16.msra.mxu0 %v1514
        %2125 = vmatpush.bf16.msra.mxu0 %v1510
        %2126 = vmatpush.bf16.msra.mxu0 %v1506
        %2127 = vmatpush.bf16.msra.mxu0 %v1502
        %2128 = vmatpush.bf16.msra.mxu0 %v1498
        %2129 = vmatmul.bf16.gmra.mxu0 %v654
        %v2130 = vpop.f32.mrf.mxu0
        %v2131 = vadd.f32 %v2118, %v2130
        %v2132 = vpop.f32.mrf.mxu0
        %2133 = vdwg.mxu0
        %2134 = vmatpush.bf16.msra.mxu0 %v1558
        %2135 = vmatpush.bf16.msra.mxu0 %v1554
        %2136 = vmatpush.bf16.msra.mxu0 %v1550
        %2137 = vmatpush.bf16.msra.mxu0 %v1546
        %2138 = vmatpush.bf16.msra.mxu0 %v1542
        %2139 = vmatpush.bf16.msra.mxu0 %v1538
        %2140 = vmatpush.bf16.msra.mxu0 %v1534
        %2141 = vmatpush.bf16.msra.mxu0 %v1530
        %2142 = vmatmul.bf16.gmra.mxu0 %v655
        %v2143 = vpop.f32.mrf.mxu0
        %v2144 = vadd.f32 %v2131, %v2143
        %v2145 = vpop.f32.mrf.mxu0
        %2146 = vdwg.mxu0
        %vm2147 = vcmp.gt.f32.partialorder %v1871, 0.0
        %vm2148 = vcmp.gt.f32.partialorder %v1962, 0.0
        %vm2149 = vcmp.gt.f32.partialorder %v2053, 0.0
        %vm2150 = vcmp.gt.f32.partialorder %v2144, 0.0
        %v2151 = vmul.f32 %v1871, 1.442695
        %v2152 = vpow.pop %v2151
        %v2153 = vmul.f32 %v1962, 1.442695
        %v2154 = vpow.pop %v2153
        %v2155 = vmul.f32 %v2053, 1.442695
        %v2156 = vpow.pop %v2155
        %v2157 = vmul.f32 %v2144, 1.442695
        %v2158 = vpow.pop %v2157
        %v2159 = vsub.f32 %v2152, 1.0
        %v2160 = vsub.f32 %v2154, 1.0
        %v2161 = vsub.f32 %v2156, 1.0
        %v2162 = vsub.f32 %v2158, 1.0
        %v2163 = vmul.f32 %v2159, 1.6732632
        %v2164 = vmul.f32 %v2160, 1.6732632
        %v2165 = vmul.f32 %v2161, 1.6732632
        %v2166 = vmul.f32 %v2162, 1.6732632
        %v2167 = vsel %vm2147, %v1871, %v2163
        %v2168 = vsel %vm2148, %v1962, %v2164
        %v2169 = vsel %vm2149, %v2053, %v2165
        %v2170 = vsel %vm2150, %v2144, %v2166
        %v2171 = vmul.f32 %v2167, 1.050701
        %v2172 = vmul.f32 %v2168, 1.050701
        %v2173 = vmul.f32 %v2169, 1.050701
        %v2174 = vmul.f32 %v2170, 1.050701
        %v2175 = vpack.c.bf16 %v2171, %v2171
        %v2176 = vpack.c.bf16 %v2172, %v2172
        %v2177 = vpack.c.bf16 %v2173, %v2173
        %v2178 = vpack.c.bf16 %v2174, %v2174
        %v2179 = vld [vmem:[#allocation6] sm:$0xff]
        %v2180 = vld [vmem:[#allocation6 + $0x8] sm:$0xff]
        %v2181 = vld [vmem:[#allocation6 + $0x10] sm:$0xff]
        %v2182 = vld [vmem:[#allocation6 + $0x18] sm:$0xff]
        %v2183 = vld [vmem:[#allocation6 + $0x20] sm:$0xff]
        %v2184 = vld [vmem:[#allocation6 + $0x28] sm:$0xff]
        %v2185 = vld [vmem:[#allocation6 + $0x30] sm:$0xff]
        %v2186 = vld [vmem:[#allocation6 + $0x38] sm:$0xff]
        %v2187 = vld [vmem:[#allocation6 + $0x40] sm:$0xff]
        %v2188 = vld [vmem:[#allocation6 + $0x48] sm:$0xff]
        %v2189 = vld [vmem:[#allocation6 + $0x50] sm:$0xff]
        %v2190 = vld [vmem:[#allocation6 + $0x58] sm:$0xff]
        %v2191 = vld [vmem:[#allocation6 + $0x60] sm:$0xff]
        %v2192 = vld [vmem:[#allocation6 + $0x68] sm:$0xff]
        %v2193 = vld [vmem:[#allocation6 + $0x70] sm:$0xff]
        %v2194 = vld [vmem:[#allocation6 + $0x78] sm:$0xff]
        %v2195 = vld [vmem:[#allocation6 + $0x80] sm:$0xff]
        %v2196 = vld [vmem:[#allocation6 + $0x88] sm:$0xff]
        %v2197 = vld [vmem:[#allocation6 + $0x90] sm:$0xff]
        %v2198 = vld [vmem:[#allocation6 + $0x98] sm:$0xff]
        %v2199 = vld [vmem:[#allocation6 + $0xa0] sm:$0xff]
        %v2200 = vld [vmem:[#allocation6 + $0xa8] sm:$0xff]
        %v2201 = vld [vmem:[#allocation6 + $0xb0] sm:$0xff]
        %v2202 = vld [vmem:[#allocation6 + $0xb8] sm:$0xff]
        %v2203 = vld [vmem:[#allocation6 + $0xc0] sm:$0xff]
        %v2204 = vld [vmem:[#allocation6 + $0xc8] sm:$0xff]
        %v2205 = vld [vmem:[#allocation6 + $0xd0] sm:$0xff]
        %v2206 = vld [vmem:[#allocation6 + $0xd8] sm:$0xff]
        %v2207 = vld [vmem:[#allocation6 + $0xe0] sm:$0xff]
        %v2208 = vld [vmem:[#allocation6 + $0xe8] sm:$0xff]
        %v2209 = vld [vmem:[#allocation6 + $0xf0] sm:$0xff]
        %v2210 = vld [vmem:[#allocation6 + $0xf8] sm:$0xff]
        %v2211 = vld [vmem:[#allocation6 + $0x100] sm:$0xff]
        %v2212 = vld [vmem:[#allocation6 + $0x108] sm:$0xff]
        %v2213 = vld [vmem:[#allocation6 + $0x110] sm:$0xff]
        %v2214 = vld [vmem:[#allocation6 + $0x118] sm:$0xff]
        %v2215 = vld [vmem:[#allocation6 + $0x120] sm:$0xff]
        %v2216 = vld [vmem:[#allocation6 + $0x128] sm:$0xff]
        %v2217 = vld [vmem:[#allocation6 + $0x130] sm:$0xff]
        %v2218 = vld [vmem:[#allocation6 + $0x138] sm:$0xff]
        %v2219 = vld [vmem:[#allocation6 + $0x140] sm:$0xff]
        %v2220 = vld [vmem:[#allocation6 + $0x148] sm:$0xff]
        %v2221 = vld [vmem:[#allocation6 + $0x150] sm:$0xff]
        %v2222 = vld [vmem:[#allocation6 + $0x158] sm:$0xff]
        %v2223 = vld [vmem:[#allocation6 + $0x160] sm:$0xff]
        %v2224 = vld [vmem:[#allocation6 + $0x168] sm:$0xff]
        %v2225 = vld [vmem:[#allocation6 + $0x170] sm:$0xff]
        %v2226 = vld [vmem:[#allocation6 + $0x178] sm:$0xff]
        %v2227 = vld [vmem:[#allocation6 + $0x180] sm:$0xff]
        %v2228 = vld [vmem:[#allocation6 + $0x188] sm:$0xff]
        %v2229 = vld [vmem:[#allocation6 + $0x190] sm:$0xff]
        %v2230 = vld [vmem:[#allocation6 + $0x198] sm:$0xff]
        %v2231 = vld [vmem:[#allocation6 + $0x1a0] sm:$0xff]
        %v2232 = vld [vmem:[#allocation6 + $0x1a8] sm:$0xff]
        %v2233 = vld [vmem:[#allocation6 + $0x1b0] sm:$0xff]
        %v2234 = vld [vmem:[#allocation6 + $0x1b8] sm:$0xff]
        %v2235 = vld [vmem:[#allocation6 + $0x1c0] sm:$0xff]
        %v2236 = vld [vmem:[#allocation6 + $0x1c8] sm:$0xff]
        %v2237 = vld [vmem:[#allocation6 + $0x1d0] sm:$0xff]
        %v2238 = vld [vmem:[#allocation6 + $0x1d8] sm:$0xff]
        %v2239 = vld [vmem:[#allocation6 + $0x1e0] sm:$0xff]
        %v2240 = vld [vmem:[#allocation6 + $0x1e8] sm:$0xff]
        %v2241 = vld [vmem:[#allocation6 + $0x1f0] sm:$0xff]
        %v2242 = vld [vmem:[#allocation6 + $0x1f8] sm:$0xff]
        %v2243 = vld [vmem:[#allocation6 + $0x200] sm:$0xff]
        %v2244 = vld [vmem:[#allocation6 + $0x208] sm:$0xff]
        %v2245 = vld [vmem:[#allocation6 + $0x210] sm:$0xff]
        %v2246 = vld [vmem:[#allocation6 + $0x218] sm:$0xff]
        %v2247 = vld [vmem:[#allocation6 + $0x220] sm:$0xff]
        %v2248 = vld [vmem:[#allocation6 + $0x228] sm:$0xff]
        %v2249 = vld [vmem:[#allocation6 + $0x230] sm:$0xff]
        %v2250 = vld [vmem:[#allocation6 + $0x238] sm:$0xff]
        %v2251 = vld [vmem:[#allocation6 + $0x240] sm:$0xff]
        %v2252 = vld [vmem:[#allocation6 + $0x248] sm:$0xff]
        %v2253 = vld [vmem:[#allocation6 + $0x250] sm:$0xff]
        %v2254 = vld [vmem:[#allocation6 + $0x258] sm:$0xff]
        %v2255 = vld [vmem:[#allocation6 + $0x260] sm:$0xff]
        %v2256 = vld [vmem:[#allocation6 + $0x268] sm:$0xff]
        %v2257 = vld [vmem:[#allocation6 + $0x270] sm:$0xff]
        %v2258 = vld [vmem:[#allocation6 + $0x278] sm:$0xff]
        %v2259 = vld [vmem:[#allocation6 + $0x280] sm:$0xff]
        %v2260 = vld [vmem:[#allocation6 + $0x288] sm:$0xff]
        %v2261 = vld [vmem:[#allocation6 + $0x290] sm:$0xff]
        %v2262 = vld [vmem:[#allocation6 + $0x298] sm:$0xff]
        %v2263 = vld [vmem:[#allocation6 + $0x2a0] sm:$0xff]
        %v2264 = vld [vmem:[#allocation6 + $0x2a8] sm:$0xff]
        %v2265 = vld [vmem:[#allocation6 + $0x2b0] sm:$0xff]
        %v2266 = vld [vmem:[#allocation6 + $0x2b8] sm:$0xff]
        %v2267 = vld [vmem:[#allocation6 + $0x2c0] sm:$0xff]
        %v2268 = vld [vmem:[#allocation6 + $0x2c8] sm:$0xff]
        %v2269 = vld [vmem:[#allocation6 + $0x2d0] sm:$0xff]
        %v2270 = vld [vmem:[#allocation6 + $0x2d8] sm:$0xff]
        %v2271 = vld [vmem:[#allocation6 + $0x2e0] sm:$0xff]
        %v2272 = vld [vmem:[#allocation6 + $0x2e8] sm:$0xff]
        %v2273 = vld [vmem:[#allocation6 + $0x2f0] sm:$0xff]
        %v2274 = vld [vmem:[#allocation6 + $0x2f8] sm:$0xff]
        %v2275 = vld [vmem:[#allocation6 + $0x300] sm:$0xff]
        %v2276 = vld [vmem:[#allocation6 + $0x308] sm:$0xff]
        %v2277 = vld [vmem:[#allocation6 + $0x310] sm:$0xff]
        %v2278 = vld [vmem:[#allocation6 + $0x318] sm:$0xff]
        %v2279 = vld [vmem:[#allocation6 + $0x320] sm:$0xff]
        %v2280 = vld [vmem:[#allocation6 + $0x328] sm:$0xff]
        %v2281 = vld [vmem:[#allocation6 + $0x330] sm:$0xff]
        %v2282 = vld [vmem:[#allocation6 + $0x338] sm:$0xff]
        %v2283 = vld [vmem:[#allocation6 + $0x340] sm:$0xff]
        %v2284 = vld [vmem:[#allocation6 + $0x348] sm:$0xff]
        %v2285 = vld [vmem:[#allocation6 + $0x350] sm:$0xff]
        %v2286 = vld [vmem:[#allocation6 + $0x358] sm:$0xff]
        %v2287 = vld [vmem:[#allocation6 + $0x360] sm:$0xff]
        %v2288 = vld [vmem:[#allocation6 + $0x368] sm:$0xff]
        %v2289 = vld [vmem:[#allocation6 + $0x370] sm:$0xff]
        %v2290 = vld [vmem:[#allocation6 + $0x378] sm:$0xff]
        %v2291 = vld [vmem:[#allocation6 + $0x380] sm:$0xff]
        %v2292 = vld [vmem:[#allocation6 + $0x388] sm:$0xff]
        %v2293 = vld [vmem:[#allocation6 + $0x390] sm:$0xff]
        %v2294 = vld [vmem:[#allocation6 + $0x398] sm:$0xff]
        %v2295 = vld [vmem:[#allocation6 + $0x3a0] sm:$0xff]
        %v2296 = vld [vmem:[#allocation6 + $0x3a8] sm:$0xff]
        %v2297 = vld [vmem:[#allocation6 + $0x3b0] sm:$0xff]
        %v2298 = vld [vmem:[#allocation6 + $0x3b8] sm:$0xff]
        %v2299 = vld [vmem:[#allocation6 + $0x3c0] sm:$0xff]
        %v2300 = vld [vmem:[#allocation6 + $0x3c8] sm:$0xff]
        %v2301 = vld [vmem:[#allocation6 + $0x3d0] sm:$0xff]
        %v2302 = vld [vmem:[#allocation6 + $0x3d8] sm:$0xff]
        %v2303 = vld [vmem:[#allocation6 + $0x3e0] sm:$0xff]
        %v2304 = vld [vmem:[#allocation6 + $0x3e8] sm:$0xff]
        %v2305 = vld [vmem:[#allocation6 + $0x3f0] sm:$0xff]
        %v2306 = vld [vmem:[#allocation6 + $0x3f8] sm:$0xff]
        %v2307 = vld [vmem:[#allocation7] sm:$0xf]
        %v2309 = vperm.slane %v2307, 0
        %v2310 = vperm.slane %v2307, 1
        %v2311 = vperm.slane %v2307, 2
        %v2312 = vperm.slane %v2307, 3
        %v2445 = vunpack.c.l.b16 %v2179
        %v2446 = vunpack.c.h.b16 %v2179
        %v2447 = vunpack.c.l.b16 %v2180
        %v2448 = vunpack.c.h.b16 %v2180
        %v2449 = vunpack.c.l.b16 %v2181
        %v2450 = vunpack.c.h.b16 %v2181
        %v2451 = vunpack.c.l.b16 %v2182
        %v2452 = vunpack.c.h.b16 %v2182
        %v2453 = vunpack.c.l.b16 %v2183
        %v2454 = vunpack.c.h.b16 %v2183
        %v2455 = vunpack.c.l.b16 %v2184
        %v2456 = vunpack.c.h.b16 %v2184
        %v2457 = vunpack.c.l.b16 %v2185
        %v2458 = vunpack.c.h.b16 %v2185
        %v2459 = vunpack.c.l.b16 %v2186
        %v2460 = vunpack.c.h.b16 %v2186
        %v2461 = vunpack.c.l.b16 %v2187
        %v2462 = vunpack.c.h.b16 %v2187
        %v2463 = vunpack.c.l.b16 %v2188
        %v2464 = vunpack.c.h.b16 %v2188
        %v2465 = vunpack.c.l.b16 %v2189
        %v2466 = vunpack.c.h.b16 %v2189
        %v2467 = vunpack.c.l.b16 %v2190
        %v2468 = vunpack.c.h.b16 %v2190
        %v2469 = vunpack.c.l.b16 %v2191
        %v2470 = vunpack.c.h.b16 %v2191
        %v2471 = vunpack.c.l.b16 %v2192
        %v2472 = vunpack.c.h.b16 %v2192
        %v2473 = vunpack.c.l.b16 %v2193
        %v2474 = vunpack.c.h.b16 %v2193
        %v2475 = vunpack.c.l.b16 %v2194
        %v2476 = vunpack.c.h.b16 %v2194
        %v2477 = vunpack.c.l.b16 %v2195
        %v2478 = vunpack.c.h.b16 %v2195
        %v2479 = vunpack.c.l.b16 %v2196
        %v2480 = vunpack.c.h.b16 %v2196
        %v2481 = vunpack.c.l.b16 %v2197
        %v2482 = vunpack.c.h.b16 %v2197
        %v2483 = vunpack.c.l.b16 %v2198
        %v2484 = vunpack.c.h.b16 %v2198
        %v2485 = vunpack.c.l.b16 %v2199
        %v2486 = vunpack.c.h.b16 %v2199
        %v2487 = vunpack.c.l.b16 %v2200
        %v2488 = vunpack.c.h.b16 %v2200
        %v2489 = vunpack.c.l.b16 %v2201
        %v2490 = vunpack.c.h.b16 %v2201
        %v2491 = vunpack.c.l.b16 %v2202
        %v2492 = vunpack.c.h.b16 %v2202
        %v2493 = vunpack.c.l.b16 %v2203
        %v2494 = vunpack.c.h.b16 %v2203
        %v2495 = vunpack.c.l.b16 %v2204
        %v2496 = vunpack.c.h.b16 %v2204
        %v2497 = vunpack.c.l.b16 %v2205
        %v2498 = vunpack.c.h.b16 %v2205
        %v2499 = vunpack.c.l.b16 %v2206
        %v2500 = vunpack.c.h.b16 %v2206
        %v2501 = vunpack.c.l.b16 %v2207
        %v2502 = vunpack.c.h.b16 %v2207
        %v2503 = vunpack.c.l.b16 %v2208
        %v2504 = vunpack.c.h.b16 %v2208
        %v2505 = vunpack.c.l.b16 %v2209
        %v2506 = vunpack.c.h.b16 %v2209
        %v2507 = vunpack.c.l.b16 %v2210
        %v2508 = vunpack.c.h.b16 %v2210
        %v2509 = vunpack.c.l.b16 %v2211
        %v2510 = vunpack.c.h.b16 %v2211
        %v2511 = vunpack.c.l.b16 %v2212
        %v2512 = vunpack.c.h.b16 %v2212
        %v2513 = vunpack.c.l.b16 %v2213
        %v2514 = vunpack.c.h.b16 %v2213
        %v2515 = vunpack.c.l.b16 %v2214
        %v2516 = vunpack.c.h.b16 %v2214
        %v2517 = vunpack.c.l.b16 %v2215
        %v2518 = vunpack.c.h.b16 %v2215
        %v2519 = vunpack.c.l.b16 %v2216
        %v2520 = vunpack.c.h.b16 %v2216
        %v2521 = vunpack.c.l.b16 %v2217
        %v2522 = vunpack.c.h.b16 %v2217
        %v2523 = vunpack.c.l.b16 %v2218
        %v2524 = vunpack.c.h.b16 %v2218
        %v2525 = vunpack.c.l.b16 %v2219
        %v2526 = vunpack.c.h.b16 %v2219
        %v2527 = vunpack.c.l.b16 %v2220
        %v2528 = vunpack.c.h.b16 %v2220
        %v2529 = vunpack.c.l.b16 %v2221
        %v2530 = vunpack.c.h.b16 %v2221
        %v2531 = vunpack.c.l.b16 %v2222
        %v2532 = vunpack.c.h.b16 %v2222
        %v2533 = vunpack.c.l.b16 %v2223
        %v2534 = vunpack.c.h.b16 %v2223
        %v2535 = vunpack.c.l.b16 %v2224
        %v2536 = vunpack.c.h.b16 %v2224
        %v2537 = vunpack.c.l.b16 %v2225
        %v2538 = vunpack.c.h.b16 %v2225
        %v2539 = vunpack.c.l.b16 %v2226
        %v2540 = vunpack.c.h.b16 %v2226
        %v2541 = vunpack.c.l.b16 %v2227
        %v2542 = vunpack.c.h.b16 %v2227
        %v2543 = vunpack.c.l.b16 %v2228
        %v2544 = vunpack.c.h.b16 %v2228
        %v2545 = vunpack.c.l.b16 %v2229
        %v2546 = vunpack.c.h.b16 %v2229
        %v2547 = vunpack.c.l.b16 %v2230
        %v2548 = vunpack.c.h.b16 %v2230
        %v2549 = vunpack.c.l.b16 %v2231
        %v2550 = vunpack.c.h.b16 %v2231
        %v2551 = vunpack.c.l.b16 %v2232
        %v2552 = vunpack.c.h.b16 %v2232
        %v2553 = vunpack.c.l.b16 %v2233
        %v2554 = vunpack.c.h.b16 %v2233
        %v2555 = vunpack.c.l.b16 %v2234
        %v2556 = vunpack.c.h.b16 %v2234
        %v2557 = vunpack.c.l.b16 %v2235
        %v2558 = vunpack.c.h.b16 %v2235
        %v2559 = vunpack.c.l.b16 %v2236
        %v2560 = vunpack.c.h.b16 %v2236
        %v2561 = vunpack.c.l.b16 %v2237
        %v2562 = vunpack.c.h.b16 %v2237
        %v2563 = vunpack.c.l.b16 %v2238
        %v2564 = vunpack.c.h.b16 %v2238
        %v2565 = vunpack.c.l.b16 %v2239
        %v2566 = vunpack.c.h.b16 %v2239
        %v2567 = vunpack.c.l.b16 %v2240
        %v2568 = vunpack.c.h.b16 %v2240
        %v2569 = vunpack.c.l.b16 %v2241
        %v2570 = vunpack.c.h.b16 %v2241
        %v2571 = vunpack.c.l.b16 %v2242
        %v2572 = vunpack.c.h.b16 %v2242
        %v2573 = vunpack.c.l.b16 %v2243
        %v2574 = vunpack.c.h.b16 %v2243
        %v2575 = vunpack.c.l.b16 %v2244
        %v2576 = vunpack.c.h.b16 %v2244
        %v2577 = vunpack.c.l.b16 %v2245
        %v2578 = vunpack.c.h.b16 %v2245
        %v2579 = vunpack.c.l.b16 %v2246
        %v2580 = vunpack.c.h.b16 %v2246
        %v2581 = vunpack.c.l.b16 %v2247
        %v2582 = vunpack.c.h.b16 %v2247
        %v2583 = vunpack.c.l.b16 %v2248
        %v2584 = vunpack.c.h.b16 %v2248
        %v2585 = vunpack.c.l.b16 %v2249
        %v2586 = vunpack.c.h.b16 %v2249
        %v2587 = vunpack.c.l.b16 %v2250
        %v2588 = vunpack.c.h.b16 %v2250
        %v2589 = vunpack.c.l.b16 %v2251
        %v2590 = vunpack.c.h.b16 %v2251
        %v2591 = vunpack.c.l.b16 %v2252
        %v2592 = vunpack.c.h.b16 %v2252
        %v2593 = vunpack.c.l.b16 %v2253
        %v2594 = vunpack.c.h.b16 %v2253
        %v2595 = vunpack.c.l.b16 %v2254
        %v2596 = vunpack.c.h.b16 %v2254
        %v2597 = vunpack.c.l.b16 %v2255
        %v2598 = vunpack.c.h.b16 %v2255
        %v2599 = vunpack.c.l.b16 %v2256
        %v2600 = vunpack.c.h.b16 %v2256
        %v2601 = vunpack.c.l.b16 %v2257
        %v2602 = vunpack.c.h.b16 %v2257
        %v2603 = vunpack.c.l.b16 %v2258
        %v2604 = vunpack.c.h.b16 %v2258
        %v2605 = vunpack.c.l.b16 %v2259
        %v2606 = vunpack.c.h.b16 %v2259
        %v2607 = vunpack.c.l.b16 %v2260
        %v2608 = vunpack.c.h.b16 %v2260
        %v2609 = vunpack.c.l.b16 %v2261
        %v2610 = vunpack.c.h.b16 %v2261
        %v2611 = vunpack.c.l.b16 %v2262
        %v2612 = vunpack.c.h.b16 %v2262
        %v2613 = vunpack.c.l.b16 %v2263
        %v2614 = vunpack.c.h.b16 %v2263
        %v2615 = vunpack.c.l.b16 %v2264
        %v2616 = vunpack.c.h.b16 %v2264
        %v2617 = vunpack.c.l.b16 %v2265
        %v2618 = vunpack.c.h.b16 %v2265
        %v2619 = vunpack.c.l.b16 %v2266
        %v2620 = vunpack.c.h.b16 %v2266
        %v2621 = vunpack.c.l.b16 %v2267
        %v2622 = vunpack.c.h.b16 %v2267
        %v2623 = vunpack.c.l.b16 %v2268
        %v2624 = vunpack.c.h.b16 %v2268
        %v2625 = vunpack.c.l.b16 %v2269
        %v2626 = vunpack.c.h.b16 %v2269
        %v2627 = vunpack.c.l.b16 %v2270
        %v2628 = vunpack.c.h.b16 %v2270
        %v2629 = vunpack.c.l.b16 %v2271
        %v2630 = vunpack.c.h.b16 %v2271
        %v2631 = vunpack.c.l.b16 %v2272
        %v2632 = vunpack.c.h.b16 %v2272
        %v2633 = vunpack.c.l.b16 %v2273
        %v2634 = vunpack.c.h.b16 %v2273
        %v2635 = vunpack.c.l.b16 %v2274
        %v2636 = vunpack.c.h.b16 %v2274
        %v2637 = vunpack.c.l.b16 %v2275
        %v2638 = vunpack.c.h.b16 %v2275
        %v2639 = vunpack.c.l.b16 %v2276
        %v2640 = vunpack.c.h.b16 %v2276
        %v2641 = vunpack.c.l.b16 %v2277
        %v2642 = vunpack.c.h.b16 %v2277
        %v2643 = vunpack.c.l.b16 %v2278
        %v2644 = vunpack.c.h.b16 %v2278
        %v2645 = vunpack.c.l.b16 %v2279
        %v2646 = vunpack.c.h.b16 %v2279
        %v2647 = vunpack.c.l.b16 %v2280
        %v2648 = vunpack.c.h.b16 %v2280
        %v2649 = vunpack.c.l.b16 %v2281
        %v2650 = vunpack.c.h.b16 %v2281
        %v2651 = vunpack.c.l.b16 %v2282
        %v2652 = vunpack.c.h.b16 %v2282
        %v2653 = vunpack.c.l.b16 %v2283
        %v2654 = vunpack.c.h.b16 %v2283
        %v2655 = vunpack.c.l.b16 %v2284
        %v2656 = vunpack.c.h.b16 %v2284
        %v2657 = vunpack.c.l.b16 %v2285
        %v2658 = vunpack.c.h.b16 %v2285
        %v2659 = vunpack.c.l.b16 %v2286
        %v2660 = vunpack.c.h.b16 %v2286
        %v2661 = vunpack.c.l.b16 %v2287
        %v2662 = vunpack.c.h.b16 %v2287
        %v2663 = vunpack.c.l.b16 %v2288
        %v2664 = vunpack.c.h.b16 %v2288
        %v2665 = vunpack.c.l.b16 %v2289
        %v2666 = vunpack.c.h.b16 %v2289
        %v2667 = vunpack.c.l.b16 %v2290
        %v2668 = vunpack.c.h.b16 %v2290
        %v2669 = vunpack.c.l.b16 %v2291
        %v2670 = vunpack.c.h.b16 %v2291
        %v2671 = vunpack.c.l.b16 %v2292
        %v2672 = vunpack.c.h.b16 %v2292
        %v2673 = vunpack.c.l.b16 %v2293
        %v2674 = vunpack.c.h.b16 %v2293
        %v2675 = vunpack.c.l.b16 %v2294
        %v2676 = vunpack.c.h.b16 %v2294
        %v2677 = vunpack.c.l.b16 %v2295
        %v2678 = vunpack.c.h.b16 %v2295
        %v2679 = vunpack.c.l.b16 %v2296
        %v2680 = vunpack.c.h.b16 %v2296
        %v2681 = vunpack.c.l.b16 %v2297
        %v2682 = vunpack.c.h.b16 %v2297
        %v2683 = vunpack.c.l.b16 %v2298
        %v2684 = vunpack.c.h.b16 %v2298
        %v2685 = vunpack.c.l.b16 %v2299
        %v2686 = vunpack.c.h.b16 %v2299
        %v2687 = vunpack.c.l.b16 %v2300
        %v2688 = vunpack.c.h.b16 %v2300
        %v2689 = vunpack.c.l.b16 %v2301
        %v2690 = vunpack.c.h.b16 %v2301
        %v2691 = vunpack.c.l.b16 %v2302
        %v2692 = vunpack.c.h.b16 %v2302
        %v2693 = vunpack.c.l.b16 %v2303
        %v2694 = vunpack.c.h.b16 %v2303
        %v2695 = vunpack.c.l.b16 %v2304
        %v2696 = vunpack.c.h.b16 %v2304
        %v2697 = vunpack.c.l.b16 %v2305
        %v2698 = vunpack.c.h.b16 %v2305
        %v2699 = vunpack.c.l.b16 %v2306
        %v2700 = vunpack.c.h.b16 %v2306
        %v2701 = vpack.c.b16 %v2449, %v2445
        %v2702 = vpack.c.b16 %v2450, %v2446
        %v2703 = vpack.c.b16 %v2451, %v2447
        %v2704 = vpack.c.b16 %v2452, %v2448
        %v2705 = vpack.c.b16 %v2457, %v2453
        %v2706 = vpack.c.b16 %v2458, %v2454
        %v2707 = vpack.c.b16 %v2459, %v2455
        %v2708 = vpack.c.b16 %v2460, %v2456
        %v2709 = vpack.c.b16 %v2465, %v2461
        %v2710 = vpack.c.b16 %v2466, %v2462
        %v2711 = vpack.c.b16 %v2467, %v2463
        %v2712 = vpack.c.b16 %v2468, %v2464
        %v2713 = vpack.c.b16 %v2473, %v2469
        %v2714 = vpack.c.b16 %v2474, %v2470
        %v2715 = vpack.c.b16 %v2475, %v2471
        %v2716 = vpack.c.b16 %v2476, %v2472
        %v2717 = vpack.c.b16 %v2481, %v2477
        %v2718 = vpack.c.b16 %v2482, %v2478
        %v2719 = vpack.c.b16 %v2483, %v2479
        %v2720 = vpack.c.b16 %v2484, %v2480
        %v2721 = vpack.c.b16 %v2489, %v2485
        %v2722 = vpack.c.b16 %v2490, %v2486
        %v2723 = vpack.c.b16 %v2491, %v2487
        %v2724 = vpack.c.b16 %v2492, %v2488
        %v2725 = vpack.c.b16 %v2497, %v2493
        %v2726 = vpack.c.b16 %v2498, %v2494
        %v2727 = vpack.c.b16 %v2499, %v2495
        %v2728 = vpack.c.b16 %v2500, %v2496
        %v2729 = vpack.c.b16 %v2505, %v2501
        %v2730 = vpack.c.b16 %v2506, %v2502
        %v2731 = vpack.c.b16 %v2507, %v2503
        %v2732 = vpack.c.b16 %v2508, %v2504
        %v2733 = vpack.c.b16 %v2513, %v2509
        %v2734 = vpack.c.b16 %v2514, %v2510
        %v2735 = vpack.c.b16 %v2515, %v2511
        %v2736 = vpack.c.b16 %v2516, %v2512
        %v2737 = vpack.c.b16 %v2521, %v2517
        %v2738 = vpack.c.b16 %v2522, %v2518
        %v2739 = vpack.c.b16 %v2523, %v2519
        %v2740 = vpack.c.b16 %v2524, %v2520
        %v2741 = vpack.c.b16 %v2529, %v2525
        %v2742 = vpack.c.b16 %v2530, %v2526
        %v2743 = vpack.c.b16 %v2531, %v2527
        %v2744 = vpack.c.b16 %v2532, %v2528
        %v2745 = vpack.c.b16 %v2537, %v2533
        %v2746 = vpack.c.b16 %v2538, %v2534
        %v2747 = vpack.c.b16 %v2539, %v2535
        %v2748 = vpack.c.b16 %v2540, %v2536
        %v2749 = vpack.c.b16 %v2545, %v2541
        %v2750 = vpack.c.b16 %v2546, %v2542
        %v2751 = vpack.c.b16 %v2547, %v2543
        %v2752 = vpack.c.b16 %v2548, %v2544
        %v2753 = vpack.c.b16 %v2553, %v2549
        %v2754 = vpack.c.b16 %v2554, %v2550
        %v2755 = vpack.c.b16 %v2555, %v2551
        %v2756 = vpack.c.b16 %v2556, %v2552
        %v2757 = vpack.c.b16 %v2561, %v2557
        %v2758 = vpack.c.b16 %v2562, %v2558
        %v2759 = vpack.c.b16 %v2563, %v2559
        %v2760 = vpack.c.b16 %v2564, %v2560
        %v2761 = vpack.c.b16 %v2569, %v2565
        %v2762 = vpack.c.b16 %v2570, %v2566
        %v2763 = vpack.c.b16 %v2571, %v2567
        %v2764 = vpack.c.b16 %v2572, %v2568
        %v2765 = vpack.c.b16 %v2577, %v2573
        %v2766 = vpack.c.b16 %v2578, %v2574
        %v2767 = vpack.c.b16 %v2579, %v2575
        %v2768 = vpack.c.b16 %v2580, %v2576
        %v2769 = vpack.c.b16 %v2585, %v2581
        %v2770 = vpack.c.b16 %v2586, %v2582
        %v2771 = vpack.c.b16 %v2587, %v2583
        %v2772 = vpack.c.b16 %v2588, %v2584
        %v2773 = vpack.c.b16 %v2593, %v2589
        %v2774 = vpack.c.b16 %v2594, %v2590
        %v2775 = vpack.c.b16 %v2595, %v2591
        %v2776 = vpack.c.b16 %v2596, %v2592
        %v2777 = vpack.c.b16 %v2601, %v2597
        %v2778 = vpack.c.b16 %v2602, %v2598
        %v2779 = vpack.c.b16 %v2603, %v2599
        %v2780 = vpack.c.b16 %v2604, %v2600
        %v2781 = vpack.c.b16 %v2609, %v2605
        %v2782 = vpack.c.b16 %v2610, %v2606
        %v2783 = vpack.c.b16 %v2611, %v2607
        %v2784 = vpack.c.b16 %v2612, %v2608
        %v2785 = vpack.c.b16 %v2617, %v2613
        %v2786 = vpack.c.b16 %v2618, %v2614
        %v2787 = vpack.c.b16 %v2619, %v2615
        %v2788 = vpack.c.b16 %v2620, %v2616
        %v2789 = vpack.c.b16 %v2625, %v2621
        %v2790 = vpack.c.b16 %v2626, %v2622
        %v2791 = vpack.c.b16 %v2627, %v2623
        %v2792 = vpack.c.b16 %v2628, %v2624
        %v2793 = vpack.c.b16 %v2633, %v2629
        %v2794 = vpack.c.b16 %v2634, %v2630
        %v2795 = vpack.c.b16 %v2635, %v2631
        %v2796 = vpack.c.b16 %v2636, %v2632
        %v2797 = vpack.c.b16 %v2641, %v2637
        %v2798 = vpack.c.b16 %v2642, %v2638
        %v2799 = vpack.c.b16 %v2643, %v2639
        %v2800 = vpack.c.b16 %v2644, %v2640
        %v2801 = vpack.c.b16 %v2649, %v2645
        %v2802 = vpack.c.b16 %v2650, %v2646
        %v2803 = vpack.c.b16 %v2651, %v2647
        %v2804 = vpack.c.b16 %v2652, %v2648
        %v2805 = vpack.c.b16 %v2657, %v2653
        %v2806 = vpack.c.b16 %v2658, %v2654
        %v2807 = vpack.c.b16 %v2659, %v2655
        %v2808 = vpack.c.b16 %v2660, %v2656
        %v2809 = vpack.c.b16 %v2665, %v2661
        %v2810 = vpack.c.b16 %v2666, %v2662
        %v2811 = vpack.c.b16 %v2667, %v2663
        %v2812 = vpack.c.b16 %v2668, %v2664
        %v2813 = vpack.c.b16 %v2673, %v2669
        %v2814 = vpack.c.b16 %v2674, %v2670
        %v2815 = vpack.c.b16 %v2675, %v2671
        %v2816 = vpack.c.b16 %v2676, %v2672
        %v2817 = vpack.c.b16 %v2681, %v2677
        %v2818 = vpack.c.b16 %v2682, %v2678
        %v2819 = vpack.c.b16 %v2683, %v2679
        %v2820 = vpack.c.b16 %v2684, %v2680
        %v2821 = vpack.c.b16 %v2689, %v2685
        %v2822 = vpack.c.b16 %v2690, %v2686
        %v2823 = vpack.c.b16 %v2691, %v2687
        %v2824 = vpack.c.b16 %v2692, %v2688
        %v2825 = vpack.c.b16 %v2697, %v2693
        %v2826 = vpack.c.b16 %v2698, %v2694
        %v2827 = vpack.c.b16 %v2699, %v2695
        %v2828 = vpack.c.b16 %v2700, %v2696
        %2957 = vmatpush.bf16.msra.mxu0 %v2729
        %2958 = vmatpush.bf16.msra.mxu0 %v2725
        %2959 = vmatpush.bf16.msra.mxu0 %v2721
        %2960 = vmatpush.bf16.msra.mxu0 %v2717
        %2961 = vmatpush.bf16.msra.mxu0 %v2713
        %2962 = vmatpush.bf16.msra.mxu0 %v2709
        %2963 = vmatpush.bf16.msra.mxu0 %v2705
        %2964 = vmatpush.bf16.msra.mxu0 %v2701
        %2965 = vmatmul.bf16.gmra.mxu0 %v2175
        %v2966 = vpop.f32.mrf.mxu0
        %v2967 = vadd.f32 %v2309, %v2966
        %v2968 = vpop.f32.mrf.mxu0
        %2969 = vdwg.mxu0
        %2970 = vmatpush.bf16.msra.mxu0 %v2761
        %2971 = vmatpush.bf16.msra.mxu0 %v2757
        %2972 = vmatpush.bf16.msra.mxu0 %v2753
        %2973 = vmatpush.bf16.msra.mxu0 %v2749
        %2974 = vmatpush.bf16.msra.mxu0 %v2745
        %2975 = vmatpush.bf16.msra.mxu0 %v2741
        %2976 = vmatpush.bf16.msra.mxu0 %v2737
        %2977 = vmatpush.bf16.msra.mxu0 %v2733
        %2978 = vmatmul.bf16.gmra.mxu0 %v2176
        %v2979 = vpop.f32.mrf.mxu0
        %v2980 = vadd.f32 %v2967, %v2979
        %v2981 = vpop.f32.mrf.mxu0
        %2982 = vdwg.mxu0
        %2983 = vmatpush.bf16.msra.mxu0 %v2793
        %2984 = vmatpush.bf16.msra.mxu0 %v2789
        %2985 = vmatpush.bf16.msra.mxu0 %v2785
        %2986 = vmatpush.bf16.msra.mxu0 %v2781
        %2987 = vmatpush.bf16.msra.mxu0 %v2777
        %2988 = vmatpush.bf16.msra.mxu0 %v2773
        %2989 = vmatpush.bf16.msra.mxu0 %v2769
        %2990 = vmatpush.bf16.msra.mxu0 %v2765
        %2991 = vmatmul.bf16.gmra.mxu0 %v2177
        %v2992 = vpop.f32.mrf.mxu0
        %v2993 = vadd.f32 %v2980, %v2992
        %v2994 = vpop.f32.mrf.mxu0
        %2995 = vdwg.mxu0
        %2996 = vmatpush.bf16.msra.mxu0 %v2825
        %2997 = vmatpush.bf16.msra.mxu0 %v2821
        %2998 = vmatpush.bf16.msra.mxu0 %v2817
        %2999 = vmatpush.bf16.msra.mxu0 %v2813
        %3000 = vmatpush.bf16.msra.mxu0 %v2809
        %3001 = vmatpush.bf16.msra.mxu0 %v2805
        %3002 = vmatpush.bf16.msra.mxu0 %v2801
        %3003 = vmatpush.bf16.msra.mxu0 %v2797
        %3004 = vmatmul.bf16.gmra.mxu0 %v2178
        %v3005 = vpop.f32.mrf.mxu0
        %v3006 = vadd.f32 %v2993, %v3005
        %v3007 = vpop.f32.mrf.mxu0
        %3008 = vdwg.mxu0
        %3009 = vmatpush.bf16.msra.mxu0 %v2730
        %3010 = vmatpush.bf16.msra.mxu0 %v2726
        %3011 = vmatpush.bf16.msra.mxu0 %v2722
        %3012 = vmatpush.bf16.msra.mxu0 %v2718
        %3013 = vmatpush.bf16.msra.mxu0 %v2714
        %3014 = vmatpush.bf16.msra.mxu0 %v2710
        %3015 = vmatpush.bf16.msra.mxu0 %v2706
        %3016 = vmatpush.bf16.msra.mxu0 %v2702
        %3017 = vmatmul.bf16.gmra.mxu0 %v2175
        %v3018 = vpop.f32.mrf.mxu0
        %v3019 = vadd.f32 %v2310, %v3018
        %v3020 = vpop.f32.mrf.mxu0
        %3021 = vdwg.mxu0
        %3022 = vmatpush.bf16.msra.mxu0 %v2762
        %3023 = vmatpush.bf16.msra.mxu0 %v2758
        %3024 = vmatpush.bf16.msra.mxu0 %v2754
        %3025 = vmatpush.bf16.msra.mxu0 %v2750
        %3026 = vmatpush.bf16.msra.mxu0 %v2746
        %3027 = vmatpush.bf16.msra.mxu0 %v2742
        %3028 = vmatpush.bf16.msra.mxu0 %v2738
        %3029 = vmatpush.bf16.msra.mxu0 %v2734
        %3030 = vmatmul.bf16.gmra.mxu0 %v2176
        %v3031 = vpop.f32.mrf.mxu0
        %v3032 = vadd.f32 %v3019, %v3031
        %v3033 = vpop.f32.mrf.mxu0
        %3034 = vdwg.mxu0
        %3035 = vmatpush.bf16.msra.mxu0 %v2794
        %3036 = vmatpush.bf16.msra.mxu0 %v2790
        %3037 = vmatpush.bf16.msra.mxu0 %v2786
        %3038 = vmatpush.bf16.msra.mxu0 %v2782
        %3039 = vmatpush.bf16.msra.mxu0 %v2778
        %3040 = vmatpush.bf16.msra.mxu0 %v2774
        %3041 = vmatpush.bf16.msra.mxu0 %v2770
        %3042 = vmatpush.bf16.msra.mxu0 %v2766
        %3043 = vmatmul.bf16.gmra.mxu0 %v2177
        %v3044 = vpop.f32.mrf.mxu0
        %v3045 = vadd.f32 %v3032, %v3044
        %v3046 = vpop.f32.mrf.mxu0
        %3047 = vdwg.mxu0
        %3048 = vmatpush.bf16.msra.mxu0 %v2826
        %3049 = vmatpush.bf16.msra.mxu0 %v2822
        %3050 = vmatpush.bf16.msra.mxu0 %v2818
        %3051 = vmatpush.bf16.msra.mxu0 %v2814
        %3052 = vmatpush.bf16.msra.mxu0 %v2810
        %3053 = vmatpush.bf16.msra.mxu0 %v2806
        %3054 = vmatpush.bf16.msra.mxu0 %v2802
        %3055 = vmatpush.bf16.msra.mxu0 %v2798
        %3056 = vmatmul.bf16.gmra.mxu0 %v2178
        %v3057 = vpop.f32.mrf.mxu0
        %v3058 = vadd.f32 %v3045, %v3057
        %v3059 = vpop.f32.mrf.mxu0
        %3060 = vdwg.mxu0
        %3061 = vmatpush.bf16.msra.mxu0 %v2731
        %3062 = vmatpush.bf16.msra.mxu0 %v2727
        %3063 = vmatpush.bf16.msra.mxu0 %v2723
        %3064 = vmatpush.bf16.msra.mxu0 %v2719
        %3065 = vmatpush.bf16.msra.mxu0 %v2715
        %3066 = vmatpush.bf16.msra.mxu0 %v2711
        %3067 = vmatpush.bf16.msra.mxu0 %v2707
        %3068 = vmatpush.bf16.msra.mxu0 %v2703
        %3069 = vmatmul.bf16.gmra.mxu0 %v2175
        %v3070 = vpop.f32.mrf.mxu0
        %v3071 = vadd.f32 %v2311, %v3070
        %v3072 = vpop.f32.mrf.mxu0
        %3073 = vdwg.mxu0
        %3074 = vmatpush.bf16.msra.mxu0 %v2763
        %3075 = vmatpush.bf16.msra.mxu0 %v2759
        %3076 = vmatpush.bf16.msra.mxu0 %v2755
        %3077 = vmatpush.bf16.msra.mxu0 %v2751
        %3078 = vmatpush.bf16.msra.mxu0 %v2747
        %3079 = vmatpush.bf16.msra.mxu0 %v2743
        %3080 = vmatpush.bf16.msra.mxu0 %v2739
        %3081 = vmatpush.bf16.msra.mxu0 %v2735
        %3082 = vmatmul.bf16.gmra.mxu0 %v2176
        %v3083 = vpop.f32.mrf.mxu0
        %v3084 = vadd.f32 %v3071, %v3083
        %v3085 = vpop.f32.mrf.mxu0
        %3086 = vdwg.mxu0
        %3087 = vmatpush.bf16.msra.mxu0 %v2795
        %3088 = vmatpush.bf16.msra.mxu0 %v2791
        %3089 = vmatpush.bf16.msra.mxu0 %v2787
        %3090 = vmatpush.bf16.msra.mxu0 %v2783
        %3091 = vmatpush.bf16.msra.mxu0 %v2779
        %3092 = vmatpush.bf16.msra.mxu0 %v2775
        %3093 = vmatpush.bf16.msra.mxu0 %v2771
        %3094 = vmatpush.bf16.msra.mxu0 %v2767
        %3095 = vmatmul.bf16.gmra.mxu0 %v2177
        %v3096 = vpop.f32.mrf.mxu0
        %v3097 = vadd.f32 %v3084, %v3096
        %v3098 = vpop.f32.mrf.mxu0
        %3099 = vdwg.mxu0
        %3100 = vmatpush.bf16.msra.mxu0 %v2827
        %3101 = vmatpush.bf16.msra.mxu0 %v2823
        %3102 = vmatpush.bf16.msra.mxu0 %v2819
        %3103 = vmatpush.bf16.msra.mxu0 %v2815
        %3104 = vmatpush.bf16.msra.mxu0 %v2811
        %3105 = vmatpush.bf16.msra.mxu0 %v2807
        %3106 = vmatpush.bf16.msra.mxu0 %v2803
        %3107 = vmatpush.bf16.msra.mxu0 %v2799
        %3108 = vmatmul.bf16.gmra.mxu0 %v2178
        %v3109 = vpop.f32.mrf.mxu0
        %v3110 = vadd.f32 %v3097, %v3109
        %v3111 = vpop.f32.mrf.mxu0
        %3112 = vdwg.mxu0
        %3113 = vmatpush.bf16.msra.mxu0 %v2732
        %3114 = vmatpush.bf16.msra.mxu0 %v2728
        %3115 = vmatpush.bf16.msra.mxu0 %v2724
        %3116 = vmatpush.bf16.msra.mxu0 %v2720
        %3117 = vmatpush.bf16.msra.mxu0 %v2716
        %3118 = vmatpush.bf16.msra.mxu0 %v2712
        %3119 = vmatpush.bf16.msra.mxu0 %v2708
        %3120 = vmatpush.bf16.msra.mxu0 %v2704
        %3121 = vmatmul.bf16.gmra.mxu0 %v2175
        %v3122 = vpop.f32.mrf.mxu0
        %v3123 = vadd.f32 %v2312, %v3122
        %v3124 = vpop.f32.mrf.mxu0
        %3125 = vdwg.mxu0
        %3126 = vmatpush.bf16.msra.mxu0 %v2764
        %3127 = vmatpush.bf16.msra.mxu0 %v2760
        %3128 = vmatpush.bf16.msra.mxu0 %v2756
        %3129 = vmatpush.bf16.msra.mxu0 %v2752
        %3130 = vmatpush.bf16.msra.mxu0 %v2748
        %3131 = vmatpush.bf16.msra.mxu0 %v2744
        %3132 = vmatpush.bf16.msra.mxu0 %v2740
        %3133 = vmatpush.bf16.msra.mxu0 %v2736
        %3134 = vmatmul.bf16.gmra.mxu0 %v2176
        %v3135 = vpop.f32.mrf.mxu0
        %v3136 = vadd.f32 %v3123, %v3135
        %v3137 = vpop.f32.mrf.mxu0
        %3138 = vdwg.mxu0
        %3139 = vmatpush.bf16.msra.mxu0 %v2796
        %3140 = vmatpush.bf16.msra.mxu0 %v2792
        %3141 = vmatpush.bf16.msra.mxu0 %v2788
        %3142 = vmatpush.bf16.msra.mxu0 %v2784
        %3143 = vmatpush.bf16.msra.mxu0 %v2780
        %3144 = vmatpush.bf16.msra.mxu0 %v2776
        %3145 = vmatpush.bf16.msra.mxu0 %v2772
        %3146 = vmatpush.bf16.msra.mxu0 %v2768
        %3147 = vmatmul.bf16.gmra.mxu0 %v2177
        %v3148 = vpop.f32.mrf.mxu0
        %v3149 = vadd.f32 %v3136, %v3148
        %v3150 = vpop.f32.mrf.mxu0
        %3151 = vdwg.mxu0
        %3152 = vmatpush.bf16.msra.mxu0 %v2828
        %3153 = vmatpush.bf16.msra.mxu0 %v2824
        %3154 = vmatpush.bf16.msra.mxu0 %v2820
        %3155 = vmatpush.bf16.msra.mxu0 %v2816
        %3156 = vmatpush.bf16.msra.mxu0 %v2812
        %3157 = vmatpush.bf16.msra.mxu0 %v2808
        %3158 = vmatpush.bf16.msra.mxu0 %v2804
        %3159 = vmatpush.bf16.msra.mxu0 %v2800
        %3160 = vmatmul.bf16.gmra.mxu0 %v2178
        %v3161 = vpop.f32.mrf.mxu0
        %v3162 = vadd.f32 %v3149, %v3161
        %v3163 = vpop.f32.mrf.mxu0
        %3164 = vdwg.mxu0
        %vm3165 = vcmp.gt.f32.partialorder %v3006, 0.0
        %vm3166 = vcmp.gt.f32.partialorder %v3058, 0.0
        %vm3167 = vcmp.gt.f32.partialorder %v3110, 0.0
        %vm3168 = vcmp.gt.f32.partialorder %v3162, 0.0
        %v3169 = vmul.f32 %v3006, 1.442695
        %v3170 = vpow.pop %v3169
        %v3171 = vmul.f32 %v3058, 1.442695
        %v3172 = vpow.pop %v3171
        %v3173 = vmul.f32 %v3110, 1.442695
        %v3174 = vpow.pop %v3173
        %v3175 = vmul.f32 %v3162, 1.442695
        %v3176 = vpow.pop %v3175
        %v3177 = vsub.f32 %v3170, 1.0
        %v3178 = vsub.f32 %v3172, 1.0
        %v3179 = vsub.f32 %v3174, 1.0
        %v3180 = vsub.f32 %v3176, 1.0
        %v3181 = vmul.f32 %v3177, 1.6732632
        %v3182 = vmul.f32 %v3178, 1.6732632
        %v3183 = vmul.f32 %v3179, 1.6732632
        %v3184 = vmul.f32 %v3180, 1.6732632
        %v3185 = vsel %vm3165, %v3006, %v3181
        %v3186 = vsel %vm3166, %v3058, %v3182
        %v3187 = vsel %vm3167, %v3110, %v3183
        %v3188 = vsel %vm3168, %v3162, %v3184
        %v3189 = vmul.f32 %v3185, 1.050701
        %v3190 = vmul.f32 %v3186, 1.050701
        %v3191 = vmul.f32 %v3187, 1.050701
        %v3192 = vmul.f32 %v3188, 1.050701
        %v3193 = vpack.c.bf16 %v3189, %v3189
        %v3194 = vpack.c.bf16 %v3190, %v3190
        %v3195 = vpack.c.bf16 %v3191, %v3191
        %v3196 = vpack.c.bf16 %v3192, %v3192
        %v3197 = vld [vmem:[%s345] sm:$0xff]
        %v3198 = vld [vmem:[%s345 + $0x8] sm:$0xff]
        %v3199 = vld [vmem:[%s345 + $0x10] sm:$0xff]
        %v3200 = vld [vmem:[%s345 + $0x18] sm:$0xff]
        %v3201 = vld [vmem:[%s345 + $0x20] sm:$0xff]
        %v3202 = vld [vmem:[%s345 + $0x28] sm:$0xff]
        %v3203 = vld [vmem:[%s345 + $0x30] sm:$0xff]
        %v3204 = vld [vmem:[%s345 + $0x38] sm:$0xff]
        %v3205 = vld [vmem:[%s345 + $0x40] sm:$0xf]
        %v3206 = vld [vmem:[%s345 + $0x44] sm:$0xff]
        %v3207 = vld [vmem:[%s345 + $0x4c] sm:$0xff]
        %v3208 = vld [vmem:[%s345 + $0x54] sm:$0xff]
        %v3209 = vld [vmem:[%s345 + $0x5c] sm:$0xff]
        %v3210 = vld [vmem:[%s345 + $0x64] sm:$0xff]
        %v3211 = vld [vmem:[%s345 + $0x6c] sm:$0xff]
        %v3212 = vld [vmem:[%s345 + $0x74] sm:$0xff]
        %v3213 = vld [vmem:[%s345 + $0x7c] sm:$0xff]
        %v3214 = vld [vmem:[%s345 + $0x84] sm:$0xf]
        %v3215 = vld [vmem:[%s345 + $0x88] sm:$0xff]
        %v3216 = vld [vmem:[%s345 + $0x90] sm:$0xff]
        %v3217 = vld [vmem:[%s345 + $0x98] sm:$0xff]
        %v3218 = vld [vmem:[%s345 + $0xa0] sm:$0xff]
        %v3219 = vld [vmem:[%s345 + $0xa8] sm:$0xff]
        %v3220 = vld [vmem:[%s345 + $0xb0] sm:$0xff]
        %v3221 = vld [vmem:[%s345 + $0xb8] sm:$0xff]
        %v3222 = vld [vmem:[%s345 + $0xc0] sm:$0xff]
        %v3223 = vld [vmem:[%s345 + $0xc8] sm:$0xf]
        %v3224 = vld [vmem:[%s345 + $0xcc] sm:$0xff]
        %v3225 = vld [vmem:[%s345 + $0xd4] sm:$0xff]
        %v3226 = vld [vmem:[%s345 + $0xdc] sm:$0xff]
        %v3227 = vld [vmem:[%s345 + $0xe4] sm:$0xff]
        %v3228 = vld [vmem:[%s345 + $0xec] sm:$0xff]
        %v3229 = vld [vmem:[%s345 + $0xf4] sm:$0xff]
        %v3230 = vld [vmem:[%s345 + $0xfc] sm:$0xff]
        %v3231 = vld [vmem:[%s345 + $0x104] sm:$0xff]
        %v3232 = vld [vmem:[%s345 + $0x10c] sm:$0xf]
        %v3233 = vld [vmem:[%s345 + $0x110] sm:$0xff]
        %v3234 = vld [vmem:[%s345 + $0x118] sm:$0xff]
        %v3235 = vld [vmem:[%s345 + $0x120] sm:$0xff]
        %v3236 = vld [vmem:[%s345 + $0x128] sm:$0xff]
        %v3237 = vld [vmem:[%s345 + $0x130] sm:$0xff]
        %v3238 = vld [vmem:[%s345 + $0x138] sm:$0xff]
        %v3239 = vld [vmem:[%s345 + $0x140] sm:$0xff]
        %v3240 = vld [vmem:[%s345 + $0x148] sm:$0xff]
        %v3241 = vld [vmem:[%s345 + $0x150] sm:$0xf]
        %v3242 = vld [vmem:[%s345 + $0x154] sm:$0xff]
        %v3243 = vld [vmem:[%s345 + $0x15c] sm:$0xff]
        %v3244 = vld [vmem:[%s345 + $0x164] sm:$0xff]
        %v3245 = vld [vmem:[%s345 + $0x16c] sm:$0xff]
        %v3246 = vld [vmem:[%s345 + $0x174] sm:$0xff]
        %v3247 = vld [vmem:[%s345 + $0x17c] sm:$0xff]
        %v3248 = vld [vmem:[%s345 + $0x184] sm:$0xff]
        %v3249 = vld [vmem:[%s345 + $0x18c] sm:$0xff]
        %v3250 = vld [vmem:[%s345 + $0x194] sm:$0xf]
        %v3251 = vld [vmem:[%s345 + $0x198] sm:$0xff]
        %v3252 = vld [vmem:[%s345 + $0x1a0] sm:$0xff]
        %v3253 = vld [vmem:[%s345 + $0x1a8] sm:$0xff]
        %v3254 = vld [vmem:[%s345 + $0x1b0] sm:$0xff]
        %v3255 = vld [vmem:[%s345 + $0x1b8] sm:$0xff]
        %v3256 = vld [vmem:[%s345 + $0x1c0] sm:$0xff]
        %v3257 = vld [vmem:[%s345 + $0x1c8] sm:$0xff]
        %v3258 = vld [vmem:[%s345 + $0x1d0] sm:$0xff]
        %v3259 = vld [vmem:[%s345 + $0x1d8] sm:$0xf]
        %v3260 = vld [vmem:[%s345 + $0x1dc] sm:$0xff]
        %v3261 = vld [vmem:[%s345 + $0x1e4] sm:$0xff]
        %v3262 = vld [vmem:[%s345 + $0x1ec] sm:$0xff]
        %v3263 = vld [vmem:[%s345 + $0x1f4] sm:$0xff]
        %v3264 = vld [vmem:[%s345 + $0x1fc] sm:$0xff]
        %v3265 = vld [vmem:[%s345 + $0x204] sm:$0xff]
        %v3266 = vld [vmem:[%s345 + $0x20c] sm:$0xff]
        %v3267 = vld [vmem:[%s345 + $0x214] sm:$0xff]
        %v3268 = vld [vmem:[%s345 + $0x21c] sm:$0xf]
        %v3269 = vld [vmem:[%s345 + $0x220] sm:$0xff]
        %v3270 = vld [vmem:[%s345 + $0x228] sm:$0xff]
        %v3271 = vld [vmem:[%s345 + $0x230] sm:$0xff]
        %v3272 = vld [vmem:[%s345 + $0x238] sm:$0xff]
        %v3273 = vld [vmem:[%s345 + $0x240] sm:$0xff]
        %v3274 = vld [vmem:[%s345 + $0x248] sm:$0xff]
        %v3275 = vld [vmem:[%s345 + $0x250] sm:$0xff]
        %v3276 = vld [vmem:[%s345 + $0x258] sm:$0xff]
        %v3277 = vld [vmem:[%s345 + $0x260] sm:$0xf]
        %v3278 = vld [vmem:[%s345 + $0x264] sm:$0xff]
        %v3279 = vld [vmem:[%s345 + $0x26c] sm:$0xff]
        %v3280 = vld [vmem:[%s345 + $0x274] sm:$0xff]
        %v3281 = vld [vmem:[%s345 + $0x27c] sm:$0xff]
        %v3282 = vld [vmem:[%s345 + $0x284] sm:$0xff]
        %v3283 = vld [vmem:[%s345 + $0x28c] sm:$0xff]
        %v3284 = vld [vmem:[%s345 + $0x294] sm:$0xff]
        %v3285 = vld [vmem:[%s345 + $0x29c] sm:$0xff]
        %v3286 = vld [vmem:[%s345 + $0x2a4] sm:$0xf]
        %v3287 = vld [vmem:[%s345 + $0x2a8] sm:$0xff]
        %v3288 = vld [vmem:[%s345 + $0x2b0] sm:$0xff]
        %v3289 = vld [vmem:[%s345 + $0x2b8] sm:$0xff]
        %v3290 = vld [vmem:[%s345 + $0x2c0] sm:$0xff]
        %v3291 = vld [vmem:[%s345 + $0x2c8] sm:$0xff]
        %v3292 = vld [vmem:[%s345 + $0x2d0] sm:$0xff]
        %v3293 = vld [vmem:[%s345 + $0x2d8] sm:$0xff]
        %v3294 = vld [vmem:[%s345 + $0x2e0] sm:$0xff]
        %v3295 = vld [vmem:[%s345 + $0x2e8] sm:$0xf]
        %v3296 = vld [vmem:[%s345 + $0x2ec] sm:$0xff]
        %v3297 = vld [vmem:[%s345 + $0x2f4] sm:$0xff]
        %v3298 = vld [vmem:[%s345 + $0x2fc] sm:$0xff]
        %v3299 = vld [vmem:[%s345 + $0x304] sm:$0xff]
        %v3300 = vld [vmem:[%s345 + $0x30c] sm:$0xff]
        %v3301 = vld [vmem:[%s345 + $0x314] sm:$0xff]
        %v3302 = vld [vmem:[%s345 + $0x31c] sm:$0xff]
        %v3303 = vld [vmem:[%s345 + $0x324] sm:$0xff]
        %v3304 = vld [vmem:[%s345 + $0x32c] sm:$0xf]
        %v3305 = vld [vmem:[%s345 + $0x330] sm:$0xff]
        %v3306 = vld [vmem:[%s345 + $0x338] sm:$0xff]
        %v3307 = vld [vmem:[%s345 + $0x340] sm:$0xff]
        %v3308 = vld [vmem:[%s345 + $0x348] sm:$0xff]
        %v3309 = vld [vmem:[%s345 + $0x350] sm:$0xff]
        %v3310 = vld [vmem:[%s345 + $0x358] sm:$0xff]
        %v3311 = vld [vmem:[%s345 + $0x360] sm:$0xff]
        %v3312 = vld [vmem:[%s345 + $0x368] sm:$0xff]
        %v3313 = vld [vmem:[%s345 + $0x370] sm:$0xf]
        %v3314 = vld [vmem:[%s345 + $0x374] sm:$0xff]
        %v3315 = vld [vmem:[%s345 + $0x37c] sm:$0xff]
        %v3316 = vld [vmem:[%s345 + $0x384] sm:$0xff]
        %v3317 = vld [vmem:[%s345 + $0x38c] sm:$0xff]
        %v3318 = vld [vmem:[%s345 + $0x394] sm:$0xff]
        %v3319 = vld [vmem:[%s345 + $0x39c] sm:$0xff]
        %v3320 = vld [vmem:[%s345 + $0x3a4] sm:$0xff]
        %v3321 = vld [vmem:[%s345 + $0x3ac] sm:$0xff]
        %v3322 = vld [vmem:[%s345 + $0x3b4] sm:$0xf]
        %v3323 = vld [vmem:[%s345 + $0x3b8] sm:$0xff]
        %v3324 = vld [vmem:[%s345 + $0x3c0] sm:$0xff]
        %v3325 = vld [vmem:[%s345 + $0x3c8] sm:$0xff]
        %v3326 = vld [vmem:[%s345 + $0x3d0] sm:$0xff]
        %v3327 = vld [vmem:[%s345 + $0x3d8] sm:$0xff]
        %v3328 = vld [vmem:[%s345 + $0x3e0] sm:$0xff]
        %v3329 = vld [vmem:[%s345 + $0x3e8] sm:$0xff]
        %v3330 = vld [vmem:[%s345 + $0x3f0] sm:$0xff]
        %v3331 = vld [vmem:[%s345 + $0x3f8] sm:$0xf]
        %v3332 = vld [vmem:[%s345 + $0x3fc] sm:$0xff]
        %v3333 = vld [vmem:[%s345 + $0x404] sm:$0xff]
        %v3334 = vld [vmem:[%s345 + $0x40c] sm:$0xff]
        %v3335 = vld [vmem:[%s345 + $0x414] sm:$0xff]
        %v3336 = vld [vmem:[%s345 + $0x41c] sm:$0xff]
        %v3337 = vld [vmem:[%s345 + $0x424] sm:$0xff]
        %v3338 = vld [vmem:[%s345 + $0x42c] sm:$0xff]
        %v3339 = vld [vmem:[%s345 + $0x434] sm:$0xff]
        %v3340 = vld [vmem:[%s345 + $0x43c] sm:$0xf]
        %v3341 = vld [vmem:[%s345 + $0x440] sm:$0xff]
        %v3342 = vld [vmem:[%s345 + $0x448] sm:$0xff]
        %v3343 = vld [vmem:[%s345 + $0x450] sm:$0xff]
        %v3344 = vld [vmem:[%s345 + $0x458] sm:$0xff]
        %v3345 = vld [vmem:[%s345 + $0x460] sm:$0xff]
        %v3346 = vld [vmem:[%s345 + $0x468] sm:$0xff]
        %v3347 = vld [vmem:[%s345 + $0x470] sm:$0xff]
        %v3348 = vld [vmem:[%s345 + $0x478] sm:$0xff]
        %v3349 = vld [vmem:[%s345 + $0x480] sm:$0xf]
        %v3350 = vld [vmem:[%s345 + $0x484] sm:$0xff]
        %v3351 = vld [vmem:[%s345 + $0x48c] sm:$0xff]
        %v3352 = vld [vmem:[%s345 + $0x494] sm:$0xff]
        %v3353 = vld [vmem:[%s345 + $0x49c] sm:$0xff]
        %v3354 = vld [vmem:[%s345 + $0x4a4] sm:$0xff]
        %v3355 = vld [vmem:[%s345 + $0x4ac] sm:$0xff]
        %v3356 = vld [vmem:[%s345 + $0x4b4] sm:$0xff]
        %v3357 = vld [vmem:[%s345 + $0x4bc] sm:$0xff]
        %v3358 = vld [vmem:[%s345 + $0x4c4] sm:$0xf]
        %v3359 = vld [vmem:[%s345 + $0x4c8] sm:$0xff]
        %v3360 = vld [vmem:[%s345 + $0x4d0] sm:$0xff]
        %v3361 = vld [vmem:[%s345 + $0x4d8] sm:$0xff]
        %v3362 = vld [vmem:[%s345 + $0x4e0] sm:$0xff]
        %v3363 = vld [vmem:[%s345 + $0x4e8] sm:$0xff]
        %v3364 = vld [vmem:[%s345 + $0x4f0] sm:$0xff]
        %v3365 = vld [vmem:[%s345 + $0x4f8] sm:$0xff]
        %v3366 = vld [vmem:[%s345 + $0x500] sm:$0xff]
        %v3367 = vld [vmem:[%s345 + $0x508] sm:$0xf]
        %v3368 = vld [vmem:[%s345 + $0x50c] sm:$0xff]
        %v3369 = vld [vmem:[%s345 + $0x514] sm:$0xff]
        %v3370 = vld [vmem:[%s345 + $0x51c] sm:$0xff]
        %v3371 = vld [vmem:[%s345 + $0x524] sm:$0xff]
        %v3372 = vld [vmem:[%s345 + $0x52c] sm:$0xff]
        %v3373 = vld [vmem:[%s345 + $0x534] sm:$0xff]
        %v3374 = vld [vmem:[%s345 + $0x53c] sm:$0xff]
        %v3375 = vld [vmem:[%s345 + $0x544] sm:$0xff]
        %v3376 = vld [vmem:[%s345 + $0x54c] sm:$0xf]
        %v3377 = vld [vmem:[%s345 + $0x550] sm:$0xff]
        %v3378 = vld [vmem:[%s345 + $0x558] sm:$0xff]
        %v3379 = vld [vmem:[%s345 + $0x560] sm:$0xff]
        %v3380 = vld [vmem:[%s345 + $0x568] sm:$0xff]
        %v3381 = vld [vmem:[%s345 + $0x570] sm:$0xff]
        %v3382 = vld [vmem:[%s345 + $0x578] sm:$0xff]
        %v3383 = vld [vmem:[%s345 + $0x580] sm:$0xff]
        %v3384 = vld [vmem:[%s345 + $0x588] sm:$0xff]
        %v3385 = vld [vmem:[%s345 + $0x590] sm:$0xf]
        %v3386 = vld [vmem:[%s345 + $0x594] sm:$0xff]
        %v3387 = vld [vmem:[%s345 + $0x59c] sm:$0xff]
        %v3388 = vld [vmem:[%s345 + $0x5a4] sm:$0xff]
        %v3389 = vld [vmem:[%s345 + $0x5ac] sm:$0xff]
        %v3390 = vld [vmem:[%s345 + $0x5b4] sm:$0xff]
        %v3391 = vld [vmem:[%s345 + $0x5bc] sm:$0xff]
        %v3392 = vld [vmem:[%s345 + $0x5c4] sm:$0xff]
        %v3393 = vld [vmem:[%s345 + $0x5cc] sm:$0xff]
        %v3394 = vld [vmem:[%s345 + $0x5d4] sm:$0xf]
        %v3395 = vld [vmem:[%s345 + $0x5d8] sm:$0xff]
        %v3396 = vld [vmem:[%s345 + $0x5e0] sm:$0xff]
        %v3397 = vld [vmem:[%s345 + $0x5e8] sm:$0xff]
        %v3398 = vld [vmem:[%s345 + $0x5f0] sm:$0xff]
        %v3399 = vld [vmem:[%s345 + $0x5f8] sm:$0xff]
        %v3400 = vld [vmem:[%s345 + $0x600] sm:$0xff]
        %v3401 = vld [vmem:[%s345 + $0x608] sm:$0xff]
        %v3402 = vld [vmem:[%s345 + $0x610] sm:$0xff]
        %v3403 = vld [vmem:[%s345 + $0x618] sm:$0xf]
        %v3404 = vld [vmem:[%s345 + $0x61c] sm:$0xff]
        %v3405 = vld [vmem:[%s345 + $0x624] sm:$0xff]
        %v3406 = vld [vmem:[%s345 + $0x62c] sm:$0xff]
        %v3407 = vld [vmem:[%s345 + $0x634] sm:$0xff]
        %v3408 = vld [vmem:[%s345 + $0x63c] sm:$0xff]
        %v3409 = vld [vmem:[%s345 + $0x644] sm:$0xff]
        %v3410 = vld [vmem:[%s345 + $0x64c] sm:$0xff]
        %v3411 = vld [vmem:[%s345 + $0x654] sm:$0xff]
        %v3412 = vld [vmem:[%s345 + $0x65c] sm:$0xf]
        %v3413 = vld [vmem:[%s345 + $0x660] sm:$0xff]
        %v3414 = vld [vmem:[%s345 + $0x668] sm:$0xff]
        %v3415 = vld [vmem:[%s345 + $0x670] sm:$0xff]
        %v3416 = vld [vmem:[%s345 + $0x678] sm:$0xff]
        %v3417 = vld [vmem:[%s345 + $0x680] sm:$0xff]
        %v3418 = vld [vmem:[%s345 + $0x688] sm:$0xff]
        %v3419 = vld [vmem:[%s345 + $0x690] sm:$0xff]
        %v3420 = vld [vmem:[%s345 + $0x698] sm:$0xff]
        %v3421 = vld [vmem:[%s345 + $0x6a0] sm:$0xf]
        %v3422 = vld [vmem:[%s345 + $0x6a4] sm:$0xff]
        %v3423 = vld [vmem:[%s345 + $0x6ac] sm:$0xff]
        %v3424 = vld [vmem:[%s345 + $0x6b4] sm:$0xff]
        %v3425 = vld [vmem:[%s345 + $0x6bc] sm:$0xff]
        %v3426 = vld [vmem:[%s345 + $0x6c4] sm:$0xff]
        %v3427 = vld [vmem:[%s345 + $0x6cc] sm:$0xff]
        %v3428 = vld [vmem:[%s345 + $0x6d4] sm:$0xff]
        %v3429 = vld [vmem:[%s345 + $0x6dc] sm:$0xff]
        %v3430 = vld [vmem:[%s345 + $0x6e4] sm:$0xf]
        %v3431 = vld [vmem:[%s345 + $0x6e8] sm:$0xff]
        %v3432 = vld [vmem:[%s345 + $0x6f0] sm:$0xff]
        %v3433 = vld [vmem:[%s345 + $0x6f8] sm:$0xff]
        %v3434 = vld [vmem:[%s345 + $0x700] sm:$0xff]
        %v3435 = vld [vmem:[%s345 + $0x708] sm:$0xff]
        %v3436 = vld [vmem:[%s345 + $0x710] sm:$0xff]
        %v3437 = vld [vmem:[%s345 + $0x718] sm:$0xff]
        %v3438 = vld [vmem:[%s345 + $0x720] sm:$0xff]
        %v3439 = vld [vmem:[%s345 + $0x728] sm:$0xf]
        %v3440 = vld [vmem:[%s345 + $0x72c] sm:$0xff]
        %v3441 = vld [vmem:[%s345 + $0x734] sm:$0xff]
        %v3442 = vld [vmem:[%s345 + $0x73c] sm:$0xff]
        %v3443 = vld [vmem:[%s345 + $0x744] sm:$0xff]
        %v3444 = vld [vmem:[%s345 + $0x74c] sm:$0xff]
        %v3445 = vld [vmem:[%s345 + $0x754] sm:$0xff]
        %v3446 = vld [vmem:[%s345 + $0x75c] sm:$0xff]
        %v3447 = vld [vmem:[%s345 + $0x764] sm:$0xff]
        %v3448 = vld [vmem:[%s345 + $0x76c] sm:$0xf]
        %v3449 = vld [vmem:[%s345 + $0x770] sm:$0xff]
        %v3450 = vld [vmem:[%s345 + $0x778] sm:$0xff]
        %v3451 = vld [vmem:[%s345 + $0x780] sm:$0xff]
        %v3452 = vld [vmem:[%s345 + $0x788] sm:$0xff]
        %v3453 = vld [vmem:[%s345 + $0x790] sm:$0xff]
        %v3454 = vld [vmem:[%s345 + $0x798] sm:$0xff]
        %v3455 = vld [vmem:[%s345 + $0x7a0] sm:$0xff]
        %v3456 = vld [vmem:[%s345 + $0x7a8] sm:$0xff]
        %v3457 = vld [vmem:[%s345 + $0x7b0] sm:$0xf]
        %v3458 = vld [vmem:[%s345 + $0x7b4] sm:$0xff]
        %v3459 = vld [vmem:[%s345 + $0x7bc] sm:$0xff]
        %v3460 = vld [vmem:[%s345 + $0x7c4] sm:$0xff]
        %v3461 = vld [vmem:[%s345 + $0x7cc] sm:$0xff]
        %v3462 = vld [vmem:[%s345 + $0x7d4] sm:$0xff]
        %v3463 = vld [vmem:[%s345 + $0x7dc] sm:$0xff]
        %v3464 = vld [vmem:[%s345 + $0x7e4] sm:$0xff]
        %v3465 = vld [vmem:[%s345 + $0x7ec] sm:$0xff]
        %v3466 = vld [vmem:[%s345 + $0x7f4] sm:$0xf]
        %v3467 = vld [vmem:[%s345 + $0x7f8] sm:$0xff]
        %v3468 = vld [vmem:[%s345 + $0x800] sm:$0xff]
        %v3469 = vld [vmem:[%s345 + $0x808] sm:$0xff]
        %v3470 = vld [vmem:[%s345 + $0x810] sm:$0xff]
        %v3471 = vld [vmem:[%s345 + $0x818] sm:$0xff]
        %v3472 = vld [vmem:[%s345 + $0x820] sm:$0xff]
        %v3473 = vld [vmem:[%s345 + $0x828] sm:$0xff]
        %v3474 = vld [vmem:[%s345 + $0x830] sm:$0xff]
        %v3475 = vld [vmem:[%s345 + $0x838] sm:$0xf]
        %v3476 = vld [vmem:[%s345 + $0x83c] sm:$0xff]
        %v3477 = vld [vmem:[%s345 + $0x844] sm:$0xff]
        %v3478 = vld [vmem:[%s345 + $0x84c] sm:$0xff]
        %v3479 = vld [vmem:[%s345 + $0x854] sm:$0xff]
        %v3480 = vld [vmem:[%s345 + $0x85c] sm:$0xff]
        %v3481 = vld [vmem:[%s345 + $0x864] sm:$0xff]
        %v3482 = vld [vmem:[%s345 + $0x86c] sm:$0xff]
        %v3483 = vld [vmem:[%s345 + $0x874] sm:$0xff]
        %v3484 = vld [vmem:[%s345 + $0x87c] sm:$0xf]
        %v3485 = vld [vmem:[%s345 + $0x880] sm:$0xff]
        %v3486 = vld [vmem:[%s345 + $0x888] sm:$0xff]
        %v3487 = vld [vmem:[%s345 + $0x890] sm:$0xff]
        %v3488 = vld [vmem:[%s345 + $0x898] sm:$0xff]
        %v3489 = vld [vmem:[%s345 + $0x8a0] sm:$0xff]
        %v3490 = vld [vmem:[%s345 + $0x8a8] sm:$0xff]
        %v3491 = vld [vmem:[%s345 + $0x8b0] sm:$0xff]
        %v3492 = vld [vmem:[%s345 + $0x8b8] sm:$0xff]
        %v3493 = vld [vmem:[%s345 + $0x8c0] sm:$0xf]
        %v3494 = vld [vmem:[%s345 + $0x8c4] sm:$0xff]
        %v3495 = vld [vmem:[%s345 + $0x8cc] sm:$0xff]
        %v3496 = vld [vmem:[%s345 + $0x8d4] sm:$0xff]
        %v3497 = vld [vmem:[%s345 + $0x8dc] sm:$0xff]
        %v3498 = vld [vmem:[%s345 + $0x8e4] sm:$0xff]
        %v3499 = vld [vmem:[%s345 + $0x8ec] sm:$0xff]
        %v3500 = vld [vmem:[%s345 + $0x8f4] sm:$0xff]
        %v3501 = vld [vmem:[%s345 + $0x8fc] sm:$0xff]
        %v3502 = vld [vmem:[%s345 + $0x904] sm:$0xf]
        %v3503 = vld [vmem:[%s345 + $0x908] sm:$0xff]
        %v3504 = vld [vmem:[%s345 + $0x910] sm:$0xff]
        %v3505 = vld [vmem:[%s345 + $0x918] sm:$0xff]
        %v3506 = vld [vmem:[%s345 + $0x920] sm:$0xff]
        %v3507 = vld [vmem:[%s345 + $0x928] sm:$0xff]
        %v3508 = vld [vmem:[%s345 + $0x930] sm:$0xff]
        %v3509 = vld [vmem:[%s345 + $0x938] sm:$0xff]
        %v3510 = vld [vmem:[%s345 + $0x940] sm:$0xff]
        %v3511 = vld [vmem:[%s345 + $0x948] sm:$0xf]
        %v3512 = vld [vmem:[%s345 + $0x94c] sm:$0xff]
        %v3513 = vld [vmem:[%s345 + $0x954] sm:$0xff]
        %v3514 = vld [vmem:[%s345 + $0x95c] sm:$0xff]
        %v3515 = vld [vmem:[%s345 + $0x964] sm:$0xff]
        %v3516 = vld [vmem:[%s345 + $0x96c] sm:$0xff]
        %v3517 = vld [vmem:[%s345 + $0x974] sm:$0xff]
        %v3518 = vld [vmem:[%s345 + $0x97c] sm:$0xff]
        %v3519 = vld [vmem:[%s345 + $0x984] sm:$0xff]
        %v3520 = vld [vmem:[%s345 + $0x98c] sm:$0xf]
        %v3521 = vld [vmem:[%s345 + $0x990] sm:$0xff]
        %v3522 = vld [vmem:[%s345 + $0x998] sm:$0xff]
        %v3523 = vld [vmem:[%s345 + $0x9a0] sm:$0xff]
        %v3524 = vld [vmem:[%s345 + $0x9a8] sm:$0xff]
        %v3525 = vld [vmem:[%s345 + $0x9b0] sm:$0xff]
        %v3526 = vld [vmem:[%s345 + $0x9b8] sm:$0xff]
        %v3527 = vld [vmem:[%s345 + $0x9c0] sm:$0xff]
        %v3528 = vld [vmem:[%s345 + $0x9c8] sm:$0xff]
        %v3529 = vld [vmem:[%s345 + $0x9d0] sm:$0xf]
        %v3530 = vld [vmem:[%s345 + $0x9d4] sm:$0xff]
        %v3531 = vld [vmem:[%s345 + $0x9dc] sm:$0xff]
        %v3532 = vld [vmem:[%s345 + $0x9e4] sm:$0xff]
        %v3533 = vld [vmem:[%s345 + $0x9ec] sm:$0xff]
        %v3534 = vld [vmem:[%s345 + $0x9f4] sm:$0xff]
        %v3535 = vld [vmem:[%s345 + $0x9fc] sm:$0xff]
        %v3536 = vld [vmem:[%s345 + $0xa04] sm:$0xff]
        %v3537 = vld [vmem:[%s345 + $0xa0c] sm:$0xff]
        %v3538 = vld [vmem:[%s345 + $0xa14] sm:$0xf]
        %v3539 = vld [vmem:[%s345 + $0xa18] sm:$0xff]
        %v3540 = vld [vmem:[%s345 + $0xa20] sm:$0xff]
        %v3541 = vld [vmem:[%s345 + $0xa28] sm:$0xff]
        %v3542 = vld [vmem:[%s345 + $0xa30] sm:$0xff]
        %v3543 = vld [vmem:[%s345 + $0xa38] sm:$0xff]
        %v3544 = vld [vmem:[%s345 + $0xa40] sm:$0xff]
        %v3545 = vld [vmem:[%s345 + $0xa48] sm:$0xff]
        %v3546 = vld [vmem:[%s345 + $0xa50] sm:$0xff]
        %v3547 = vld [vmem:[%s345 + $0xa58] sm:$0xf]
        %v3548 = vld [vmem:[%s345 + $0xa5c] sm:$0xff]
        %v3549 = vld [vmem:[%s345 + $0xa64] sm:$0xff]
        %v3550 = vld [vmem:[%s345 + $0xa6c] sm:$0xff]
        %v3551 = vld [vmem:[%s345 + $0xa74] sm:$0xff]
        %v3552 = vld [vmem:[%s345 + $0xa7c] sm:$0xff]
        %v3553 = vld [vmem:[%s345 + $0xa84] sm:$0xff]
        %v3554 = vld [vmem:[%s345 + $0xa8c] sm:$0xff]
        %v3555 = vld [vmem:[%s345 + $0xa94] sm:$0xff]
        %v3556 = vld [vmem:[%s345 + $0xa9c] sm:$0xf]
        %v3557 = vld [vmem:[%s345 + $0xaa0] sm:$0xff]
        %v3558 = vld [vmem:[%s345 + $0xaa8] sm:$0xff]
        %v3559 = vld [vmem:[%s345 + $0xab0] sm:$0xff]
        %v3560 = vld [vmem:[%s345 + $0xab8] sm:$0xff]
        %v3561 = vld [vmem:[%s345 + $0xac0] sm:$0xff]
        %v3562 = vld [vmem:[%s345 + $0xac8] sm:$0xff]
        %v3563 = vld [vmem:[%s345 + $0xad0] sm:$0xff]
        %v3564 = vld [vmem:[%s345 + $0xad8] sm:$0xff]
        %v3565 = vld [vmem:[%s345 + $0xae0] sm:$0xf]
        %v3566 = vld [vmem:[%s345 + $0xae4] sm:$0xff]
        %v3567 = vld [vmem:[%s345 + $0xaec] sm:$0xff]
        %v3568 = vld [vmem:[%s345 + $0xaf4] sm:$0xff]
        %v3569 = vld [vmem:[%s345 + $0xafc] sm:$0xff]
        %v3570 = vld [vmem:[%s345 + $0xb04] sm:$0xff]
        %v3571 = vld [vmem:[%s345 + $0xb0c] sm:$0xff]
        %v3572 = vld [vmem:[%s345 + $0xb14] sm:$0xff]
        %v3573 = vld [vmem:[%s345 + $0xb1c] sm:$0xff]
        %v3574 = vld [vmem:[%s345 + $0xb24] sm:$0xf]
        %v3575 = vld [vmem:[%s345 + $0xb28] sm:$0xff]
        %v3576 = vld [vmem:[%s345 + $0xb30] sm:$0xff]
        %v3577 = vld [vmem:[%s345 + $0xb38] sm:$0xff]
        %v3578 = vld [vmem:[%s345 + $0xb40] sm:$0xff]
        %v3579 = vld [vmem:[%s345 + $0xb48] sm:$0xff]
        %v3580 = vld [vmem:[%s345 + $0xb50] sm:$0xff]
        %v3581 = vld [vmem:[%s345 + $0xb58] sm:$0xff]
        %v3582 = vld [vmem:[%s345 + $0xb60] sm:$0xff]
        %v3583 = vld [vmem:[%s345 + $0xb68] sm:$0xf]
        %v3584 = vld [vmem:[%s345 + $0xb6c] sm:$0xff]
        %v3585 = vld [vmem:[%s345 + $0xb74] sm:$0xff]
        %v3586 = vld [vmem:[%s345 + $0xb7c] sm:$0xff]
        %v3587 = vld [vmem:[%s345 + $0xb84] sm:$0xff]
        %v3588 = vld [vmem:[%s345 + $0xb8c] sm:$0xff]
        %v3589 = vld [vmem:[%s345 + $0xb94] sm:$0xff]
        %v3590 = vld [vmem:[%s345 + $0xb9c] sm:$0xff]
        %v3591 = vld [vmem:[%s345 + $0xba4] sm:$0xff]
        %v3592 = vld [vmem:[%s345 + $0xbac] sm:$0xf]
        %v3593 = vld [vmem:[%s345 + $0xbb0] sm:$0xff]
        %v3594 = vld [vmem:[%s345 + $0xbb8] sm:$0xff]
        %v3595 = vld [vmem:[%s345 + $0xbc0] sm:$0xff]
        %v3596 = vld [vmem:[%s345 + $0xbc8] sm:$0xff]
        %v3597 = vld [vmem:[%s345 + $0xbd0] sm:$0xff]
        %v3598 = vld [vmem:[%s345 + $0xbd8] sm:$0xff]
        %v3599 = vld [vmem:[%s345 + $0xbe0] sm:$0xff]
        %v3600 = vld [vmem:[%s345 + $0xbe8] sm:$0xff]
        %v3601 = vld [vmem:[%s345 + $0xbf0] sm:$0xf]
        %v3602 = vld [vmem:[%s345 + $0xbf4] sm:$0xff]
        %v3603 = vld [vmem:[%s345 + $0xbfc] sm:$0xff]
        %v3604 = vld [vmem:[%s345 + $0xc04] sm:$0xff]
        %v3605 = vld [vmem:[%s345 + $0xc0c] sm:$0xff]
        %v3606 = vld [vmem:[%s345 + $0xc14] sm:$0xff]
        %v3607 = vld [vmem:[%s345 + $0xc1c] sm:$0xff]
        %v3608 = vld [vmem:[%s345 + $0xc24] sm:$0xff]
        %v3609 = vld [vmem:[%s345 + $0xc2c] sm:$0xff]
        %v3610 = vld [vmem:[%s345 + $0xc34] sm:$0xf]
        %v3611 = vld [vmem:[%s345 + $0xc38] sm:$0xff]
        %v3612 = vld [vmem:[%s345 + $0xc40] sm:$0xff]
        %v3613 = vld [vmem:[%s345 + $0xc48] sm:$0xff]
        %v3614 = vld [vmem:[%s345 + $0xc50] sm:$0xff]
        %v3615 = vld [vmem:[%s345 + $0xc58] sm:$0xff]
        %v3616 = vld [vmem:[%s345 + $0xc60] sm:$0xff]
        %v3617 = vld [vmem:[%s345 + $0xc68] sm:$0xff]
        %v3618 = vld [vmem:[%s345 + $0xc70] sm:$0xff]
        %v3619 = vld [vmem:[%s345 + $0xc78] sm:$0xf]
        %v3620 = vld [vmem:[%s345 + $0xc7c] sm:$0xff]
        %v3621 = vld [vmem:[%s345 + $0xc84] sm:$0xff]
        %v3622 = vld [vmem:[%s345 + $0xc8c] sm:$0xff]
        %v3623 = vld [vmem:[%s345 + $0xc94] sm:$0xff]
        %v3624 = vld [vmem:[%s345 + $0xc9c] sm:$0xff]
        %v3625 = vld [vmem:[%s345 + $0xca4] sm:$0xff]
        %v3626 = vld [vmem:[%s345 + $0xcac] sm:$0xff]
        %v3627 = vld [vmem:[%s345 + $0xcb4] sm:$0xff]
        %v3628 = vld [vmem:[%s345 + $0xcbc] sm:$0xf]
        %v3629 = vld [vmem:[%s345 + $0xcc0] sm:$0xff]
        %v3630 = vld [vmem:[%s345 + $0xcc8] sm:$0xff]
        %v3631 = vld [vmem:[%s345 + $0xcd0] sm:$0xff]
        %v3632 = vld [vmem:[%s345 + $0xcd8] sm:$0xff]
        %v3633 = vld [vmem:[%s345 + $0xce0] sm:$0xff]
        %v3634 = vld [vmem:[%s345 + $0xce8] sm:$0xff]
        %v3635 = vld [vmem:[%s345 + $0xcf0] sm:$0xff]
        %v3636 = vld [vmem:[%s345 + $0xcf8] sm:$0xff]
        %v3637 = vld [vmem:[%s345 + $0xd00] sm:$0xf]
        %v3638 = vld [vmem:[%s345 + $0xd04] sm:$0xff]
        %v3639 = vld [vmem:[%s345 + $0xd0c] sm:$0xff]
        %v3640 = vld [vmem:[%s345 + $0xd14] sm:$0xff]
        %v3641 = vld [vmem:[%s345 + $0xd1c] sm:$0xff]
        %v3642 = vld [vmem:[%s345 + $0xd24] sm:$0xff]
        %v3643 = vld [vmem:[%s345 + $0xd2c] sm:$0xff]
        %v3644 = vld [vmem:[%s345 + $0xd34] sm:$0xff]
        %v3645 = vld [vmem:[%s345 + $0xd3c] sm:$0xff]
        %v3646 = vld [vmem:[%s345 + $0xd44] sm:$0xf]
        %v3647 = vld [vmem:[%s345 + $0xd48] sm:$0xff]
        %v3648 = vld [vmem:[%s345 + $0xd50] sm:$0xff]
        %v3649 = vld [vmem:[%s345 + $0xd58] sm:$0xff]
        %v3650 = vld [vmem:[%s345 + $0xd60] sm:$0xff]
        %v3651 = vld [vmem:[%s345 + $0xd68] sm:$0xff]
        %v3652 = vld [vmem:[%s345 + $0xd70] sm:$0xff]
        %v3653 = vld [vmem:[%s345 + $0xd78] sm:$0xff]
        %v3654 = vld [vmem:[%s345 + $0xd80] sm:$0xff]
        %v3655 = vld [vmem:[%s345 + $0xd88] sm:$0xf]
        %v3656 = vld [vmem:[%s345 + $0xd8c] sm:$0xff]
        %v3657 = vld [vmem:[%s345 + $0xd94] sm:$0xff]
        %v3658 = vld [vmem:[%s345 + $0xd9c] sm:$0xff]
        %v3659 = vld [vmem:[%s345 + $0xda4] sm:$0xff]
        %v3660 = vld [vmem:[%s345 + $0xdac] sm:$0xff]
        %v3661 = vld [vmem:[%s345 + $0xdb4] sm:$0xff]
        %v3662 = vld [vmem:[%s345 + $0xdbc] sm:$0xff]
        %v3663 = vld [vmem:[%s345 + $0xdc4] sm:$0xff]
        %v3664 = vld [vmem:[%s345 + $0xdcc] sm:$0xf]
        %v3665 = vld [vmem:[%s345 + $0xdd0] sm:$0xff]
        %v3666 = vld [vmem:[%s345 + $0xdd8] sm:$0xff]
        %v3667 = vld [vmem:[%s345 + $0xde0] sm:$0xff]
        %v3668 = vld [vmem:[%s345 + $0xde8] sm:$0xff]
        %v3669 = vld [vmem:[%s345 + $0xdf0] sm:$0xff]
        %v3670 = vld [vmem:[%s345 + $0xdf8] sm:$0xff]
        %v3671 = vld [vmem:[%s345 + $0xe00] sm:$0xff]
        %v3672 = vld [vmem:[%s345 + $0xe08] sm:$0xff]
        %v3673 = vld [vmem:[%s345 + $0xe10] sm:$0xf]
        %v3674 = vld [vmem:[%s345 + $0xe14] sm:$0xff]
        %v3675 = vld [vmem:[%s345 + $0xe1c] sm:$0xff]
        %v3676 = vld [vmem:[%s345 + $0xe24] sm:$0xff]
        %v3677 = vld [vmem:[%s345 + $0xe2c] sm:$0xff]
        %v3678 = vld [vmem:[%s345 + $0xe34] sm:$0xff]
        %v3679 = vld [vmem:[%s345 + $0xe3c] sm:$0xff]
        %v3680 = vld [vmem:[%s345 + $0xe44] sm:$0xff]
        %v3681 = vld [vmem:[%s345 + $0xe4c] sm:$0xff]
        %v3682 = vld [vmem:[%s345 + $0xe54] sm:$0xf]
        %v3683 = vld [vmem:[%s345 + $0xe58] sm:$0xff]
        %v3684 = vld [vmem:[%s345 + $0xe60] sm:$0xff]
        %v3685 = vld [vmem:[%s345 + $0xe68] sm:$0xff]
        %v3686 = vld [vmem:[%s345 + $0xe70] sm:$0xff]
        %v3687 = vld [vmem:[%s345 + $0xe78] sm:$0xff]
        %v3688 = vld [vmem:[%s345 + $0xe80] sm:$0xff]
        %v3689 = vld [vmem:[%s345 + $0xe88] sm:$0xff]
        %v3690 = vld [vmem:[%s345 + $0xe90] sm:$0xff]
        %v3691 = vld [vmem:[%s345 + $0xe98] sm:$0xf]
        %v3692 = vld [vmem:[%s345 + $0xe9c] sm:$0xff]
        %v3693 = vld [vmem:[%s345 + $0xea4] sm:$0xff]
        %v3694 = vld [vmem:[%s345 + $0xeac] sm:$0xff]
        %v3695 = vld [vmem:[%s345 + $0xeb4] sm:$0xff]
        %v3696 = vld [vmem:[%s345 + $0xebc] sm:$0xff]
        %v3697 = vld [vmem:[%s345 + $0xec4] sm:$0xff]
        %v3698 = vld [vmem:[%s345 + $0xecc] sm:$0xff]
        %v3699 = vld [vmem:[%s345 + $0xed4] sm:$0xff]
        %v3700 = vld [vmem:[%s345 + $0xedc] sm:$0xf]
        %v3701 = vld [vmem:[%s345 + $0xee0] sm:$0xff]
        %v3702 = vld [vmem:[%s345 + $0xee8] sm:$0xff]
        %v3703 = vld [vmem:[%s345 + $0xef0] sm:$0xff]
        %v3704 = vld [vmem:[%s345 + $0xef8] sm:$0xff]
        %v3705 = vld [vmem:[%s345 + $0xf00] sm:$0xff]
        %v3706 = vld [vmem:[%s345 + $0xf08] sm:$0xff]
        %v3707 = vld [vmem:[%s345 + $0xf10] sm:$0xff]
        %v3708 = vld [vmem:[%s345 + $0xf18] sm:$0xff]
        %v3709 = vld [vmem:[%s345 + $0xf20] sm:$0xf]
        %v3710 = vld [vmem:[%s345 + $0xf24] sm:$0xff]
        %v3711 = vld [vmem:[%s345 + $0xf2c] sm:$0xff]
        %v3712 = vld [vmem:[%s345 + $0xf34] sm:$0xff]
        %v3713 = vld [vmem:[%s345 + $0xf3c] sm:$0xff]
        %v3714 = vld [vmem:[%s345 + $0xf44] sm:$0xff]
        %v3715 = vld [vmem:[%s345 + $0xf4c] sm:$0xff]
        %v3716 = vld [vmem:[%s345 + $0xf54] sm:$0xff]
        %v3717 = vld [vmem:[%s345 + $0xf5c] sm:$0xff]
        %v3718 = vld [vmem:[%s345 + $0xf64] sm:$0xf]
        %v3719 = vld [vmem:[%s345 + $0xf68] sm:$0xff]
        %v3720 = vld [vmem:[%s345 + $0xf70] sm:$0xff]
        %v3721 = vld [vmem:[%s345 + $0xf78] sm:$0xff]
        %v3722 = vld [vmem:[%s345 + $0xf80] sm:$0xff]
        %v3723 = vld [vmem:[%s345 + $0xf88] sm:$0xff]
        %v3724 = vld [vmem:[%s345 + $0xf90] sm:$0xff]
        %v3725 = vld [vmem:[%s345 + $0xf98] sm:$0xff]
        %v3726 = vld [vmem:[%s345 + $0xfa0] sm:$0xff]
        %v3727 = vld [vmem:[%s345 + $0xfa8] sm:$0xf]
        %v3728 = vld [vmem:[%s345 + $0xfac] sm:$0xff]
        %v3729 = vld [vmem:[%s345 + $0xfb4] sm:$0xff]
        %v3730 = vld [vmem:[%s345 + $0xfbc] sm:$0xff]
        %v3731 = vld [vmem:[%s345 + $0xfc4] sm:$0xff]
        %v3732 = vld [vmem:[%s345 + $0xfcc] sm:$0xff]
        %v3733 = vld [vmem:[%s345 + $0xfd4] sm:$0xff]
        %v3734 = vld [vmem:[%s345 + $0xfdc] sm:$0xff]
        %v3735 = vld [vmem:[%s345 + $0xfe4] sm:$0xff]
        %v3736 = vld [vmem:[%s345 + $0xfec] sm:$0xf]
        %v3737 = vld [vmem:[%s345 + $0xff0] sm:$0xff]
        %v3738 = vld [vmem:[%s345 + $0xff8] sm:$0xff]
        %v3739 = vld [vmem:[%s345 + $0x1000] sm:$0xff]
        %v3740 = vld [vmem:[%s345 + $0x1008] sm:$0xff]
        %v3741 = vld [vmem:[%s345 + $0x1010] sm:$0xff]
        %v3742 = vld [vmem:[%s345 + $0x1018] sm:$0xff]
        %v3743 = vld [vmem:[%s345 + $0x1020] sm:$0xff]
        %v3744 = vld [vmem:[%s345 + $0x1028] sm:$0xff]
        %v3745 = vld [vmem:[%s345 + $0x1030] sm:$0xf]
        %v3746 = vld [vmem:[%s345 + $0x1034] sm:$0xff]
        %v3747 = vld [vmem:[%s345 + $0x103c] sm:$0xff]
        %v3748 = vld [vmem:[%s345 + $0x1044] sm:$0xff]
        %v3749 = vld [vmem:[%s345 + $0x104c] sm:$0xff]
        %v3750 = vld [vmem:[%s345 + $0x1054] sm:$0xff]
        %v3751 = vld [vmem:[%s345 + $0x105c] sm:$0xff]
        %v3752 = vld [vmem:[%s345 + $0x1064] sm:$0xff]
        %v3753 = vld [vmem:[%s345 + $0x106c] sm:$0xff]
        %v3754 = vld [vmem:[%s345 + $0x1074] sm:$0xf]
        %v3755 = vld [vmem:[%s345 + $0x1078] sm:$0xff]
        %v3756 = vld [vmem:[%s345 + $0x1080] sm:$0xff]
        %v3757 = vld [vmem:[%s345 + $0x1088] sm:$0xff]
        %v3758 = vld [vmem:[%s345 + $0x1090] sm:$0xff]
        %v3759 = vld [vmem:[%s345 + $0x1098] sm:$0xff]
        %v3760 = vld [vmem:[%s345 + $0x10a0] sm:$0xff]
        %v3761 = vld [vmem:[%s345 + $0x10a8] sm:$0xff]
        %v3762 = vld [vmem:[%s345 + $0x10b0] sm:$0xff]
        %v3763 = vld [vmem:[%s345 + $0x10b8] sm:$0xf]
        %v3764 = vld [vmem:[%s345 + $0x10bc] sm:$0xff]
        %v3765 = vld [vmem:[%s345 + $0x10c4] sm:$0xff]
        %v3766 = vld [vmem:[%s345 + $0x10cc] sm:$0xff]
        %v3767 = vld [vmem:[%s345 + $0x10d4] sm:$0xff]
        %v3768 = vld [vmem:[%s345 + $0x10dc] sm:$0xff]
        %v3769 = vld [vmem:[%s345 + $0x10e4] sm:$0xff]
        %v3770 = vld [vmem:[%s345 + $0x10ec] sm:$0xff]
        %v3771 = vld [vmem:[%s345 + $0x10f4] sm:$0xff]
        %v3772 = vld [vmem:[%s345 + $0x10fc] sm:$0xf]
        %v3773 = vld [vmem:[%s355] sm:$0xff]
        %v3774 = vld [vmem:[%s355 + $0x8] sm:$0xff]
        %v3775 = vld [vmem:[%s355 + $0x10] sm:$0x1]
        %v3779 = vperm.slane %v3773, 0
        %v3780 = vperm.slane %v3773, 1
        %v3781 = vperm.slane %v3773, 2
        %v3782 = vperm.slane %v3773, 3
        %v3783 = vperm.slane %v3773, 4
        %v3784 = vperm.slane %v3773, 5
        %v3785 = vperm.slane %v3773, 6
        %v3786 = vperm.slane %v3773, 7
        %v3787 = vperm.slane %v3774, 0
        %v3788 = vperm.slane %v3774, 1
        %v3789 = vperm.slane %v3774, 2
        %v3790 = vperm.slane %v3774, 3
        %v3791 = vperm.slane %v3774, 4
        %v3792 = vperm.slane %v3774, 5
        %v3793 = vperm.slane %v3774, 6
        %v3794 = vperm.slane %v3774, 7
        %v3795 = vperm.slane %v3775, 0
        %v4389 = vunpack.c.l.b16 %v3197
        %v4390 = vunpack.c.h.b16 %v3197
        %v4391 = vunpack.c.l.b16 %v3198
        %v4392 = vunpack.c.h.b16 %v3198
        %v4393 = vunpack.c.l.b16 %v3199
        %v4394 = vunpack.c.h.b16 %v3199
        %v4395 = vunpack.c.l.b16 %v3200
        %v4396 = vunpack.c.h.b16 %v3200
        %v4397 = vunpack.c.l.b16 %v3201
        %v4398 = vunpack.c.h.b16 %v3201
        %v4399 = vunpack.c.l.b16 %v3202
        %v4400 = vunpack.c.h.b16 %v3202
        %v4401 = vunpack.c.l.b16 %v3203
        %v4402 = vunpack.c.h.b16 %v3203
        %v4403 = vunpack.c.l.b16 %v3204
        %v4404 = vunpack.c.h.b16 %v3204
        %v4405 = vunpack.c.l.b16 %v3205
        %v4406 = vunpack.c.l.b16 %v3206
        %v4407 = vunpack.c.h.b16 %v3206
        %v4408 = vunpack.c.l.b16 %v3207
        %v4409 = vunpack.c.h.b16 %v3207
        %v4410 = vunpack.c.l.b16 %v3208
        %v4411 = vunpack.c.h.b16 %v3208
        %v4412 = vunpack.c.l.b16 %v3209
        %v4413 = vunpack.c.h.b16 %v3209
        %v4414 = vunpack.c.l.b16 %v3210
        %v4415 = vunpack.c.h.b16 %v3210
        %v4416 = vunpack.c.l.b16 %v3211
        %v4417 = vunpack.c.h.b16 %v3211
        %v4418 = vunpack.c.l.b16 %v3212
        %v4419 = vunpack.c.h.b16 %v3212
        %v4420 = vunpack.c.l.b16 %v3213
        %v4421 = vunpack.c.h.b16 %v3213
        %v4422 = vunpack.c.l.b16 %v3214
        %v4423 = vunpack.c.l.b16 %v3215
        %v4424 = vunpack.c.h.b16 %v3215
        %v4425 = vunpack.c.l.b16 %v3216
        %v4426 = vunpack.c.h.b16 %v3216
        %v4427 = vunpack.c.l.b16 %v3217
        %v4428 = vunpack.c.h.b16 %v3217
        %v4429 = vunpack.c.l.b16 %v3218
        %v4430 = vunpack.c.h.b16 %v3218
        %v4431 = vunpack.c.l.b16 %v3219
        %v4432 = vunpack.c.h.b16 %v3219
        %v4433 = vunpack.c.l.b16 %v3220
        %v4434 = vunpack.c.h.b16 %v3220
        %v4435 = vunpack.c.l.b16 %v3221
        %v4436 = vunpack.c.h.b16 %v3221
        %v4437 = vunpack.c.l.b16 %v3222
        %v4438 = vunpack.c.h.b16 %v3222
        %v4439 = vunpack.c.l.b16 %v3223
        %v4440 = vunpack.c.l.b16 %v3224
        %v4441 = vunpack.c.h.b16 %v3224
        %v4442 = vunpack.c.l.b16 %v3225
        %v4443 = vunpack.c.h.b16 %v3225
        %v4444 = vunpack.c.l.b16 %v3226
        %v4445 = vunpack.c.h.b16 %v3226
        %v4446 = vunpack.c.l.b16 %v3227
        %v4447 = vunpack.c.h.b16 %v3227
        %v4448 = vunpack.c.l.b16 %v3228
        %v4449 = vunpack.c.h.b16 %v3228
        %v4450 = vunpack.c.l.b16 %v3229
        %v4451 = vunpack.c.h.b16 %v3229
        %v4452 = vunpack.c.l.b16 %v3230
        %v4453 = vunpack.c.h.b16 %v3230
        %v4454 = vunpack.c.l.b16 %v3231
        %v4455 = vunpack.c.h.b16 %v3231
        %v4456 = vunpack.c.l.b16 %v3232
        %v4457 = vunpack.c.l.b16 %v3233
        %v4458 = vunpack.c.h.b16 %v3233
        %v4459 = vunpack.c.l.b16 %v3234
        %v4460 = vunpack.c.h.b16 %v3234
        %v4461 = vunpack.c.l.b16 %v3235
        %v4462 = vunpack.c.h.b16 %v3235
        %v4463 = vunpack.c.l.b16 %v3236
        %v4464 = vunpack.c.h.b16 %v3236
        %v4465 = vunpack.c.l.b16 %v3237
        %v4466 = vunpack.c.h.b16 %v3237
        %v4467 = vunpack.c.l.b16 %v3238
        %v4468 = vunpack.c.h.b16 %v3238
        %v4469 = vunpack.c.l.b16 %v3239
        %v4470 = vunpack.c.h.b16 %v3239
        %v4471 = vunpack.c.l.b16 %v3240
        %v4472 = vunpack.c.h.b16 %v3240
        %v4473 = vunpack.c.l.b16 %v3241
        %v4474 = vunpack.c.l.b16 %v3242
        %v4475 = vunpack.c.h.b16 %v3242
        %v4476 = vunpack.c.l.b16 %v3243
        %v4477 = vunpack.c.h.b16 %v3243
        %v4478 = vunpack.c.l.b16 %v3244
        %v4479 = vunpack.c.h.b16 %v3244
        %v4480 = vunpack.c.l.b16 %v3245
        %v4481 = vunpack.c.h.b16 %v3245
        %v4482 = vunpack.c.l.b16 %v3246
        %v4483 = vunpack.c.h.b16 %v3246
        %v4484 = vunpack.c.l.b16 %v3247
        %v4485 = vunpack.c.h.b16 %v3247
        %v4486 = vunpack.c.l.b16 %v3248
        %v4487 = vunpack.c.h.b16 %v3248
        %v4488 = vunpack.c.l.b16 %v3249
        %v4489 = vunpack.c.h.b16 %v3249
        %v4490 = vunpack.c.l.b16 %v3250
        %v4491 = vunpack.c.l.b16 %v3251
        %v4492 = vunpack.c.h.b16 %v3251
        %v4493 = vunpack.c.l.b16 %v3252
        %v4494 = vunpack.c.h.b16 %v3252
        %v4495 = vunpack.c.l.b16 %v3253
        %v4496 = vunpack.c.h.b16 %v3253
        %v4497 = vunpack.c.l.b16 %v3254
        %v4498 = vunpack.c.h.b16 %v3254
        %v4499 = vunpack.c.l.b16 %v3255
        %v4500 = vunpack.c.h.b16 %v3255
        %v4501 = vunpack.c.l.b16 %v3256
        %v4502 = vunpack.c.h.b16 %v3256
        %v4503 = vunpack.c.l.b16 %v3257
        %v4504 = vunpack.c.h.b16 %v3257
        %v4505 = vunpack.c.l.b16 %v3258
        %v4506 = vunpack.c.h.b16 %v3258
        %v4507 = vunpack.c.l.b16 %v3259
        %v4508 = vunpack.c.l.b16 %v3260
        %v4509 = vunpack.c.h.b16 %v3260
        %v4510 = vunpack.c.l.b16 %v3261
        %v4511 = vunpack.c.h.b16 %v3261
        %v4512 = vunpack.c.l.b16 %v3262
        %v4513 = vunpack.c.h.b16 %v3262
        %v4514 = vunpack.c.l.b16 %v3263
        %v4515 = vunpack.c.h.b16 %v3263
        %v4516 = vunpack.c.l.b16 %v3264
        %v4517 = vunpack.c.h.b16 %v3264
        %v4518 = vunpack.c.l.b16 %v3265
        %v4519 = vunpack.c.h.b16 %v3265
        %v4520 = vunpack.c.l.b16 %v3266
        %v4521 = vunpack.c.h.b16 %v3266
        %v4522 = vunpack.c.l.b16 %v3267
        %v4523 = vunpack.c.h.b16 %v3267
        %v4524 = vunpack.c.l.b16 %v3268
        %v4525 = vunpack.c.l.b16 %v3269
        %v4526 = vunpack.c.h.b16 %v3269
        %v4527 = vunpack.c.l.b16 %v3270
        %v4528 = vunpack.c.h.b16 %v3270
        %v4529 = vunpack.c.l.b16 %v3271
        %v4530 = vunpack.c.h.b16 %v3271
        %v4531 = vunpack.c.l.b16 %v3272
        %v4532 = vunpack.c.h.b16 %v3272
        %v4533 = vunpack.c.l.b16 %v3273
        %v4534 = vunpack.c.h.b16 %v3273
        %v4535 = vunpack.c.l.b16 %v3274
        %v4536 = vunpack.c.h.b16 %v3274
        %v4537 = vunpack.c.l.b16 %v3275
        %v4538 = vunpack.c.h.b16 %v3275
        %v4539 = vunpack.c.l.b16 %v3276
        %v4540 = vunpack.c.h.b16 %v3276
        %v4541 = vunpack.c.l.b16 %v3277
        %v4542 = vunpack.c.l.b16 %v3278
        %v4543 = vunpack.c.h.b16 %v3278
        %v4544 = vunpack.c.l.b16 %v3279
        %v4545 = vunpack.c.h.b16 %v3279
        %v4546 = vunpack.c.l.b16 %v3280
        %v4547 = vunpack.c.h.b16 %v3280
        %v4548 = vunpack.c.l.b16 %v3281
        %v4549 = vunpack.c.h.b16 %v3281
        %v4550 = vunpack.c.l.b16 %v3282
        %v4551 = vunpack.c.h.b16 %v3282
        %v4552 = vunpack.c.l.b16 %v3283
        %v4553 = vunpack.c.h.b16 %v3283
        %v4554 = vunpack.c.l.b16 %v3284
        %v4555 = vunpack.c.h.b16 %v3284
        %v4556 = vunpack.c.l.b16 %v3285
        %v4557 = vunpack.c.h.b16 %v3285
        %v4558 = vunpack.c.l.b16 %v3286
        %v4559 = vunpack.c.l.b16 %v3287
        %v4560 = vunpack.c.h.b16 %v3287
        %v4561 = vunpack.c.l.b16 %v3288
        %v4562 = vunpack.c.h.b16 %v3288
        %v4563 = vunpack.c.l.b16 %v3289
        %v4564 = vunpack.c.h.b16 %v3289
        %v4565 = vunpack.c.l.b16 %v3290
        %v4566 = vunpack.c.h.b16 %v3290
        %v4567 = vunpack.c.l.b16 %v3291
        %v4568 = vunpack.c.h.b16 %v3291
        %v4569 = vunpack.c.l.b16 %v3292
        %v4570 = vunpack.c.h.b16 %v3292
        %v4571 = vunpack.c.l.b16 %v3293
        %v4572 = vunpack.c.h.b16 %v3293
        %v4573 = vunpack.c.l.b16 %v3294
        %v4574 = vunpack.c.h.b16 %v3294
        %v4575 = vunpack.c.l.b16 %v3295
        %v4576 = vunpack.c.l.b16 %v3296
        %v4577 = vunpack.c.h.b16 %v3296
        %v4578 = vunpack.c.l.b16 %v3297
        %v4579 = vunpack.c.h.b16 %v3297
        %v4580 = vunpack.c.l.b16 %v3298
        %v4581 = vunpack.c.h.b16 %v3298
        %v4582 = vunpack.c.l.b16 %v3299
        %v4583 = vunpack.c.h.b16 %v3299
        %v4584 = vunpack.c.l.b16 %v3300
        %v4585 = vunpack.c.h.b16 %v3300
        %v4586 = vunpack.c.l.b16 %v3301
        %v4587 = vunpack.c.h.b16 %v3301
        %v4588 = vunpack.c.l.b16 %v3302
        %v4589 = vunpack.c.h.b16 %v3302
        %v4590 = vunpack.c.l.b16 %v3303
        %v4591 = vunpack.c.h.b16 %v3303
        %v4592 = vunpack.c.l.b16 %v3304
        %v4593 = vunpack.c.l.b16 %v3305
        %v4594 = vunpack.c.h.b16 %v3305
        %v4595 = vunpack.c.l.b16 %v3306
        %v4596 = vunpack.c.h.b16 %v3306
        %v4597 = vunpack.c.l.b16 %v3307
        %v4598 = vunpack.c.h.b16 %v3307
        %v4599 = vunpack.c.l.b16 %v3308
        %v4600 = vunpack.c.h.b16 %v3308
        %v4601 = vunpack.c.l.b16 %v3309
        %v4602 = vunpack.c.h.b16 %v3309
        %v4603 = vunpack.c.l.b16 %v3310
        %v4604 = vunpack.c.h.b16 %v3310
        %v4605 = vunpack.c.l.b16 %v3311
        %v4606 = vunpack.c.h.b16 %v3311
        %v4607 = vunpack.c.l.b16 %v3312
        %v4608 = vunpack.c.h.b16 %v3312
        %v4609 = vunpack.c.l.b16 %v3313
        %v4610 = vunpack.c.l.b16 %v3314
        %v4611 = vunpack.c.h.b16 %v3314
        %v4612 = vunpack.c.l.b16 %v3315
        %v4613 = vunpack.c.h.b16 %v3315
        %v4614 = vunpack.c.l.b16 %v3316
        %v4615 = vunpack.c.h.b16 %v3316
        %v4616 = vunpack.c.l.b16 %v3317
        %v4617 = vunpack.c.h.b16 %v3317
        %v4618 = vunpack.c.l.b16 %v3318
        %v4619 = vunpack.c.h.b16 %v3318
        %v4620 = vunpack.c.l.b16 %v3319
        %v4621 = vunpack.c.h.b16 %v3319
        %v4622 = vunpack.c.l.b16 %v3320
        %v4623 = vunpack.c.h.b16 %v3320
        %v4624 = vunpack.c.l.b16 %v3321
        %v4625 = vunpack.c.h.b16 %v3321
        %v4626 = vunpack.c.l.b16 %v3322
        %v4627 = vunpack.c.l.b16 %v3323
        %v4628 = vunpack.c.h.b16 %v3323
        %v4629 = vunpack.c.l.b16 %v3324
        %v4630 = vunpack.c.h.b16 %v3324
        %v4631 = vunpack.c.l.b16 %v3325
        %v4632 = vunpack.c.h.b16 %v3325
        %v4633 = vunpack.c.l.b16 %v3326
        %v4634 = vunpack.c.h.b16 %v3326
        %v4635 = vunpack.c.l.b16 %v3327
        %v4636 = vunpack.c.h.b16 %v3327
        %v4637 = vunpack.c.l.b16 %v3328
        %v4638 = vunpack.c.h.b16 %v3328
        %v4639 = vunpack.c.l.b16 %v3329
        %v4640 = vunpack.c.h.b16 %v3329
        %v4641 = vunpack.c.l.b16 %v3330
        %v4642 = vunpack.c.h.b16 %v3330
        %v4643 = vunpack.c.l.b16 %v3331
        %v4644 = vunpack.c.l.b16 %v3332
        %v4645 = vunpack.c.h.b16 %v3332
        %v4646 = vunpack.c.l.b16 %v3333
        %v4647 = vunpack.c.h.b16 %v3333
        %v4648 = vunpack.c.l.b16 %v3334
        %v4649 = vunpack.c.h.b16 %v3334
        %v4650 = vunpack.c.l.b16 %v3335
        %v4651 = vunpack.c.h.b16 %v3335
        %v4652 = vunpack.c.l.b16 %v3336
        %v4653 = vunpack.c.h.b16 %v3336
        %v4654 = vunpack.c.l.b16 %v3337
        %v4655 = vunpack.c.h.b16 %v3337
        %v4656 = vunpack.c.l.b16 %v3338
        %v4657 = vunpack.c.h.b16 %v3338
        %v4658 = vunpack.c.l.b16 %v3339
        %v4659 = vunpack.c.h.b16 %v3339
        %v4660 = vunpack.c.l.b16 %v3340
        %v4661 = vunpack.c.l.b16 %v3341
        %v4662 = vunpack.c.h.b16 %v3341
        %v4663 = vunpack.c.l.b16 %v3342
        %v4664 = vunpack.c.h.b16 %v3342
        %v4665 = vunpack.c.l.b16 %v3343
        %v4666 = vunpack.c.h.b16 %v3343
        %v4667 = vunpack.c.l.b16 %v3344
        %v4668 = vunpack.c.h.b16 %v3344
        %v4669 = vunpack.c.l.b16 %v3345
        %v4670 = vunpack.c.h.b16 %v3345
        %v4671 = vunpack.c.l.b16 %v3346
        %v4672 = vunpack.c.h.b16 %v3346
        %v4673 = vunpack.c.l.b16 %v3347
        %v4674 = vunpack.c.h.b16 %v3347
        %v4675 = vunpack.c.l.b16 %v3348
        %v4676 = vunpack.c.h.b16 %v3348
        %v4677 = vunpack.c.l.b16 %v3349
        %v4678 = vunpack.c.l.b16 %v3350
        %v4679 = vunpack.c.h.b16 %v3350
        %v4680 = vunpack.c.l.b16 %v3351
        %v4681 = vunpack.c.h.b16 %v3351
        %v4682 = vunpack.c.l.b16 %v3352
        %v4683 = vunpack.c.h.b16 %v3352
        %v4684 = vunpack.c.l.b16 %v3353
        %v4685 = vunpack.c.h.b16 %v3353
        %v4686 = vunpack.c.l.b16 %v3354
        %v4687 = vunpack.c.h.b16 %v3354
        %v4688 = vunpack.c.l.b16 %v3355
        %v4689 = vunpack.c.h.b16 %v3355
        %v4690 = vunpack.c.l.b16 %v3356
        %v4691 = vunpack.c.h.b16 %v3356
        %v4692 = vunpack.c.l.b16 %v3357
        %v4693 = vunpack.c.h.b16 %v3357
        %v4694 = vunpack.c.l.b16 %v3358
        %v4695 = vunpack.c.l.b16 %v3359
        %v4696 = vunpack.c.h.b16 %v3359
        %v4697 = vunpack.c.l.b16 %v3360
        %v4698 = vunpack.c.h.b16 %v3360
        %v4699 = vunpack.c.l.b16 %v3361
        %v4700 = vunpack.c.h.b16 %v3361
        %v4701 = vunpack.c.l.b16 %v3362
        %v4702 = vunpack.c.h.b16 %v3362
        %v4703 = vunpack.c.l.b16 %v3363
        %v4704 = vunpack.c.h.b16 %v3363
        %v4705 = vunpack.c.l.b16 %v3364
        %v4706 = vunpack.c.h.b16 %v3364
        %v4707 = vunpack.c.l.b16 %v3365
        %v4708 = vunpack.c.h.b16 %v3365
        %v4709 = vunpack.c.l.b16 %v3366
        %v4710 = vunpack.c.h.b16 %v3366
        %v4711 = vunpack.c.l.b16 %v3367
        %v4712 = vunpack.c.l.b16 %v3368
        %v4713 = vunpack.c.h.b16 %v3368
        %v4714 = vunpack.c.l.b16 %v3369
        %v4715 = vunpack.c.h.b16 %v3369
        %v4716 = vunpack.c.l.b16 %v3370
        %v4717 = vunpack.c.h.b16 %v3370
        %v4718 = vunpack.c.l.b16 %v3371
        %v4719 = vunpack.c.h.b16 %v3371
        %v4720 = vunpack.c.l.b16 %v3372
        %v4721 = vunpack.c.h.b16 %v3372
        %v4722 = vunpack.c.l.b16 %v3373
        %v4723 = vunpack.c.h.b16 %v3373
        %v4724 = vunpack.c.l.b16 %v3374
        %v4725 = vunpack.c.h.b16 %v3374
        %v4726 = vunpack.c.l.b16 %v3375
        %v4727 = vunpack.c.h.b16 %v3375
        %v4728 = vunpack.c.l.b16 %v3376
        %v4729 = vunpack.c.l.b16 %v3377
        %v4730 = vunpack.c.h.b16 %v3377
        %v4731 = vunpack.c.l.b16 %v3378
        %v4732 = vunpack.c.h.b16 %v3378
        %v4733 = vunpack.c.l.b16 %v3379
        %v4734 = vunpack.c.h.b16 %v3379
        %v4735 = vunpack.c.l.b16 %v3380
        %v4736 = vunpack.c.h.b16 %v3380
        %v4737 = vunpack.c.l.b16 %v3381
        %v4738 = vunpack.c.h.b16 %v3381
        %v4739 = vunpack.c.l.b16 %v3382
        %v4740 = vunpack.c.h.b16 %v3382
        %v4741 = vunpack.c.l.b16 %v3383
        %v4742 = vunpack.c.h.b16 %v3383
        %v4743 = vunpack.c.l.b16 %v3384
        %v4744 = vunpack.c.h.b16 %v3384
        %v4745 = vunpack.c.l.b16 %v3385
        %v4746 = vunpack.c.l.b16 %v3386
        %v4747 = vunpack.c.h.b16 %v3386
        %v4748 = vunpack.c.l.b16 %v3387
        %v4749 = vunpack.c.h.b16 %v3387
        %v4750 = vunpack.c.l.b16 %v3388
        %v4751 = vunpack.c.h.b16 %v3388
        %v4752 = vunpack.c.l.b16 %v3389
        %v4753 = vunpack.c.h.b16 %v3389
        %v4754 = vunpack.c.l.b16 %v3390
        %v4755 = vunpack.c.h.b16 %v3390
        %v4756 = vunpack.c.l.b16 %v3391
        %v4757 = vunpack.c.h.b16 %v3391
        %v4758 = vunpack.c.l.b16 %v3392
        %v4759 = vunpack.c.h.b16 %v3392
        %v4760 = vunpack.c.l.b16 %v3393
        %v4761 = vunpack.c.h.b16 %v3393
        %v4762 = vunpack.c.l.b16 %v3394
        %v4763 = vunpack.c.l.b16 %v3395
        %v4764 = vunpack.c.h.b16 %v3395
        %v4765 = vunpack.c.l.b16 %v3396
        %v4766 = vunpack.c.h.b16 %v3396
        %v4767 = vunpack.c.l.b16 %v3397
        %v4768 = vunpack.c.h.b16 %v3397
        %v4769 = vunpack.c.l.b16 %v3398
        %v4770 = vunpack.c.h.b16 %v3398
        %v4771 = vunpack.c.l.b16 %v3399
        %v4772 = vunpack.c.h.b16 %v3399
        %v4773 = vunpack.c.l.b16 %v3400
        %v4774 = vunpack.c.h.b16 %v3400
        %v4775 = vunpack.c.l.b16 %v3401
        %v4776 = vunpack.c.h.b16 %v3401
        %v4777 = vunpack.c.l.b16 %v3402
        %v4778 = vunpack.c.h.b16 %v3402
        %v4779 = vunpack.c.l.b16 %v3403
        %v4780 = vunpack.c.l.b16 %v3404
        %v4781 = vunpack.c.h.b16 %v3404
        %v4782 = vunpack.c.l.b16 %v3405
        %v4783 = vunpack.c.h.b16 %v3405
        %v4784 = vunpack.c.l.b16 %v3406
        %v4785 = vunpack.c.h.b16 %v3406
        %v4786 = vunpack.c.l.b16 %v3407
        %v4787 = vunpack.c.h.b16 %v3407
        %v4788 = vunpack.c.l.b16 %v3408
        %v4789 = vunpack.c.h.b16 %v3408
        %v4790 = vunpack.c.l.b16 %v3409
        %v4791 = vunpack.c.h.b16 %v3409
        %v4792 = vunpack.c.l.b16 %v3410
        %v4793 = vunpack.c.h.b16 %v3410
        %v4794 = vunpack.c.l.b16 %v3411
        %v4795 = vunpack.c.h.b16 %v3411
        %v4796 = vunpack.c.l.b16 %v3412
        %v4797 = vunpack.c.l.b16 %v3413
        %v4798 = vunpack.c.h.b16 %v3413
        %v4799 = vunpack.c.l.b16 %v3414
        %v4800 = vunpack.c.h.b16 %v3414
        %v4801 = vunpack.c.l.b16 %v3415
        %v4802 = vunpack.c.h.b16 %v3415
        %v4803 = vunpack.c.l.b16 %v3416
        %v4804 = vunpack.c.h.b16 %v3416
        %v4805 = vunpack.c.l.b16 %v3417
        %v4806 = vunpack.c.h.b16 %v3417
        %v4807 = vunpack.c.l.b16 %v3418
        %v4808 = vunpack.c.h.b16 %v3418
        %v4809 = vunpack.c.l.b16 %v3419
        %v4810 = vunpack.c.h.b16 %v3419
        %v4811 = vunpack.c.l.b16 %v3420
        %v4812 = vunpack.c.h.b16 %v3420
        %v4813 = vunpack.c.l.b16 %v3421
        %v4814 = vunpack.c.l.b16 %v3422
        %v4815 = vunpack.c.h.b16 %v3422
        %v4816 = vunpack.c.l.b16 %v3423
        %v4817 = vunpack.c.h.b16 %v3423
        %v4818 = vunpack.c.l.b16 %v3424
        %v4819 = vunpack.c.h.b16 %v3424
        %v4820 = vunpack.c.l.b16 %v3425
        %v4821 = vunpack.c.h.b16 %v3425
        %v4822 = vunpack.c.l.b16 %v3426
        %v4823 = vunpack.c.h.b16 %v3426
        %v4824 = vunpack.c.l.b16 %v3427
        %v4825 = vunpack.c.h.b16 %v3427
        %v4826 = vunpack.c.l.b16 %v3428
        %v4827 = vunpack.c.h.b16 %v3428
        %v4828 = vunpack.c.l.b16 %v3429
        %v4829 = vunpack.c.h.b16 %v3429
        %v4830 = vunpack.c.l.b16 %v3430
        %v4831 = vunpack.c.l.b16 %v3431
        %v4832 = vunpack.c.h.b16 %v3431
        %v4833 = vunpack.c.l.b16 %v3432
        %v4834 = vunpack.c.h.b16 %v3432
        %v4835 = vunpack.c.l.b16 %v3433
        %v4836 = vunpack.c.h.b16 %v3433
        %v4837 = vunpack.c.l.b16 %v3434
        %v4838 = vunpack.c.h.b16 %v3434
        %v4839 = vunpack.c.l.b16 %v3435
        %v4840 = vunpack.c.h.b16 %v3435
        %v4841 = vunpack.c.l.b16 %v3436
        %v4842 = vunpack.c.h.b16 %v3436
        %v4843 = vunpack.c.l.b16 %v3437
        %v4844 = vunpack.c.h.b16 %v3437
        %v4845 = vunpack.c.l.b16 %v3438
        %v4846 = vunpack.c.h.b16 %v3438
        %v4847 = vunpack.c.l.b16 %v3439
        %v4848 = vunpack.c.l.b16 %v3440
        %v4849 = vunpack.c.h.b16 %v3440
        %v4850 = vunpack.c.l.b16 %v3441
        %v4851 = vunpack.c.h.b16 %v3441
        %v4852 = vunpack.c.l.b16 %v3442
        %v4853 = vunpack.c.h.b16 %v3442
        %v4854 = vunpack.c.l.b16 %v3443
        %v4855 = vunpack.c.h.b16 %v3443
        %v4856 = vunpack.c.l.b16 %v3444
        %v4857 = vunpack.c.h.b16 %v3444
        %v4858 = vunpack.c.l.b16 %v3445
        %v4859 = vunpack.c.h.b16 %v3445
        %v4860 = vunpack.c.l.b16 %v3446
        %v4861 = vunpack.c.h.b16 %v3446
        %v4862 = vunpack.c.l.b16 %v3447
        %v4863 = vunpack.c.h.b16 %v3447
        %v4864 = vunpack.c.l.b16 %v3448
        %v4865 = vunpack.c.l.b16 %v3449
        %v4866 = vunpack.c.h.b16 %v3449
        %v4867 = vunpack.c.l.b16 %v3450
        %v4868 = vunpack.c.h.b16 %v3450
        %v4869 = vunpack.c.l.b16 %v3451
        %v4870 = vunpack.c.h.b16 %v3451
        %v4871 = vunpack.c.l.b16 %v3452
        %v4872 = vunpack.c.h.b16 %v3452
        %v4873 = vunpack.c.l.b16 %v3453
        %v4874 = vunpack.c.h.b16 %v3453
        %v4875 = vunpack.c.l.b16 %v3454
        %v4876 = vunpack.c.h.b16 %v3454
        %v4877 = vunpack.c.l.b16 %v3455
        %v4878 = vunpack.c.h.b16 %v3455
        %v4879 = vunpack.c.l.b16 %v3456
        %v4880 = vunpack.c.h.b16 %v3456
        %v4881 = vunpack.c.l.b16 %v3457
        %v4882 = vunpack.c.l.b16 %v3458
        %v4883 = vunpack.c.h.b16 %v3458
        %v4884 = vunpack.c.l.b16 %v3459
        %v4885 = vunpack.c.h.b16 %v3459
        %v4886 = vunpack.c.l.b16 %v3460
        %v4887 = vunpack.c.h.b16 %v3460
        %v4888 = vunpack.c.l.b16 %v3461
        %v4889 = vunpack.c.h.b16 %v3461
        %v4890 = vunpack.c.l.b16 %v3462
        %v4891 = vunpack.c.h.b16 %v3462
        %v4892 = vunpack.c.l.b16 %v3463
        %v4893 = vunpack.c.h.b16 %v3463
        %v4894 = vunpack.c.l.b16 %v3464
        %v4895 = vunpack.c.h.b16 %v3464
        %v4896 = vunpack.c.l.b16 %v3465
        %v4897 = vunpack.c.h.b16 %v3465
        %v4898 = vunpack.c.l.b16 %v3466
        %v4899 = vunpack.c.l.b16 %v3467
        %v4900 = vunpack.c.h.b16 %v3467
        %v4901 = vunpack.c.l.b16 %v3468
        %v4902 = vunpack.c.h.b16 %v3468
        %v4903 = vunpack.c.l.b16 %v3469
        %v4904 = vunpack.c.h.b16 %v3469
        %v4905 = vunpack.c.l.b16 %v3470
        %v4906 = vunpack.c.h.b16 %v3470
        %v4907 = vunpack.c.l.b16 %v3471
        %v4908 = vunpack.c.h.b16 %v3471
        %v4909 = vunpack.c.l.b16 %v3472
        %v4910 = vunpack.c.h.b16 %v3472
        %v4911 = vunpack.c.l.b16 %v3473
        %v4912 = vunpack.c.h.b16 %v3473
        %v4913 = vunpack.c.l.b16 %v3474
        %v4914 = vunpack.c.h.b16 %v3474
        %v4915 = vunpack.c.l.b16 %v3475
        %v4916 = vunpack.c.l.b16 %v3476
        %v4917 = vunpack.c.h.b16 %v3476
        %v4918 = vunpack.c.l.b16 %v3477
        %v4919 = vunpack.c.h.b16 %v3477
        %v4920 = vunpack.c.l.b16 %v3478
        %v4921 = vunpack.c.h.b16 %v3478
        %v4922 = vunpack.c.l.b16 %v3479
        %v4923 = vunpack.c.h.b16 %v3479
        %v4924 = vunpack.c.l.b16 %v3480
        %v4925 = vunpack.c.h.b16 %v3480
        %v4926 = vunpack.c.l.b16 %v3481
        %v4927 = vunpack.c.h.b16 %v3481
        %v4928 = vunpack.c.l.b16 %v3482
        %v4929 = vunpack.c.h.b16 %v3482
        %v4930 = vunpack.c.l.b16 %v3483
        %v4931 = vunpack.c.h.b16 %v3483
        %v4932 = vunpack.c.l.b16 %v3484
        %v4933 = vunpack.c.l.b16 %v3485
        %v4934 = vunpack.c.h.b16 %v3485
        %v4935 = vunpack.c.l.b16 %v3486
        %v4936 = vunpack.c.h.b16 %v3486
        %v4937 = vunpack.c.l.b16 %v3487
        %v4938 = vunpack.c.h.b16 %v3487
        %v4939 = vunpack.c.l.b16 %v3488
        %v4940 = vunpack.c.h.b16 %v3488
        %v4941 = vunpack.c.l.b16 %v3489
        %v4942 = vunpack.c.h.b16 %v3489
        %v4943 = vunpack.c.l.b16 %v3490
        %v4944 = vunpack.c.h.b16 %v3490
        %v4945 = vunpack.c.l.b16 %v3491
        %v4946 = vunpack.c.h.b16 %v3491
        %v4947 = vunpack.c.l.b16 %v3492
        %v4948 = vunpack.c.h.b16 %v3492
        %v4949 = vunpack.c.l.b16 %v3493
        %v4950 = vunpack.c.l.b16 %v3494
        %v4951 = vunpack.c.h.b16 %v3494
        %v4952 = vunpack.c.l.b16 %v3495
        %v4953 = vunpack.c.h.b16 %v3495
        %v4954 = vunpack.c.l.b16 %v3496
        %v4955 = vunpack.c.h.b16 %v3496
        %v4956 = vunpack.c.l.b16 %v3497
        %v4957 = vunpack.c.h.b16 %v3497
        %v4958 = vunpack.c.l.b16 %v3498
        %v4959 = vunpack.c.h.b16 %v3498
        %v4960 = vunpack.c.l.b16 %v3499
        %v4961 = vunpack.c.h.b16 %v3499
        %v4962 = vunpack.c.l.b16 %v3500
        %v4963 = vunpack.c.h.b16 %v3500
        %v4964 = vunpack.c.l.b16 %v3501
        %v4965 = vunpack.c.h.b16 %v3501
        %v4966 = vunpack.c.l.b16 %v3502
        %v4967 = vunpack.c.l.b16 %v3503
        %v4968 = vunpack.c.h.b16 %v3503
        %v4969 = vunpack.c.l.b16 %v3504
        %v4970 = vunpack.c.h.b16 %v3504
        %v4971 = vunpack.c.l.b16 %v3505
        %v4972 = vunpack.c.h.b16 %v3505
        %v4973 = vunpack.c.l.b16 %v3506
        %v4974 = vunpack.c.h.b16 %v3506
        %v4975 = vunpack.c.l.b16 %v3507
        %v4976 = vunpack.c.h.b16 %v3507
        %v4977 = vunpack.c.l.b16 %v3508
        %v4978 = vunpack.c.h.b16 %v3508
        %v4979 = vunpack.c.l.b16 %v3509
        %v4980 = vunpack.c.h.b16 %v3509
        %v4981 = vunpack.c.l.b16 %v3510
        %v4982 = vunpack.c.h.b16 %v3510
        %v4983 = vunpack.c.l.b16 %v3511
        %v4984 = vunpack.c.l.b16 %v3512
        %v4985 = vunpack.c.h.b16 %v3512
        %v4986 = vunpack.c.l.b16 %v3513
        %v4987 = vunpack.c.h.b16 %v3513
        %v4988 = vunpack.c.l.b16 %v3514
        %v4989 = vunpack.c.h.b16 %v3514
        %v4990 = vunpack.c.l.b16 %v3515
        %v4991 = vunpack.c.h.b16 %v3515
        %v4992 = vunpack.c.l.b16 %v3516
        %v4993 = vunpack.c.h.b16 %v3516
        %v4994 = vunpack.c.l.b16 %v3517
        %v4995 = vunpack.c.h.b16 %v3517
        %v4996 = vunpack.c.l.b16 %v3518
        %v4997 = vunpack.c.h.b16 %v3518
        %v4998 = vunpack.c.l.b16 %v3519
        %v4999 = vunpack.c.h.b16 %v3519
        %v5000 = vunpack.c.l.b16 %v3520
        %v5001 = vunpack.c.l.b16 %v3521
        %v5002 = vunpack.c.h.b16 %v3521
        %v5003 = vunpack.c.l.b16 %v3522
        %v5004 = vunpack.c.h.b16 %v3522
        %v5005 = vunpack.c.l.b16 %v3523
        %v5006 = vunpack.c.h.b16 %v3523
        %v5007 = vunpack.c.l.b16 %v3524
        %v5008 = vunpack.c.h.b16 %v3524
        %v5009 = vunpack.c.l.b16 %v3525
        %v5010 = vunpack.c.h.b16 %v3525
        %v5011 = vunpack.c.l.b16 %v3526
        %v5012 = vunpack.c.h.b16 %v3526
        %v5013 = vunpack.c.l.b16 %v3527
        %v5014 = vunpack.c.h.b16 %v3527
        %v5015 = vunpack.c.l.b16 %v3528
        %v5016 = vunpack.c.h.b16 %v3528
        %v5017 = vunpack.c.l.b16 %v3529
        %v5018 = vunpack.c.l.b16 %v3530
        %v5019 = vunpack.c.h.b16 %v3530
        %v5020 = vunpack.c.l.b16 %v3531
        %v5021 = vunpack.c.h.b16 %v3531
        %v5022 = vunpack.c.l.b16 %v3532
        %v5023 = vunpack.c.h.b16 %v3532
        %v5024 = vunpack.c.l.b16 %v3533
        %v5025 = vunpack.c.h.b16 %v3533
        %v5026 = vunpack.c.l.b16 %v3534
        %v5027 = vunpack.c.h.b16 %v3534
        %v5028 = vunpack.c.l.b16 %v3535
        %v5029 = vunpack.c.h.b16 %v3535
        %v5030 = vunpack.c.l.b16 %v3536
        %v5031 = vunpack.c.h.b16 %v3536
        %v5032 = vunpack.c.l.b16 %v3537
        %v5033 = vunpack.c.h.b16 %v3537
        %v5034 = vunpack.c.l.b16 %v3538
        %v5035 = vunpack.c.l.b16 %v3539
        %v5036 = vunpack.c.h.b16 %v3539
        %v5037 = vunpack.c.l.b16 %v3540
        %v5038 = vunpack.c.h.b16 %v3540
        %v5039 = vunpack.c.l.b16 %v3541
        %v5040 = vunpack.c.h.b16 %v3541
        %v5041 = vunpack.c.l.b16 %v3542
        %v5042 = vunpack.c.h.b16 %v3542
        %v5043 = vunpack.c.l.b16 %v3543
        %v5044 = vunpack.c.h.b16 %v3543
        %v5045 = vunpack.c.l.b16 %v3544
        %v5046 = vunpack.c.h.b16 %v3544
        %v5047 = vunpack.c.l.b16 %v3545
        %v5048 = vunpack.c.h.b16 %v3545
        %v5049 = vunpack.c.l.b16 %v3546
        %v5050 = vunpack.c.h.b16 %v3546
        %v5051 = vunpack.c.l.b16 %v3547
        %v5052 = vunpack.c.l.b16 %v3548
        %v5053 = vunpack.c.h.b16 %v3548
        %v5054 = vunpack.c.l.b16 %v3549
        %v5055 = vunpack.c.h.b16 %v3549
        %v5056 = vunpack.c.l.b16 %v3550
        %v5057 = vunpack.c.h.b16 %v3550
        %v5058 = vunpack.c.l.b16 %v3551
        %v5059 = vunpack.c.h.b16 %v3551
        %v5060 = vunpack.c.l.b16 %v3552
        %v5061 = vunpack.c.h.b16 %v3552
        %v5062 = vunpack.c.l.b16 %v3553
        %v5063 = vunpack.c.h.b16 %v3553
        %v5064 = vunpack.c.l.b16 %v3554
        %v5065 = vunpack.c.h.b16 %v3554
        %v5066 = vunpack.c.l.b16 %v3555
        %v5067 = vunpack.c.h.b16 %v3555
        %v5068 = vunpack.c.l.b16 %v3556
        %v5069 = vunpack.c.l.b16 %v3557
        %v5070 = vunpack.c.h.b16 %v3557
        %v5071 = vunpack.c.l.b16 %v3558
        %v5072 = vunpack.c.h.b16 %v3558
        %v5073 = vunpack.c.l.b16 %v3559
        %v5074 = vunpack.c.h.b16 %v3559
        %v5075 = vunpack.c.l.b16 %v3560
        %v5076 = vunpack.c.h.b16 %v3560
        %v5077 = vunpack.c.l.b16 %v3561
        %v5078 = vunpack.c.h.b16 %v3561
        %v5079 = vunpack.c.l.b16 %v3562
        %v5080 = vunpack.c.h.b16 %v3562
        %v5081 = vunpack.c.l.b16 %v3563
        %v5082 = vunpack.c.h.b16 %v3563
        %v5083 = vunpack.c.l.b16 %v3564
        %v5084 = vunpack.c.h.b16 %v3564
        %v5085 = vunpack.c.l.b16 %v3565
        %v5086 = vunpack.c.l.b16 %v3566
        %v5087 = vunpack.c.h.b16 %v3566
        %v5088 = vunpack.c.l.b16 %v3567
        %v5089 = vunpack.c.h.b16 %v3567
        %v5090 = vunpack.c.l.b16 %v3568
        %v5091 = vunpack.c.h.b16 %v3568
        %v5092 = vunpack.c.l.b16 %v3569
        %v5093 = vunpack.c.h.b16 %v3569
        %v5094 = vunpack.c.l.b16 %v3570
        %v5095 = vunpack.c.h.b16 %v3570
        %v5096 = vunpack.c.l.b16 %v3571
        %v5097 = vunpack.c.h.b16 %v3571
        %v5098 = vunpack.c.l.b16 %v3572
        %v5099 = vunpack.c.h.b16 %v3572
        %v5100 = vunpack.c.l.b16 %v3573
        %v5101 = vunpack.c.h.b16 %v3573
        %v5102 = vunpack.c.l.b16 %v3574
        %v5103 = vunpack.c.l.b16 %v3575
        %v5104 = vunpack.c.h.b16 %v3575
        %v5105 = vunpack.c.l.b16 %v3576
        %v5106 = vunpack.c.h.b16 %v3576
        %v5107 = vunpack.c.l.b16 %v3577
        %v5108 = vunpack.c.h.b16 %v3577
        %v5109 = vunpack.c.l.b16 %v3578
        %v5110 = vunpack.c.h.b16 %v3578
        %v5111 = vunpack.c.l.b16 %v3579
        %v5112 = vunpack.c.h.b16 %v3579
        %v5113 = vunpack.c.l.b16 %v3580
        %v5114 = vunpack.c.h.b16 %v3580
        %v5115 = vunpack.c.l.b16 %v3581
        %v5116 = vunpack.c.h.b16 %v3581
        %v5117 = vunpack.c.l.b16 %v3582
        %v5118 = vunpack.c.h.b16 %v3582
        %v5119 = vunpack.c.l.b16 %v3583
        %v5120 = vunpack.c.l.b16 %v3584
        %v5121 = vunpack.c.h.b16 %v3584
        %v5122 = vunpack.c.l.b16 %v3585
        %v5123 = vunpack.c.h.b16 %v3585
        %v5124 = vunpack.c.l.b16 %v3586
        %v5125 = vunpack.c.h.b16 %v3586
        %v5126 = vunpack.c.l.b16 %v3587
        %v5127 = vunpack.c.h.b16 %v3587
        %v5128 = vunpack.c.l.b16 %v3588
        %v5129 = vunpack.c.h.b16 %v3588
        %v5130 = vunpack.c.l.b16 %v3589
        %v5131 = vunpack.c.h.b16 %v3589
        %v5132 = vunpack.c.l.b16 %v3590
        %v5133 = vunpack.c.h.b16 %v3590
        %v5134 = vunpack.c.l.b16 %v3591
        %v5135 = vunpack.c.h.b16 %v3591
        %v5136 = vunpack.c.l.b16 %v3592
        %v5137 = vunpack.c.l.b16 %v3593
        %v5138 = vunpack.c.h.b16 %v3593
        %v5139 = vunpack.c.l.b16 %v3594
        %v5140 = vunpack.c.h.b16 %v3594
        %v5141 = vunpack.c.l.b16 %v3595
        %v5142 = vunpack.c.h.b16 %v3595
        %v5143 = vunpack.c.l.b16 %v3596
        %v5144 = vunpack.c.h.b16 %v3596
        %v5145 = vunpack.c.l.b16 %v3597
        %v5146 = vunpack.c.h.b16 %v3597
        %v5147 = vunpack.c.l.b16 %v3598
        %v5148 = vunpack.c.h.b16 %v3598
        %v5149 = vunpack.c.l.b16 %v3599
        %v5150 = vunpack.c.h.b16 %v3599
        %v5151 = vunpack.c.l.b16 %v3600
        %v5152 = vunpack.c.h.b16 %v3600
        %v5153 = vunpack.c.l.b16 %v3601
        %v5154 = vunpack.c.l.b16 %v3602
        %v5155 = vunpack.c.h.b16 %v3602
        %v5156 = vunpack.c.l.b16 %v3603
        %v5157 = vunpack.c.h.b16 %v3603
        %v5158 = vunpack.c.l.b16 %v3604
        %v5159 = vunpack.c.h.b16 %v3604
        %v5160 = vunpack.c.l.b16 %v3605
        %v5161 = vunpack.c.h.b16 %v3605
        %v5162 = vunpack.c.l.b16 %v3606
        %v5163 = vunpack.c.h.b16 %v3606
        %v5164 = vunpack.c.l.b16 %v3607
        %v5165 = vunpack.c.h.b16 %v3607
        %v5166 = vunpack.c.l.b16 %v3608
        %v5167 = vunpack.c.h.b16 %v3608
        %v5168 = vunpack.c.l.b16 %v3609
        %v5169 = vunpack.c.h.b16 %v3609
        %v5170 = vunpack.c.l.b16 %v3610
        %v5171 = vunpack.c.l.b16 %v3611
        %v5172 = vunpack.c.h.b16 %v3611
        %v5173 = vunpack.c.l.b16 %v3612
        %v5174 = vunpack.c.h.b16 %v3612
        %v5175 = vunpack.c.l.b16 %v3613
        %v5176 = vunpack.c.h.b16 %v3613
        %v5177 = vunpack.c.l.b16 %v3614
        %v5178 = vunpack.c.h.b16 %v3614
        %v5179 = vunpack.c.l.b16 %v3615
        %v5180 = vunpack.c.h.b16 %v3615
        %v5181 = vunpack.c.l.b16 %v3616
        %v5182 = vunpack.c.h.b16 %v3616
        %v5183 = vunpack.c.l.b16 %v3617
        %v5184 = vunpack.c.h.b16 %v3617
        %v5185 = vunpack.c.l.b16 %v3618
        %v5186 = vunpack.c.h.b16 %v3618
        %v5187 = vunpack.c.l.b16 %v3619
        %v5188 = vunpack.c.l.b16 %v3620
        %v5189 = vunpack.c.h.b16 %v3620
        %v5190 = vunpack.c.l.b16 %v3621
        %v5191 = vunpack.c.h.b16 %v3621
        %v5192 = vunpack.c.l.b16 %v3622
        %v5193 = vunpack.c.h.b16 %v3622
        %v5194 = vunpack.c.l.b16 %v3623
        %v5195 = vunpack.c.h.b16 %v3623
        %v5196 = vunpack.c.l.b16 %v3624
        %v5197 = vunpack.c.h.b16 %v3624
        %v5198 = vunpack.c.l.b16 %v3625
        %v5199 = vunpack.c.h.b16 %v3625
        %v5200 = vunpack.c.l.b16 %v3626
        %v5201 = vunpack.c.h.b16 %v3626
        %v5202 = vunpack.c.l.b16 %v3627
        %v5203 = vunpack.c.h.b16 %v3627
        %v5204 = vunpack.c.l.b16 %v3628
        %v5205 = vunpack.c.l.b16 %v3629
        %v5206 = vunpack.c.h.b16 %v3629
        %v5207 = vunpack.c.l.b16 %v3630
        %v5208 = vunpack.c.h.b16 %v3630
        %v5209 = vunpack.c.l.b16 %v3631
        %v5210 = vunpack.c.h.b16 %v3631
        %v5211 = vunpack.c.l.b16 %v3632
        %v5212 = vunpack.c.h.b16 %v3632
        %v5213 = vunpack.c.l.b16 %v3633
        %v5214 = vunpack.c.h.b16 %v3633
        %v5215 = vunpack.c.l.b16 %v3634
        %v5216 = vunpack.c.h.b16 %v3634
        %v5217 = vunpack.c.l.b16 %v3635
        %v5218 = vunpack.c.h.b16 %v3635
        %v5219 = vunpack.c.l.b16 %v3636
        %v5220 = vunpack.c.h.b16 %v3636
        %v5221 = vunpack.c.l.b16 %v3637
        %v5222 = vunpack.c.l.b16 %v3638
        %v5223 = vunpack.c.h.b16 %v3638
        %v5224 = vunpack.c.l.b16 %v3639
        %v5225 = vunpack.c.h.b16 %v3639
        %v5226 = vunpack.c.l.b16 %v3640
        %v5227 = vunpack.c.h.b16 %v3640
        %v5228 = vunpack.c.l.b16 %v3641
        %v5229 = vunpack.c.h.b16 %v3641
        %v5230 = vunpack.c.l.b16 %v3642
        %v5231 = vunpack.c.h.b16 %v3642
        %v5232 = vunpack.c.l.b16 %v3643
        %v5233 = vunpack.c.h.b16 %v3643
        %v5234 = vunpack.c.l.b16 %v3644
        %v5235 = vunpack.c.h.b16 %v3644
        %v5236 = vunpack.c.l.b16 %v3645
        %v5237 = vunpack.c.h.b16 %v3645
        %v5238 = vunpack.c.l.b16 %v3646
        %v5239 = vunpack.c.l.b16 %v3647
        %v5240 = vunpack.c.h.b16 %v3647
        %v5241 = vunpack.c.l.b16 %v3648
        %v5242 = vunpack.c.h.b16 %v3648
        %v5243 = vunpack.c.l.b16 %v3649
        %v5244 = vunpack.c.h.b16 %v3649
        %v5245 = vunpack.c.l.b16 %v3650
        %v5246 = vunpack.c.h.b16 %v3650
        %v5247 = vunpack.c.l.b16 %v3651
        %v5248 = vunpack.c.h.b16 %v3651
        %v5249 = vunpack.c.l.b16 %v3652
        %v5250 = vunpack.c.h.b16 %v3652
        %v5251 = vunpack.c.l.b16 %v3653
        %v5252 = vunpack.c.h.b16 %v3653
        %v5253 = vunpack.c.l.b16 %v3654
        %v5254 = vunpack.c.h.b16 %v3654
        %v5255 = vunpack.c.l.b16 %v3655
        %v5256 = vunpack.c.l.b16 %v3656
        %v5257 = vunpack.c.h.b16 %v3656
        %v5258 = vunpack.c.l.b16 %v3657
        %v5259 = vunpack.c.h.b16 %v3657
        %v5260 = vunpack.c.l.b16 %v3658
        %v5261 = vunpack.c.h.b16 %v3658
        %v5262 = vunpack.c.l.b16 %v3659
        %v5263 = vunpack.c.h.b16 %v3659
        %v5264 = vunpack.c.l.b16 %v3660
        %v5265 = vunpack.c.h.b16 %v3660
        %v5266 = vunpack.c.l.b16 %v3661
        %v5267 = vunpack.c.h.b16 %v3661
        %v5268 = vunpack.c.l.b16 %v3662
        %v5269 = vunpack.c.h.b16 %v3662
        %v5270 = vunpack.c.l.b16 %v3663
        %v5271 = vunpack.c.h.b16 %v3663
        %v5272 = vunpack.c.l.b16 %v3664
        %v5273 = vunpack.c.l.b16 %v3665
        %v5274 = vunpack.c.h.b16 %v3665
        %v5275 = vunpack.c.l.b16 %v3666
        %v5276 = vunpack.c.h.b16 %v3666
        %v5277 = vunpack.c.l.b16 %v3667
        %v5278 = vunpack.c.h.b16 %v3667
        %v5279 = vunpack.c.l.b16 %v3668
        %v5280 = vunpack.c.h.b16 %v3668
        %v5281 = vunpack.c.l.b16 %v3669
        %v5282 = vunpack.c.h.b16 %v3669
        %v5283 = vunpack.c.l.b16 %v3670
        %v5284 = vunpack.c.h.b16 %v3670
        %v5285 = vunpack.c.l.b16 %v3671
        %v5286 = vunpack.c.h.b16 %v3671
        %v5287 = vunpack.c.l.b16 %v3672
        %v5288 = vunpack.c.h.b16 %v3672
        %v5289 = vunpack.c.l.b16 %v3673
        %v5290 = vunpack.c.l.b16 %v3674
        %v5291 = vunpack.c.h.b16 %v3674
        %v5292 = vunpack.c.l.b16 %v3675
        %v5293 = vunpack.c.h.b16 %v3675
        %v5294 = vunpack.c.l.b16 %v3676
        %v5295 = vunpack.c.h.b16 %v3676
        %v5296 = vunpack.c.l.b16 %v3677
        %v5297 = vunpack.c.h.b16 %v3677
        %v5298 = vunpack.c.l.b16 %v3678
        %v5299 = vunpack.c.h.b16 %v3678
        %v5300 = vunpack.c.l.b16 %v3679
        %v5301 = vunpack.c.h.b16 %v3679
        %v5302 = vunpack.c.l.b16 %v3680
        %v5303 = vunpack.c.h.b16 %v3680
        %v5304 = vunpack.c.l.b16 %v3681
        %v5305 = vunpack.c.h.b16 %v3681
        %v5306 = vunpack.c.l.b16 %v3682
        %v5307 = vunpack.c.l.b16 %v3683
        %v5308 = vunpack.c.h.b16 %v3683
        %v5309 = vunpack.c.l.b16 %v3684
        %v5310 = vunpack.c.h.b16 %v3684
        %v5311 = vunpack.c.l.b16 %v3685
        %v5312 = vunpack.c.h.b16 %v3685
        %v5313 = vunpack.c.l.b16 %v3686
        %v5314 = vunpack.c.h.b16 %v3686
        %v5315 = vunpack.c.l.b16 %v3687
        %v5316 = vunpack.c.h.b16 %v3687
        %v5317 = vunpack.c.l.b16 %v3688
        %v5318 = vunpack.c.h.b16 %v3688
        %v5319 = vunpack.c.l.b16 %v3689
        %v5320 = vunpack.c.h.b16 %v3689
        %v5321 = vunpack.c.l.b16 %v3690
        %v5322 = vunpack.c.h.b16 %v3690
        %v5323 = vunpack.c.l.b16 %v3691
        %v5324 = vunpack.c.l.b16 %v3692
        %v5325 = vunpack.c.h.b16 %v3692
        %v5326 = vunpack.c.l.b16 %v3693
        %v5327 = vunpack.c.h.b16 %v3693
        %v5328 = vunpack.c.l.b16 %v3694
        %v5329 = vunpack.c.h.b16 %v3694
        %v5330 = vunpack.c.l.b16 %v3695
        %v5331 = vunpack.c.h.b16 %v3695
        %v5332 = vunpack.c.l.b16 %v3696
        %v5333 = vunpack.c.h.b16 %v3696
        %v5334 = vunpack.c.l.b16 %v3697
        %v5335 = vunpack.c.h.b16 %v3697
        %v5336 = vunpack.c.l.b16 %v3698
        %v5337 = vunpack.c.h.b16 %v3698
        %v5338 = vunpack.c.l.b16 %v3699
        %v5339 = vunpack.c.h.b16 %v3699
        %v5340 = vunpack.c.l.b16 %v3700
        %v5341 = vunpack.c.l.b16 %v3701
        %v5342 = vunpack.c.h.b16 %v3701
        %v5343 = vunpack.c.l.b16 %v3702
        %v5344 = vunpack.c.h.b16 %v3702
        %v5345 = vunpack.c.l.b16 %v3703
        %v5346 = vunpack.c.h.b16 %v3703
        %v5347 = vunpack.c.l.b16 %v3704
        %v5348 = vunpack.c.h.b16 %v3704
        %v5349 = vunpack.c.l.b16 %v3705
        %v5350 = vunpack.c.h.b16 %v3705
        %v5351 = vunpack.c.l.b16 %v3706
        %v5352 = vunpack.c.h.b16 %v3706
        %v5353 = vunpack.c.l.b16 %v3707
        %v5354 = vunpack.c.h.b16 %v3707
        %v5355 = vunpack.c.l.b16 %v3708
        %v5356 = vunpack.c.h.b16 %v3708
        %v5357 = vunpack.c.l.b16 %v3709
        %v5358 = vunpack.c.l.b16 %v3710
        %v5359 = vunpack.c.h.b16 %v3710
        %v5360 = vunpack.c.l.b16 %v3711
        %v5361 = vunpack.c.h.b16 %v3711
        %v5362 = vunpack.c.l.b16 %v3712
        %v5363 = vunpack.c.h.b16 %v3712
        %v5364 = vunpack.c.l.b16 %v3713
        %v5365 = vunpack.c.h.b16 %v3713
        %v5366 = vunpack.c.l.b16 %v3714
        %v5367 = vunpack.c.h.b16 %v3714
        %v5368 = vunpack.c.l.b16 %v3715
        %v5369 = vunpack.c.h.b16 %v3715
        %v5370 = vunpack.c.l.b16 %v3716
        %v5371 = vunpack.c.h.b16 %v3716
        %v5372 = vunpack.c.l.b16 %v3717
        %v5373 = vunpack.c.h.b16 %v3717
        %v5374 = vunpack.c.l.b16 %v3718
        %v5375 = vunpack.c.l.b16 %v3719
        %v5376 = vunpack.c.h.b16 %v3719
        %v5377 = vunpack.c.l.b16 %v3720
        %v5378 = vunpack.c.h.b16 %v3720
        %v5379 = vunpack.c.l.b16 %v3721
        %v5380 = vunpack.c.h.b16 %v3721
        %v5381 = vunpack.c.l.b16 %v3722
        %v5382 = vunpack.c.h.b16 %v3722
        %v5383 = vunpack.c.l.b16 %v3723
        %v5384 = vunpack.c.h.b16 %v3723
        %v5385 = vunpack.c.l.b16 %v3724
        %v5386 = vunpack.c.h.b16 %v3724
        %v5387 = vunpack.c.l.b16 %v3725
        %v5388 = vunpack.c.h.b16 %v3725
        %v5389 = vunpack.c.l.b16 %v3726
        %v5390 = vunpack.c.h.b16 %v3726
        %v5391 = vunpack.c.l.b16 %v3727
        %v5392 = vunpack.c.l.b16 %v3728
        %v5393 = vunpack.c.h.b16 %v3728
        %v5394 = vunpack.c.l.b16 %v3729
        %v5395 = vunpack.c.h.b16 %v3729
        %v5396 = vunpack.c.l.b16 %v3730
        %v5397 = vunpack.c.h.b16 %v3730
        %v5398 = vunpack.c.l.b16 %v3731
        %v5399 = vunpack.c.h.b16 %v3731
        %v5400 = vunpack.c.l.b16 %v3732
        %v5401 = vunpack.c.h.b16 %v3732
        %v5402 = vunpack.c.l.b16 %v3733
        %v5403 = vunpack.c.h.b16 %v3733
        %v5404 = vunpack.c.l.b16 %v3734
        %v5405 = vunpack.c.h.b16 %v3734
        %v5406 = vunpack.c.l.b16 %v3735
        %v5407 = vunpack.c.h.b16 %v3735
        %v5408 = vunpack.c.l.b16 %v3736
        %v5409 = vunpack.c.l.b16 %v3737
        %v5410 = vunpack.c.h.b16 %v3737
        %v5411 = vunpack.c.l.b16 %v3738
        %v5412 = vunpack.c.h.b16 %v3738
        %v5413 = vunpack.c.l.b16 %v3739
        %v5414 = vunpack.c.h.b16 %v3739
        %v5415 = vunpack.c.l.b16 %v3740
        %v5416 = vunpack.c.h.b16 %v3740
        %v5417 = vunpack.c.l.b16 %v3741
        %v5418 = vunpack.c.h.b16 %v3741
        %v5419 = vunpack.c.l.b16 %v3742
        %v5420 = vunpack.c.h.b16 %v3742
        %v5421 = vunpack.c.l.b16 %v3743
        %v5422 = vunpack.c.h.b16 %v3743
        %v5423 = vunpack.c.l.b16 %v3744
        %v5424 = vunpack.c.h.b16 %v3744
        %v5425 = vunpack.c.l.b16 %v3745
        %v5426 = vunpack.c.l.b16 %v3746
        %v5427 = vunpack.c.h.b16 %v3746
        %v5428 = vunpack.c.l.b16 %v3747
        %v5429 = vunpack.c.h.b16 %v3747
        %v5430 = vunpack.c.l.b16 %v3748
        %v5431 = vunpack.c.h.b16 %v3748
        %v5432 = vunpack.c.l.b16 %v3749
        %v5433 = vunpack.c.h.b16 %v3749
        %v5434 = vunpack.c.l.b16 %v3750
        %v5435 = vunpack.c.h.b16 %v3750
        %v5436 = vunpack.c.l.b16 %v3751
        %v5437 = vunpack.c.h.b16 %v3751
        %v5438 = vunpack.c.l.b16 %v3752
        %v5439 = vunpack.c.h.b16 %v3752
        %v5440 = vunpack.c.l.b16 %v3753
        %v5441 = vunpack.c.h.b16 %v3753
        %v5442 = vunpack.c.l.b16 %v3754
        %v5443 = vunpack.c.l.b16 %v3755
        %v5444 = vunpack.c.h.b16 %v3755
        %v5445 = vunpack.c.l.b16 %v3756
        %v5446 = vunpack.c.h.b16 %v3756
        %v5447 = vunpack.c.l.b16 %v3757
        %v5448 = vunpack.c.h.b16 %v3757
        %v5449 = vunpack.c.l.b16 %v3758
        %v5450 = vunpack.c.h.b16 %v3758
        %v5451 = vunpack.c.l.b16 %v3759
        %v5452 = vunpack.c.h.b16 %v3759
        %v5453 = vunpack.c.l.b16 %v3760
        %v5454 = vunpack.c.h.b16 %v3760
        %v5455 = vunpack.c.l.b16 %v3761
        %v5456 = vunpack.c.h.b16 %v3761
        %v5457 = vunpack.c.l.b16 %v3762
        %v5458 = vunpack.c.h.b16 %v3762
        %v5459 = vunpack.c.l.b16 %v3763
        %v5460 = vunpack.c.l.b16 %v3764
        %v5461 = vunpack.c.h.b16 %v3764
        %v5462 = vunpack.c.l.b16 %v3765
        %v5463 = vunpack.c.h.b16 %v3765
        %v5464 = vunpack.c.l.b16 %v3766
        %v5465 = vunpack.c.h.b16 %v3766
        %v5466 = vunpack.c.l.b16 %v3767
        %v5467 = vunpack.c.h.b16 %v3767
        %v5468 = vunpack.c.l.b16 %v3768
        %v5469 = vunpack.c.h.b16 %v3768
        %v5470 = vunpack.c.l.b16 %v3769
        %v5471 = vunpack.c.h.b16 %v3769
        %v5472 = vunpack.c.l.b16 %v3770
        %v5473 = vunpack.c.h.b16 %v3770
        %v5474 = vunpack.c.l.b16 %v3771
        %v5475 = vunpack.c.h.b16 %v3771
        %v5476 = vunpack.c.l.b16 %v3772
        %v5477 = vpack.c.b16 %v4406, %v4389
        %v5478 = vpack.c.b16 %v4407, %v4390
        %v5479 = vpack.c.b16 %v4408, %v4391
        %v5480 = vpack.c.b16 %v4409, %v4392
        %v5481 = vpack.c.b16 %v4410, %v4393
        %v5482 = vpack.c.b16 %v4411, %v4394
        %v5483 = vpack.c.b16 %v4412, %v4395
        %v5484 = vpack.c.b16 %v4413, %v4396
        %v5485 = vpack.c.b16 %v4414, %v4397
        %v5486 = vpack.c.b16 %v4415, %v4398
        %v5487 = vpack.c.b16 %v4416, %v4399
        %v5488 = vpack.c.b16 %v4417, %v4400
        %v5489 = vpack.c.b16 %v4418, %v4401
        %v5490 = vpack.c.b16 %v4419, %v4402
        %v5491 = vpack.c.b16 %v4420, %v4403
        %v5492 = vpack.c.b16 %v4421, %v4404
        %v5493 = vpack.c.b16 %v4422, %v4405
        %v5494 = vpack.c.b16 %v4440, %v4423
        %v5495 = vpack.c.b16 %v4441, %v4424
        %v5496 = vpack.c.b16 %v4442, %v4425
        %v5497 = vpack.c.b16 %v4443, %v4426
        %v5498 = vpack.c.b16 %v4444, %v4427
        %v5499 = vpack.c.b16 %v4445, %v4428
        %v5500 = vpack.c.b16 %v4446, %v4429
        %v5501 = vpack.c.b16 %v4447, %v4430
        %v5502 = vpack.c.b16 %v4448, %v4431
        %v5503 = vpack.c.b16 %v4449, %v4432
        %v5504 = vpack.c.b16 %v4450, %v4433
        %v5505 = vpack.c.b16 %v4451, %v4434
        %v5506 = vpack.c.b16 %v4452, %v4435
        %v5507 = vpack.c.b16 %v4453, %v4436
        %v5508 = vpack.c.b16 %v4454, %v4437
        %v5509 = vpack.c.b16 %v4455, %v4438
        %v5510 = vpack.c.b16 %v4456, %v4439
        %v5511 = vpack.c.b16 %v4474, %v4457
        %v5512 = vpack.c.b16 %v4475, %v4458
        %v5513 = vpack.c.b16 %v4476, %v4459
        %v5514 = vpack.c.b16 %v4477, %v4460
        %v5515 = vpack.c.b16 %v4478, %v4461
        %v5516 = vpack.c.b16 %v4479, %v4462
        %v5517 = vpack.c.b16 %v4480, %v4463
        %v5518 = vpack.c.b16 %v4481, %v4464
        %v5519 = vpack.c.b16 %v4482, %v4465
        %v5520 = vpack.c.b16 %v4483, %v4466
        %v5521 = vpack.c.b16 %v4484, %v4467
        %v5522 = vpack.c.b16 %v4485, %v4468
        %v5523 = vpack.c.b16 %v4486, %v4469
        %v5524 = vpack.c.b16 %v4487, %v4470
        %v5525 = vpack.c.b16 %v4488, %v4471
        %v5526 = vpack.c.b16 %v4489, %v4472
        %v5527 = vpack.c.b16 %v4490, %v4473
        %v5528 = vpack.c.b16 %v4508, %v4491
        %v5529 = vpack.c.b16 %v4509, %v4492
        %v5530 = vpack.c.b16 %v4510, %v4493
        %v5531 = vpack.c.b16 %v4511, %v4494
        %v5532 = vpack.c.b16 %v4512, %v4495
        %v5533 = vpack.c.b16 %v4513, %v4496
        %v5534 = vpack.c.b16 %v4514, %v4497
        %v5535 = vpack.c.b16 %v4515, %v4498
        %v5536 = vpack.c.b16 %v4516, %v4499
        %v5537 = vpack.c.b16 %v4517, %v4500
        %v5538 = vpack.c.b16 %v4518, %v4501
        %v5539 = vpack.c.b16 %v4519, %v4502
        %v5540 = vpack.c.b16 %v4520, %v4503
        %v5541 = vpack.c.b16 %v4521, %v4504
        %v5542 = vpack.c.b16 %v4522, %v4505
        %v5543 = vpack.c.b16 %v4523, %v4506
        %v5544 = vpack.c.b16 %v4524, %v4507
        %v5545 = vpack.c.b16 %v4542, %v4525
        %v5546 = vpack.c.b16 %v4543, %v4526
        %v5547 = vpack.c.b16 %v4544, %v4527
        %v5548 = vpack.c.b16 %v4545, %v4528
        %v5549 = vpack.c.b16 %v4546, %v4529
        %v5550 = vpack.c.b16 %v4547, %v4530
        %v5551 = vpack.c.b16 %v4548, %v4531
        %v5552 = vpack.c.b16 %v4549, %v4532
        %v5553 = vpack.c.b16 %v4550, %v4533
        %v5554 = vpack.c.b16 %v4551, %v4534
        %v5555 = vpack.c.b16 %v4552, %v4535
        %v5556 = vpack.c.b16 %v4553, %v4536
        %v5557 = vpack.c.b16 %v4554, %v4537
        %v5558 = vpack.c.b16 %v4555, %v4538
        %v5559 = vpack.c.b16 %v4556, %v4539
        %v5560 = vpack.c.b16 %v4557, %v4540
        %v5561 = vpack.c.b16 %v4558, %v4541
        %v5562 = vpack.c.b16 %v4576, %v4559
        %v5563 = vpack.c.b16 %v4577, %v4560
        %v5564 = vpack.c.b16 %v4578, %v4561
        %v5565 = vpack.c.b16 %v4579, %v4562
        %v5566 = vpack.c.b16 %v4580, %v4563
        %v5567 = vpack.c.b16 %v4581, %v4564
        %v5568 = vpack.c.b16 %v4582, %v4565
        %v5569 = vpack.c.b16 %v4583, %v4566
        %v5570 = vpack.c.b16 %v4584, %v4567
        %v5571 = vpack.c.b16 %v4585, %v4568
        %v5572 = vpack.c.b16 %v4586, %v4569
        %v5573 = vpack.c.b16 %v4587, %v4570
        %v5574 = vpack.c.b16 %v4588, %v4571
        %v5575 = vpack.c.b16 %v4589, %v4572
        %v5576 = vpack.c.b16 %v4590, %v4573
        %v5577 = vpack.c.b16 %v4591, %v4574
        %v5578 = vpack.c.b16 %v4592, %v4575
        %v5579 = vpack.c.b16 %v4610, %v4593
        %v5580 = vpack.c.b16 %v4611, %v4594
        %v5581 = vpack.c.b16 %v4612, %v4595
        %v5582 = vpack.c.b16 %v4613, %v4596
        %v5583 = vpack.c.b16 %v4614, %v4597
        %v5584 = vpack.c.b16 %v4615, %v4598
        %v5585 = vpack.c.b16 %v4616, %v4599
        %v5586 = vpack.c.b16 %v4617, %v4600
        %v5587 = vpack.c.b16 %v4618, %v4601
        %v5588 = vpack.c.b16 %v4619, %v4602
        %v5589 = vpack.c.b16 %v4620, %v4603
        %v5590 = vpack.c.b16 %v4621, %v4604
        %v5591 = vpack.c.b16 %v4622, %v4605
        %v5592 = vpack.c.b16 %v4623, %v4606
        %v5593 = vpack.c.b16 %v4624, %v4607
        %v5594 = vpack.c.b16 %v4625, %v4608
        %v5595 = vpack.c.b16 %v4626, %v4609
        %v5596 = vpack.c.b16 %v4644, %v4627
        %v5597 = vpack.c.b16 %v4645, %v4628
        %v5598 = vpack.c.b16 %v4646, %v4629
        %v5599 = vpack.c.b16 %v4647, %v4630
        %v5600 = vpack.c.b16 %v4648, %v4631
        %v5601 = vpack.c.b16 %v4649, %v4632
        %v5602 = vpack.c.b16 %v4650, %v4633
        %v5603 = vpack.c.b16 %v4651, %v4634
        %v5604 = vpack.c.b16 %v4652, %v4635
        %v5605 = vpack.c.b16 %v4653, %v4636
        %v5606 = vpack.c.b16 %v4654, %v4637
        %v5607 = vpack.c.b16 %v4655, %v4638
        %v5608 = vpack.c.b16 %v4656, %v4639
        %v5609 = vpack.c.b16 %v4657, %v4640
        %v5610 = vpack.c.b16 %v4658, %v4641
        %v5611 = vpack.c.b16 %v4659, %v4642
        %v5612 = vpack.c.b16 %v4660, %v4643
        %v5613 = vpack.c.b16 %v4678, %v4661
        %v5614 = vpack.c.b16 %v4679, %v4662
        %v5615 = vpack.c.b16 %v4680, %v4663
        %v5616 = vpack.c.b16 %v4681, %v4664
        %v5617 = vpack.c.b16 %v4682, %v4665
        %v5618 = vpack.c.b16 %v4683, %v4666
        %v5619 = vpack.c.b16 %v4684, %v4667
        %v5620 = vpack.c.b16 %v4685, %v4668
        %v5621 = vpack.c.b16 %v4686, %v4669
        %v5622 = vpack.c.b16 %v4687, %v4670
        %v5623 = vpack.c.b16 %v4688, %v4671
        %v5624 = vpack.c.b16 %v4689, %v4672
        %v5625 = vpack.c.b16 %v4690, %v4673
        %v5626 = vpack.c.b16 %v4691, %v4674
        %v5627 = vpack.c.b16 %v4692, %v4675
        %v5628 = vpack.c.b16 %v4693, %v4676
        %v5629 = vpack.c.b16 %v4694, %v4677
        %v5630 = vpack.c.b16 %v4712, %v4695
        %v5631 = vpack.c.b16 %v4713, %v4696
        %v5632 = vpack.c.b16 %v4714, %v4697
        %v5633 = vpack.c.b16 %v4715, %v4698
        %v5634 = vpack.c.b16 %v4716, %v4699
        %v5635 = vpack.c.b16 %v4717, %v4700
        %v5636 = vpack.c.b16 %v4718, %v4701
        %v5637 = vpack.c.b16 %v4719, %v4702
        %v5638 = vpack.c.b16 %v4720, %v4703
        %v5639 = vpack.c.b16 %v4721, %v4704
        %v5640 = vpack.c.b16 %v4722, %v4705
        %v5641 = vpack.c.b16 %v4723, %v4706
        %v5642 = vpack.c.b16 %v4724, %v4707
        %v5643 = vpack.c.b16 %v4725, %v4708
        %v5644 = vpack.c.b16 %v4726, %v4709
        %v5645 = vpack.c.b16 %v4727, %v4710
        %v5646 = vpack.c.b16 %v4728, %v4711
        %v5647 = vpack.c.b16 %v4746, %v4729
        %v5648 = vpack.c.b16 %v4747, %v4730
        %v5649 = vpack.c.b16 %v4748, %v4731
        %v5650 = vpack.c.b16 %v4749, %v4732
        %v5651 = vpack.c.b16 %v4750, %v4733
        %v5652 = vpack.c.b16 %v4751, %v4734
        %v5653 = vpack.c.b16 %v4752, %v4735
        %v5654 = vpack.c.b16 %v4753, %v4736
        %v5655 = vpack.c.b16 %v4754, %v4737
        %v5656 = vpack.c.b16 %v4755, %v4738
        %v5657 = vpack.c.b16 %v4756, %v4739
        %v5658 = vpack.c.b16 %v4757, %v4740
        %v5659 = vpack.c.b16 %v4758, %v4741
        %v5660 = vpack.c.b16 %v4759, %v4742
        %v5661 = vpack.c.b16 %v4760, %v4743
        %v5662 = vpack.c.b16 %v4761, %v4744
        %v5663 = vpack.c.b16 %v4762, %v4745
        %v5664 = vpack.c.b16 %v4780, %v4763
        %v5665 = vpack.c.b16 %v4781, %v4764
        %v5666 = vpack.c.b16 %v4782, %v4765
        %v5667 = vpack.c.b16 %v4783, %v4766
        %v5668 = vpack.c.b16 %v4784, %v4767
        %v5669 = vpack.c.b16 %v4785, %v4768
        %v5670 = vpack.c.b16 %v4786, %v4769
        %v5671 = vpack.c.b16 %v4787, %v4770
        %v5672 = vpack.c.b16 %v4788, %v4771
        %v5673 = vpack.c.b16 %v4789, %v4772
        %v5674 = vpack.c.b16 %v4790, %v4773
        %v5675 = vpack.c.b16 %v4791, %v4774
        %v5676 = vpack.c.b16 %v4792, %v4775
        %v5677 = vpack.c.b16 %v4793, %v4776
        %v5678 = vpack.c.b16 %v4794, %v4777
        %v5679 = vpack.c.b16 %v4795, %v4778
        %v5680 = vpack.c.b16 %v4796, %v4779
        %v5681 = vpack.c.b16 %v4814, %v4797
        %v5682 = vpack.c.b16 %v4815, %v4798
        %v5683 = vpack.c.b16 %v4816, %v4799
        %v5684 = vpack.c.b16 %v4817, %v4800
        %v5685 = vpack.c.b16 %v4818, %v4801
        %v5686 = vpack.c.b16 %v4819, %v4802
        %v5687 = vpack.c.b16 %v4820, %v4803
        %v5688 = vpack.c.b16 %v4821, %v4804
        %v5689 = vpack.c.b16 %v4822, %v4805
        %v5690 = vpack.c.b16 %v4823, %v4806
        %v5691 = vpack.c.b16 %v4824, %v4807
        %v5692 = vpack.c.b16 %v4825, %v4808
        %v5693 = vpack.c.b16 %v4826, %v4809
        %v5694 = vpack.c.b16 %v4827, %v4810
        %v5695 = vpack.c.b16 %v4828, %v4811
        %v5696 = vpack.c.b16 %v4829, %v4812
        %v5697 = vpack.c.b16 %v4830, %v4813
        %v5698 = vpack.c.b16 %v4848, %v4831
        %v5699 = vpack.c.b16 %v4849, %v4832
        %v5700 = vpack.c.b16 %v4850, %v4833
        %v5701 = vpack.c.b16 %v4851, %v4834
        %v5702 = vpack.c.b16 %v4852, %v4835
        %v5703 = vpack.c.b16 %v4853, %v4836
        %v5704 = vpack.c.b16 %v4854, %v4837
        %v5705 = vpack.c.b16 %v4855, %v4838
        %v5706 = vpack.c.b16 %v4856, %v4839
        %v5707 = vpack.c.b16 %v4857, %v4840
        %v5708 = vpack.c.b16 %v4858, %v4841
        %v5709 = vpack.c.b16 %v4859, %v4842
        %v5710 = vpack.c.b16 %v4860, %v4843
        %v5711 = vpack.c.b16 %v4861, %v4844
        %v5712 = vpack.c.b16 %v4862, %v4845
        %v5713 = vpack.c.b16 %v4863, %v4846
        %v5714 = vpack.c.b16 %v4864, %v4847
        %v5715 = vpack.c.b16 %v4882, %v4865
        %v5716 = vpack.c.b16 %v4883, %v4866
        %v5717 = vpack.c.b16 %v4884, %v4867
        %v5718 = vpack.c.b16 %v4885, %v4868
        %v5719 = vpack.c.b16 %v4886, %v4869
        %v5720 = vpack.c.b16 %v4887, %v4870
        %v5721 = vpack.c.b16 %v4888, %v4871
        %v5722 = vpack.c.b16 %v4889, %v4872
        %v5723 = vpack.c.b16 %v4890, %v4873
        %v5724 = vpack.c.b16 %v4891, %v4874
        %v5725 = vpack.c.b16 %v4892, %v4875
        %v5726 = vpack.c.b16 %v4893, %v4876
        %v5727 = vpack.c.b16 %v4894, %v4877
        %v5728 = vpack.c.b16 %v4895, %v4878
        %v5729 = vpack.c.b16 %v4896, %v4879
        %v5730 = vpack.c.b16 %v4897, %v4880
        %v5731 = vpack.c.b16 %v4898, %v4881
        %v5732 = vpack.c.b16 %v4916, %v4899
        %v5733 = vpack.c.b16 %v4917, %v4900
        %v5734 = vpack.c.b16 %v4918, %v4901
        %v5735 = vpack.c.b16 %v4919, %v4902
        %v5736 = vpack.c.b16 %v4920, %v4903
        %v5737 = vpack.c.b16 %v4921, %v4904
        %v5738 = vpack.c.b16 %v4922, %v4905
        %v5739 = vpack.c.b16 %v4923, %v4906
        %v5740 = vpack.c.b16 %v4924, %v4907
        %v5741 = vpack.c.b16 %v4925, %v4908
        %v5742 = vpack.c.b16 %v4926, %v4909
        %v5743 = vpack.c.b16 %v4927, %v4910
        %v5744 = vpack.c.b16 %v4928, %v4911
        %v5745 = vpack.c.b16 %v4929, %v4912
        %v5746 = vpack.c.b16 %v4930, %v4913
        %v5747 = vpack.c.b16 %v4931, %v4914
        %v5748 = vpack.c.b16 %v4932, %v4915
        %v5749 = vpack.c.b16 %v4950, %v4933
        %v5750 = vpack.c.b16 %v4951, %v4934
        %v5751 = vpack.c.b16 %v4952, %v4935
        %v5752 = vpack.c.b16 %v4953, %v4936
        %v5753 = vpack.c.b16 %v4954, %v4937
        %v5754 = vpack.c.b16 %v4955, %v4938
        %v5755 = vpack.c.b16 %v4956, %v4939
        %v5756 = vpack.c.b16 %v4957, %v4940
        %v5757 = vpack.c.b16 %v4958, %v4941
        %v5758 = vpack.c.b16 %v4959, %v4942
        %v5759 = vpack.c.b16 %v4960, %v4943
        %v5760 = vpack.c.b16 %v4961, %v4944
        %v5761 = vpack.c.b16 %v4962, %v4945
        %v5762 = vpack.c.b16 %v4963, %v4946
        %v5763 = vpack.c.b16 %v4964, %v4947
        %v5764 = vpack.c.b16 %v4965, %v4948
        %v5765 = vpack.c.b16 %v4966, %v4949
        %v5766 = vpack.c.b16 %v4984, %v4967
        %v5767 = vpack.c.b16 %v4985, %v4968
        %v5768 = vpack.c.b16 %v4986, %v4969
        %v5769 = vpack.c.b16 %v4987, %v4970
        %v5770 = vpack.c.b16 %v4988, %v4971
        %v5771 = vpack.c.b16 %v4989, %v4972
        %v5772 = vpack.c.b16 %v4990, %v4973
        %v5773 = vpack.c.b16 %v4991, %v4974
        %v5774 = vpack.c.b16 %v4992, %v4975
        %v5775 = vpack.c.b16 %v4993, %v4976
        %v5776 = vpack.c.b16 %v4994, %v4977
        %v5777 = vpack.c.b16 %v4995, %v4978
        %v5778 = vpack.c.b16 %v4996, %v4979
        %v5779 = vpack.c.b16 %v4997, %v4980
        %v5780 = vpack.c.b16 %v4998, %v4981
        %v5781 = vpack.c.b16 %v4999, %v4982
        %v5782 = vpack.c.b16 %v5000, %v4983
        %v5783 = vpack.c.b16 %v5018, %v5001
        %v5784 = vpack.c.b16 %v5019, %v5002
        %v5785 = vpack.c.b16 %v5020, %v5003
        %v5786 = vpack.c.b16 %v5021, %v5004
        %v5787 = vpack.c.b16 %v5022, %v5005
        %v5788 = vpack.c.b16 %v5023, %v5006
        %v5789 = vpack.c.b16 %v5024, %v5007
        %v5790 = vpack.c.b16 %v5025, %v5008
        %v5791 = vpack.c.b16 %v5026, %v5009
        %v5792 = vpack.c.b16 %v5027, %v5010
        %v5793 = vpack.c.b16 %v5028, %v5011
        %v5794 = vpack.c.b16 %v5029, %v5012
        %v5795 = vpack.c.b16 %v5030, %v5013
        %v5796 = vpack.c.b16 %v5031, %v5014
        %v5797 = vpack.c.b16 %v5032, %v5015
        %v5798 = vpack.c.b16 %v5033, %v5016
        %v5799 = vpack.c.b16 %v5034, %v5017
        %v5800 = vpack.c.b16 %v5052, %v5035
        %v5801 = vpack.c.b16 %v5053, %v5036
        %v5802 = vpack.c.b16 %v5054, %v5037
        %v5803 = vpack.c.b16 %v5055, %v5038
        %v5804 = vpack.c.b16 %v5056, %v5039
        %v5805 = vpack.c.b16 %v5057, %v5040
        %v5806 = vpack.c.b16 %v5058, %v5041
        %v5807 = vpack.c.b16 %v5059, %v5042
        %v5808 = vpack.c.b16 %v5060, %v5043
        %v5809 = vpack.c.b16 %v5061, %v5044
        %v5810 = vpack.c.b16 %v5062, %v5045
        %v5811 = vpack.c.b16 %v5063, %v5046
        %v5812 = vpack.c.b16 %v5064, %v5047
        %v5813 = vpack.c.b16 %v5065, %v5048
        %v5814 = vpack.c.b16 %v5066, %v5049
        %v5815 = vpack.c.b16 %v5067, %v5050
        %v5816 = vpack.c.b16 %v5068, %v5051
        %v5817 = vpack.c.b16 %v5086, %v5069
        %v5818 = vpack.c.b16 %v5087, %v5070
        %v5819 = vpack.c.b16 %v5088, %v5071
        %v5820 = vpack.c.b16 %v5089, %v5072
        %v5821 = vpack.c.b16 %v5090, %v5073
        %v5822 = vpack.c.b16 %v5091, %v5074
        %v5823 = vpack.c.b16 %v5092, %v5075
        %v5824 = vpack.c.b16 %v5093, %v5076
        %v5825 = vpack.c.b16 %v5094, %v5077
        %v5826 = vpack.c.b16 %v5095, %v5078
        %v5827 = vpack.c.b16 %v5096, %v5079
        %v5828 = vpack.c.b16 %v5097, %v5080
        %v5829 = vpack.c.b16 %v5098, %v5081
        %v5830 = vpack.c.b16 %v5099, %v5082
        %v5831 = vpack.c.b16 %v5100, %v5083
        %v5832 = vpack.c.b16 %v5101, %v5084
        %v5833 = vpack.c.b16 %v5102, %v5085
        %v5834 = vpack.c.b16 %v5120, %v5103
        %v5835 = vpack.c.b16 %v5121, %v5104
        %v5836 = vpack.c.b16 %v5122, %v5105
        %v5837 = vpack.c.b16 %v5123, %v5106
        %v5838 = vpack.c.b16 %v5124, %v5107
        %v5839 = vpack.c.b16 %v5125, %v5108
        %v5840 = vpack.c.b16 %v5126, %v5109
        %v5841 = vpack.c.b16 %v5127, %v5110
        %v5842 = vpack.c.b16 %v5128, %v5111
        %v5843 = vpack.c.b16 %v5129, %v5112
        %v5844 = vpack.c.b16 %v5130, %v5113
        %v5845 = vpack.c.b16 %v5131, %v5114
        %v5846 = vpack.c.b16 %v5132, %v5115
        %v5847 = vpack.c.b16 %v5133, %v5116
        %v5848 = vpack.c.b16 %v5134, %v5117
        %v5849 = vpack.c.b16 %v5135, %v5118
        %v5850 = vpack.c.b16 %v5136, %v5119
        %v5851 = vpack.c.b16 %v5154, %v5137
        %v5852 = vpack.c.b16 %v5155, %v5138
        %v5853 = vpack.c.b16 %v5156, %v5139
        %v5854 = vpack.c.b16 %v5157, %v5140
        %v5855 = vpack.c.b16 %v5158, %v5141
        %v5856 = vpack.c.b16 %v5159, %v5142
        %v5857 = vpack.c.b16 %v5160, %v5143
        %v5858 = vpack.c.b16 %v5161, %v5144
        %v5859 = vpack.c.b16 %v5162, %v5145
        %v5860 = vpack.c.b16 %v5163, %v5146
        %v5861 = vpack.c.b16 %v5164, %v5147
        %v5862 = vpack.c.b16 %v5165, %v5148
        %v5863 = vpack.c.b16 %v5166, %v5149
        %v5864 = vpack.c.b16 %v5167, %v5150
        %v5865 = vpack.c.b16 %v5168, %v5151
        %v5866 = vpack.c.b16 %v5169, %v5152
        %v5867 = vpack.c.b16 %v5170, %v5153
        %v5868 = vpack.c.b16 %v5188, %v5171
        %v5869 = vpack.c.b16 %v5189, %v5172
        %v5870 = vpack.c.b16 %v5190, %v5173
        %v5871 = vpack.c.b16 %v5191, %v5174
        %v5872 = vpack.c.b16 %v5192, %v5175
        %v5873 = vpack.c.b16 %v5193, %v5176
        %v5874 = vpack.c.b16 %v5194, %v5177
        %v5875 = vpack.c.b16 %v5195, %v5178
        %v5876 = vpack.c.b16 %v5196, %v5179
        %v5877 = vpack.c.b16 %v5197, %v5180
        %v5878 = vpack.c.b16 %v5198, %v5181
        %v5879 = vpack.c.b16 %v5199, %v5182
        %v5880 = vpack.c.b16 %v5200, %v5183
        %v5881 = vpack.c.b16 %v5201, %v5184
        %v5882 = vpack.c.b16 %v5202, %v5185
        %v5883 = vpack.c.b16 %v5203, %v5186
        %v5884 = vpack.c.b16 %v5204, %v5187
        %v5885 = vpack.c.b16 %v5222, %v5205
        %v5886 = vpack.c.b16 %v5223, %v5206
        %v5887 = vpack.c.b16 %v5224, %v5207
        %v5888 = vpack.c.b16 %v5225, %v5208
        %v5889 = vpack.c.b16 %v5226, %v5209
        %v5890 = vpack.c.b16 %v5227, %v5210
        %v5891 = vpack.c.b16 %v5228, %v5211
        %v5892 = vpack.c.b16 %v5229, %v5212
        %v5893 = vpack.c.b16 %v5230, %v5213
        %v5894 = vpack.c.b16 %v5231, %v5214
        %v5895 = vpack.c.b16 %v5232, %v5215
        %v5896 = vpack.c.b16 %v5233, %v5216
        %v5897 = vpack.c.b16 %v5234, %v5217
        %v5898 = vpack.c.b16 %v5235, %v5218
        %v5899 = vpack.c.b16 %v5236, %v5219
        %v5900 = vpack.c.b16 %v5237, %v5220
        %v5901 = vpack.c.b16 %v5238, %v5221
        %v5902 = vpack.c.b16 %v5256, %v5239
        %v5903 = vpack.c.b16 %v5257, %v5240
        %v5904 = vpack.c.b16 %v5258, %v5241
        %v5905 = vpack.c.b16 %v5259, %v5242
        %v5906 = vpack.c.b16 %v5260, %v5243
        %v5907 = vpack.c.b16 %v5261, %v5244
        %v5908 = vpack.c.b16 %v5262, %v5245
        %v5909 = vpack.c.b16 %v5263, %v5246
        %v5910 = vpack.c.b16 %v5264, %v5247
        %v5911 = vpack.c.b16 %v5265, %v5248
        %v5912 = vpack.c.b16 %v5266, %v5249
        %v5913 = vpack.c.b16 %v5267, %v5250
        %v5914 = vpack.c.b16 %v5268, %v5251
        %v5915 = vpack.c.b16 %v5269, %v5252
        %v5916 = vpack.c.b16 %v5270, %v5253
        %v5917 = vpack.c.b16 %v5271, %v5254
        %v5918 = vpack.c.b16 %v5272, %v5255
        %v5919 = vpack.c.b16 %v5290, %v5273
        %v5920 = vpack.c.b16 %v5291, %v5274
        %v5921 = vpack.c.b16 %v5292, %v5275
        %v5922 = vpack.c.b16 %v5293, %v5276
        %v5923 = vpack.c.b16 %v5294, %v5277
        %v5924 = vpack.c.b16 %v5295, %v5278
        %v5925 = vpack.c.b16 %v5296, %v5279
        %v5926 = vpack.c.b16 %v5297, %v5280
        %v5927 = vpack.c.b16 %v5298, %v5281
        %v5928 = vpack.c.b16 %v5299, %v5282
        %v5929 = vpack.c.b16 %v5300, %v5283
        %v5930 = vpack.c.b16 %v5301, %v5284
        %v5931 = vpack.c.b16 %v5302, %v5285
        %v5932 = vpack.c.b16 %v5303, %v5286
        %v5933 = vpack.c.b16 %v5304, %v5287
        %v5934 = vpack.c.b16 %v5305, %v5288
        %v5935 = vpack.c.b16 %v5306, %v5289
        %v5936 = vpack.c.b16 %v5324, %v5307
        %v5937 = vpack.c.b16 %v5325, %v5308
        %v5938 = vpack.c.b16 %v5326, %v5309
        %v5939 = vpack.c.b16 %v5327, %v5310
        %v5940 = vpack.c.b16 %v5328, %v5311
        %v5941 = vpack.c.b16 %v5329, %v5312
        %v5942 = vpack.c.b16 %v5330, %v5313
        %v5943 = vpack.c.b16 %v5331, %v5314
        %v5944 = vpack.c.b16 %v5332, %v5315
        %v5945 = vpack.c.b16 %v5333, %v5316
        %v5946 = vpack.c.b16 %v5334, %v5317
        %v5947 = vpack.c.b16 %v5335, %v5318
        %v5948 = vpack.c.b16 %v5336, %v5319
        %v5949 = vpack.c.b16 %v5337, %v5320
        %v5950 = vpack.c.b16 %v5338, %v5321
        %v5951 = vpack.c.b16 %v5339, %v5322
        %v5952 = vpack.c.b16 %v5340, %v5323
        %v5953 = vpack.c.b16 %v5358, %v5341
        %v5954 = vpack.c.b16 %v5359, %v5342
        %v5955 = vpack.c.b16 %v5360, %v5343
        %v5956 = vpack.c.b16 %v5361, %v5344
        %v5957 = vpack.c.b16 %v5362, %v5345
        %v5958 = vpack.c.b16 %v5363, %v5346
        %v5959 = vpack.c.b16 %v5364, %v5347
        %v5960 = vpack.c.b16 %v5365, %v5348
        %v5961 = vpack.c.b16 %v5366, %v5349
        %v5962 = vpack.c.b16 %v5367, %v5350
        %v5963 = vpack.c.b16 %v5368, %v5351
        %v5964 = vpack.c.b16 %v5369, %v5352
        %v5965 = vpack.c.b16 %v5370, %v5353
        %v5966 = vpack.c.b16 %v5371, %v5354
        %v5967 = vpack.c.b16 %v5372, %v5355
        %v5968 = vpack.c.b16 %v5373, %v5356
        %v5969 = vpack.c.b16 %v5374, %v5357
        %v5970 = vpack.c.b16 %v5392, %v5375
        %v5971 = vpack.c.b16 %v5393, %v5376
        %v5972 = vpack.c.b16 %v5394, %v5377
        %v5973 = vpack.c.b16 %v5395, %v5378
        %v5974 = vpack.c.b16 %v5396, %v5379
        %v5975 = vpack.c.b16 %v5397, %v5380
        %v5976 = vpack.c.b16 %v5398, %v5381
        %v5977 = vpack.c.b16 %v5399, %v5382
        %v5978 = vpack.c.b16 %v5400, %v5383
        %v5979 = vpack.c.b16 %v5401, %v5384
        %v5980 = vpack.c.b16 %v5402, %v5385
        %v5981 = vpack.c.b16 %v5403, %v5386
        %v5982 = vpack.c.b16 %v5404, %v5387
        %v5983 = vpack.c.b16 %v5405, %v5388
        %v5984 = vpack.c.b16 %v5406, %v5389
        %v5985 = vpack.c.b16 %v5407, %v5390
        %v5986 = vpack.c.b16 %v5408, %v5391
        %v5987 = vpack.c.b16 %v5426, %v5409
        %v5988 = vpack.c.b16 %v5427, %v5410
        %v5989 = vpack.c.b16 %v5428, %v5411
        %v5990 = vpack.c.b16 %v5429, %v5412
        %v5991 = vpack.c.b16 %v5430, %v5413
        %v5992 = vpack.c.b16 %v5431, %v5414
        %v5993 = vpack.c.b16 %v5432, %v5415
        %v5994 = vpack.c.b16 %v5433, %v5416
        %v5995 = vpack.c.b16 %v5434, %v5417
        %v5996 = vpack.c.b16 %v5435, %v5418
        %v5997 = vpack.c.b16 %v5436, %v5419
        %v5998 = vpack.c.b16 %v5437, %v5420
        %v5999 = vpack.c.b16 %v5438, %v5421
        %v6000 = vpack.c.b16 %v5439, %v5422
        %v6001 = vpack.c.b16 %v5440, %v5423
        %v6002 = vpack.c.b16 %v5441, %v5424
        %v6003 = vpack.c.b16 %v5442, %v5425
        %v6004 = vpack.c.b16 %v5460, %v5443
        %v6005 = vpack.c.b16 %v5461, %v5444
        %v6006 = vpack.c.b16 %v5462, %v5445
        %v6007 = vpack.c.b16 %v5463, %v5446
        %v6008 = vpack.c.b16 %v5464, %v5447
        %v6009 = vpack.c.b16 %v5465, %v5448
        %v6010 = vpack.c.b16 %v5466, %v5449
        %v6011 = vpack.c.b16 %v5467, %v5450
        %v6012 = vpack.c.b16 %v5468, %v5451
        %v6013 = vpack.c.b16 %v5469, %v5452
        %v6014 = vpack.c.b16 %v5470, %v5453
        %v6015 = vpack.c.b16 %v5471, %v5454
        %v6016 = vpack.c.b16 %v5472, %v5455
        %v6017 = vpack.c.b16 %v5473, %v5456
        %v6018 = vpack.c.b16 %v5474, %v5457
        %v6019 = vpack.c.b16 %v5475, %v5458
        %v6020 = vpack.c.b16 %v5476, %v5459
        %6565 = vmatpush.bf16.msra.mxu0 %v5596
        %6566 = vmatpush.bf16.msra.mxu0 %v5579
        %6567 = vmatpush.bf16.msra.mxu0 %v5562
        %6568 = vmatpush.bf16.msra.mxu0 %v5545
        %6569 = vmatpush.bf16.msra.mxu0 %v5528
        %6570 = vmatpush.bf16.msra.mxu0 %v5511
        %6571 = vmatpush.bf16.msra.mxu0 %v5494
        %6572 = vmatpush.bf16.msra.mxu0 %v5477
        %6573 = vmatmul.bf16.gmra.mxu0 %v3193
        %v6574 = vpop.f32.mrf.mxu0
        %v6575 = vadd.f32 %v3779, %v6574
        %v6576 = vpop.f32.mrf.mxu0
        %6577 = vdwg.mxu0
        %6578 = vmatpush.bf16.msra.mxu0 %v5732
        %6579 = vmatpush.bf16.msra.mxu0 %v5715
        %6580 = vmatpush.bf16.msra.mxu0 %v5698
        %6581 = vmatpush.bf16.msra.mxu0 %v5681
        %6582 = vmatpush.bf16.msra.mxu0 %v5664
        %6583 = vmatpush.bf16.msra.mxu0 %v5647
        %6584 = vmatpush.bf16.msra.mxu0 %v5630
        %6585 = vmatpush.bf16.msra.mxu0 %v5613
        %6586 = vmatmul.bf16.gmra.mxu0 %v3194
        %v6587 = vpop.f32.mrf.mxu0
        %v6588 = vadd.f32 %v6575, %v6587
        %v6589 = vpop.f32.mrf.mxu0
        %6590 = vdwg.mxu0
        %6591 = vmatpush.bf16.msra.mxu0 %v5868
        %6592 = vmatpush.bf16.msra.mxu0 %v5851
        %6593 = vmatpush.bf16.msra.mxu0 %v5834
        %6594 = vmatpush.bf16.msra.mxu0 %v5817
        %6595 = vmatpush.bf16.msra.mxu0 %v5800
        %6596 = vmatpush.bf16.msra.mxu0 %v5783
        %6597 = vmatpush.bf16.msra.mxu0 %v5766
        %6598 = vmatpush.bf16.msra.mxu0 %v5749
        %6599 = vmatmul.bf16.gmra.mxu0 %v3195
        %v6600 = vpop.f32.mrf.mxu0
        %v6601 = vadd.f32 %v6588, %v6600
        %v6602 = vpop.f32.mrf.mxu0
        %6603 = vdwg.mxu0
        %6604 = vmatpush.bf16.msra.mxu0 %v6004
        %6605 = vmatpush.bf16.msra.mxu0 %v5987
        %6606 = vmatpush.bf16.msra.mxu0 %v5970
        %6607 = vmatpush.bf16.msra.mxu0 %v5953
        %6608 = vmatpush.bf16.msra.mxu0 %v5936
        %6609 = vmatpush.bf16.msra.mxu0 %v5919
        %6610 = vmatpush.bf16.msra.mxu0 %v5902
        %6611 = vmatpush.bf16.msra.mxu0 %v5885
        %6612 = vmatmul.bf16.gmra.mxu0 %v3196
        %v6613 = vpop.f32.mrf.mxu0
        %v6614 = vadd.f32 %v6601, %v6613
        %v6615 = vpop.f32.mrf.mxu0
        %6616 = vdwg.mxu0
        %6617 = vmatpush.bf16.msra.mxu0 %v5597
        %6618 = vmatpush.bf16.msra.mxu0 %v5580
        %6619 = vmatpush.bf16.msra.mxu0 %v5563
        %6620 = vmatpush.bf16.msra.mxu0 %v5546
        %6621 = vmatpush.bf16.msra.mxu0 %v5529
        %6622 = vmatpush.bf16.msra.mxu0 %v5512
        %6623 = vmatpush.bf16.msra.mxu0 %v5495
        %6624 = vmatpush.bf16.msra.mxu0 %v5478
        %6625 = vmatmul.bf16.gmra.mxu0 %v3193
        %v6626 = vpop.f32.mrf.mxu0
        %v6627 = vadd.f32 %v3780, %v6626
        %v6628 = vpop.f32.mrf.mxu0
        %6629 = vdwg.mxu0
        %6630 = vmatpush.bf16.msra.mxu0 %v5733
        %6631 = vmatpush.bf16.msra.mxu0 %v5716
        %6632 = vmatpush.bf16.msra.mxu0 %v5699
        %6633 = vmatpush.bf16.msra.mxu0 %v5682
        %6634 = vmatpush.bf16.msra.mxu0 %v5665
        %6635 = vmatpush.bf16.msra.mxu0 %v5648
        %6636 = vmatpush.bf16.msra.mxu0 %v5631
        %6637 = vmatpush.bf16.msra.mxu0 %v5614
        %6638 = vmatmul.bf16.gmra.mxu0 %v3194
        %v6639 = vpop.f32.mrf.mxu0
        %v6640 = vadd.f32 %v6627, %v6639
        %v6641 = vpop.f32.mrf.mxu0
        %6642 = vdwg.mxu0
        %6643 = vmatpush.bf16.msra.mxu0 %v5869
        %6644 = vmatpush.bf16.msra.mxu0 %v5852
        %6645 = vmatpush.bf16.msra.mxu0 %v5835
        %6646 = vmatpush.bf16.msra.mxu0 %v5818
        %6647 = vmatpush.bf16.msra.mxu0 %v5801
        %6648 = vmatpush.bf16.msra.mxu0 %v5784
        %6649 = vmatpush.bf16.msra.mxu0 %v5767
        %6650 = vmatpush.bf16.msra.mxu0 %v5750
        %6651 = vmatmul.bf16.gmra.mxu0 %v3195
        %v6652 = vpop.f32.mrf.mxu0
        %v6653 = vadd.f32 %v6640, %v6652
        %v6654 = vpop.f32.mrf.mxu0
        %6655 = vdwg.mxu0
        %6656 = vmatpush.bf16.msra.mxu0 %v6005
        %6657 = vmatpush.bf16.msra.mxu0 %v5988
        %6658 = vmatpush.bf16.msra.mxu0 %v5971
        %6659 = vmatpush.bf16.msra.mxu0 %v5954
        %6660 = vmatpush.bf16.msra.mxu0 %v5937
        %6661 = vmatpush.bf16.msra.mxu0 %v5920
        %6662 = vmatpush.bf16.msra.mxu0 %v5903
        %6663 = vmatpush.bf16.msra.mxu0 %v5886
        %6664 = vmatmul.bf16.gmra.mxu0 %v3196
        %v6665 = vpop.f32.mrf.mxu0
        %v6666 = vadd.f32 %v6653, %v6665
        %v6667 = vpop.f32.mrf.mxu0
        %6668 = vdwg.mxu0
        %6669 = vmatpush.bf16.msra.mxu0 %v5598
        %6670 = vmatpush.bf16.msra.mxu0 %v5581
        %6671 = vmatpush.bf16.msra.mxu0 %v5564
        %6672 = vmatpush.bf16.msra.mxu0 %v5547
        %6673 = vmatpush.bf16.msra.mxu0 %v5530
        %6674 = vmatpush.bf16.msra.mxu0 %v5513
        %6675 = vmatpush.bf16.msra.mxu0 %v5496
        %6676 = vmatpush.bf16.msra.mxu0 %v5479
        %6677 = vmatmul.bf16.gmra.mxu0 %v3193
        %v6678 = vpop.f32.mrf.mxu0
        %v6679 = vadd.f32 %v3781, %v6678
        %v6680 = vpop.f32.mrf.mxu0
        %6681 = vdwg.mxu0
        %6682 = vmatpush.bf16.msra.mxu0 %v5734
        %6683 = vmatpush.bf16.msra.mxu0 %v5717
        %6684 = vmatpush.bf16.msra.mxu0 %v5700
        %6685 = vmatpush.bf16.msra.mxu0 %v5683
        %6686 = vmatpush.bf16.msra.mxu0 %v5666
        %6687 = vmatpush.bf16.msra.mxu0 %v5649
        %6688 = vmatpush.bf16.msra.mxu0 %v5632
        %6689 = vmatpush.bf16.msra.mxu0 %v5615
        %6690 = vmatmul.bf16.gmra.mxu0 %v3194
        %v6691 = vpop.f32.mrf.mxu0
        %v6692 = vadd.f32 %v6679, %v6691
        %v6693 = vpop.f32.mrf.mxu0
        %6694 = vdwg.mxu0
        %6695 = vmatpush.bf16.msra.mxu0 %v5870
        %6696 = vmatpush.bf16.msra.mxu0 %v5853
        %6697 = vmatpush.bf16.msra.mxu0 %v5836
        %6698 = vmatpush.bf16.msra.mxu0 %v5819
        %6699 = vmatpush.bf16.msra.mxu0 %v5802
        %6700 = vmatpush.bf16.msra.mxu0 %v5785
        %6701 = vmatpush.bf16.msra.mxu0 %v5768
        %6702 = vmatpush.bf16.msra.mxu0 %v5751
        %6703 = vmatmul.bf16.gmra.mxu0 %v3195
        %v6704 = vpop.f32.mrf.mxu0
        %v6705 = vadd.f32 %v6692, %v6704
        %v6706 = vpop.f32.mrf.mxu0
        %6707 = vdwg.mxu0
        %6708 = vmatpush.bf16.msra.mxu0 %v6006
        %6709 = vmatpush.bf16.msra.mxu0 %v5989
        %6710 = vmatpush.bf16.msra.mxu0 %v5972
        %6711 = vmatpush.bf16.msra.mxu0 %v5955
        %6712 = vmatpush.bf16.msra.mxu0 %v5938
        %6713 = vmatpush.bf16.msra.mxu0 %v5921
        %6714 = vmatpush.bf16.msra.mxu0 %v5904
        %6715 = vmatpush.bf16.msra.mxu0 %v5887
        %6716 = vmatmul.bf16.gmra.mxu0 %v3196
        %v6717 = vpop.f32.mrf.mxu0
        %v6718 = vadd.f32 %v6705, %v6717
        %v6719 = vpop.f32.mrf.mxu0
        %6720 = vdwg.mxu0
        %6721 = vmatpush.bf16.msra.mxu0 %v5599
        %6722 = vmatpush.bf16.msra.mxu0 %v5582
        %6723 = vmatpush.bf16.msra.mxu0 %v5565
        %6724 = vmatpush.bf16.msra.mxu0 %v5548
        %6725 = vmatpush.bf16.msra.mxu0 %v5531
        %6726 = vmatpush.bf16.msra.mxu0 %v5514
        %6727 = vmatpush.bf16.msra.mxu0 %v5497
        %6728 = vmatpush.bf16.msra.mxu0 %v5480
        %6729 = vmatmul.bf16.gmra.mxu0 %v3193
        %v6730 = vpop.f32.mrf.mxu0
        %v6731 = vadd.f32 %v3782, %v6730
        %v6732 = vpop.f32.mrf.mxu0
        %6733 = vdwg.mxu0
        %6734 = vmatpush.bf16.msra.mxu0 %v5735
        %6735 = vmatpush.bf16.msra.mxu0 %v5718
        %6736 = vmatpush.bf16.msra.mxu0 %v5701
        %6737 = vmatpush.bf16.msra.mxu0 %v5684
        %6738 = vmatpush.bf16.msra.mxu0 %v5667
        %6739 = vmatpush.bf16.msra.mxu0 %v5650
        %6740 = vmatpush.bf16.msra.mxu0 %v5633
        %6741 = vmatpush.bf16.msra.mxu0 %v5616
        %6742 = vmatmul.bf16.gmra.mxu0 %v3194
        %v6743 = vpop.f32.mrf.mxu0
        %v6744 = vadd.f32 %v6731, %v6743
        %v6745 = vpop.f32.mrf.mxu0
        %6746 = vdwg.mxu0
        %6747 = vmatpush.bf16.msra.mxu0 %v5871
        %6748 = vmatpush.bf16.msra.mxu0 %v5854
        %6749 = vmatpush.bf16.msra.mxu0 %v5837
        %6750 = vmatpush.bf16.msra.mxu0 %v5820
        %6751 = vmatpush.bf16.msra.mxu0 %v5803
        %6752 = vmatpush.bf16.msra.mxu0 %v5786
        %6753 = vmatpush.bf16.msra.mxu0 %v5769
        %6754 = vmatpush.bf16.msra.mxu0 %v5752
        %6755 = vmatmul.bf16.gmra.mxu0 %v3195
        %v6756 = vpop.f32.mrf.mxu0
        %v6757 = vadd.f32 %v6744, %v6756
        %v6758 = vpop.f32.mrf.mxu0
        %6759 = vdwg.mxu0
        %6760 = vmatpush.bf16.msra.mxu0 %v6007
        %6761 = vmatpush.bf16.msra.mxu0 %v5990
        %6762 = vmatpush.bf16.msra.mxu0 %v5973
        %6763 = vmatpush.bf16.msra.mxu0 %v5956
        %6764 = vmatpush.bf16.msra.mxu0 %v5939
        %6765 = vmatpush.bf16.msra.mxu0 %v5922
        %6766 = vmatpush.bf16.msra.mxu0 %v5905
        %6767 = vmatpush.bf16.msra.mxu0 %v5888
        %6768 = vmatmul.bf16.gmra.mxu0 %v3196
        %v6769 = vpop.f32.mrf.mxu0
        %v6770 = vadd.f32 %v6757, %v6769
        %v6771 = vpop.f32.mrf.mxu0
        %6772 = vdwg.mxu0
        %6773 = vmatpush.bf16.msra.mxu0 %v5600
        %6774 = vmatpush.bf16.msra.mxu0 %v5583
        %6775 = vmatpush.bf16.msra.mxu0 %v5566
        %6776 = vmatpush.bf16.msra.mxu0 %v5549
        %6777 = vmatpush.bf16.msra.mxu0 %v5532
        %6778 = vmatpush.bf16.msra.mxu0 %v5515
        %6779 = vmatpush.bf16.msra.mxu0 %v5498
        %6780 = vmatpush.bf16.msra.mxu0 %v5481
        %6781 = vmatmul.bf16.gmra.mxu0 %v3193
        %v6782 = vpop.f32.mrf.mxu0
        %v6783 = vadd.f32 %v3783, %v6782
        %v6784 = vpop.f32.mrf.mxu0
        %6785 = vdwg.mxu0
        %6786 = vmatpush.bf16.msra.mxu0 %v5736
        %6787 = vmatpush.bf16.msra.mxu0 %v5719
        %6788 = vmatpush.bf16.msra.mxu0 %v5702
        %6789 = vmatpush.bf16.msra.mxu0 %v5685
        %6790 = vmatpush.bf16.msra.mxu0 %v5668
        %6791 = vmatpush.bf16.msra.mxu0 %v5651
        %6792 = vmatpush.bf16.msra.mxu0 %v5634
        %6793 = vmatpush.bf16.msra.mxu0 %v5617
        %6794 = vmatmul.bf16.gmra.mxu0 %v3194
        %v6795 = vpop.f32.mrf.mxu0
        %v6796 = vadd.f32 %v6783, %v6795
        %v6797 = vpop.f32.mrf.mxu0
        %6798 = vdwg.mxu0
        %6799 = vmatpush.bf16.msra.mxu0 %v5872
        %6800 = vmatpush.bf16.msra.mxu0 %v5855
        %6801 = vmatpush.bf16.msra.mxu0 %v5838
        %6802 = vmatpush.bf16.msra.mxu0 %v5821
        %6803 = vmatpush.bf16.msra.mxu0 %v5804
        %6804 = vmatpush.bf16.msra.mxu0 %v5787
        %6805 = vmatpush.bf16.msra.mxu0 %v5770
        %6806 = vmatpush.bf16.msra.mxu0 %v5753
        %6807 = vmatmul.bf16.gmra.mxu0 %v3195
        %v6808 = vpop.f32.mrf.mxu0
        %v6809 = vadd.f32 %v6796, %v6808
        %v6810 = vpop.f32.mrf.mxu0
        %6811 = vdwg.mxu0
        %6812 = vmatpush.bf16.msra.mxu0 %v6008
        %6813 = vmatpush.bf16.msra.mxu0 %v5991
        %6814 = vmatpush.bf16.msra.mxu0 %v5974
        %6815 = vmatpush.bf16.msra.mxu0 %v5957
        %6816 = vmatpush.bf16.msra.mxu0 %v5940
        %6817 = vmatpush.bf16.msra.mxu0 %v5923
        %6818 = vmatpush.bf16.msra.mxu0 %v5906
        %6819 = vmatpush.bf16.msra.mxu0 %v5889
        %6820 = vmatmul.bf16.gmra.mxu0 %v3196
        %v6821 = vpop.f32.mrf.mxu0
        %v6822 = vadd.f32 %v6809, %v6821
        %v6823 = vpop.f32.mrf.mxu0
        %6824 = vdwg.mxu0
        %6825 = vmatpush.bf16.msra.mxu0 %v5601
        %6826 = vmatpush.bf16.msra.mxu0 %v5584
        %6827 = vmatpush.bf16.msra.mxu0 %v5567
        %6828 = vmatpush.bf16.msra.mxu0 %v5550
        %6829 = vmatpush.bf16.msra.mxu0 %v5533
        %6830 = vmatpush.bf16.msra.mxu0 %v5516
        %6831 = vmatpush.bf16.msra.mxu0 %v5499
        %6832 = vmatpush.bf16.msra.mxu0 %v5482
        %6833 = vmatmul.bf16.gmra.mxu0 %v3193
        %v6834 = vpop.f32.mrf.mxu0
        %v6835 = vadd.f32 %v3784, %v6834
        %v6836 = vpop.f32.mrf.mxu0
        %6837 = vdwg.mxu0
        %6838 = vmatpush.bf16.msra.mxu0 %v5737
        %6839 = vmatpush.bf16.msra.mxu0 %v5720
        %6840 = vmatpush.bf16.msra.mxu0 %v5703
        %6841 = vmatpush.bf16.msra.mxu0 %v5686
        %6842 = vmatpush.bf16.msra.mxu0 %v5669
        %6843 = vmatpush.bf16.msra.mxu0 %v5652
        %6844 = vmatpush.bf16.msra.mxu0 %v5635
        %6845 = vmatpush.bf16.msra.mxu0 %v5618
        %6846 = vmatmul.bf16.gmra.mxu0 %v3194
        %v6847 = vpop.f32.mrf.mxu0
        %v6848 = vadd.f32 %v6835, %v6847
        %v6849 = vpop.f32.mrf.mxu0
        %6850 = vdwg.mxu0
        %6851 = vmatpush.bf16.msra.mxu0 %v5873
        %6852 = vmatpush.bf16.msra.mxu0 %v5856
        %6853 = vmatpush.bf16.msra.mxu0 %v5839
        %6854 = vmatpush.bf16.msra.mxu0 %v5822
        %6855 = vmatpush.bf16.msra.mxu0 %v5805
        %6856 = vmatpush.bf16.msra.mxu0 %v5788
        %6857 = vmatpush.bf16.msra.mxu0 %v5771
        %6858 = vmatpush.bf16.msra.mxu0 %v5754
        %6859 = vmatmul.bf16.gmra.mxu0 %v3195
        %v6860 = vpop.f32.mrf.mxu0
        %v6861 = vadd.f32 %v6848, %v6860
        %v6862 = vpop.f32.mrf.mxu0
        %6863 = vdwg.mxu0
        %6864 = vmatpush.bf16.msra.mxu0 %v6009
        %6865 = vmatpush.bf16.msra.mxu0 %v5992
        %6866 = vmatpush.bf16.msra.mxu0 %v5975
        %6867 = vmatpush.bf16.msra.mxu0 %v5958
        %6868 = vmatpush.bf16.msra.mxu0 %v5941
        %6869 = vmatpush.bf16.msra.mxu0 %v5924
        %6870 = vmatpush.bf16.msra.mxu0 %v5907
        %6871 = vmatpush.bf16.msra.mxu0 %v5890
        %6872 = vmatmul.bf16.gmra.mxu0 %v3196
        %v6873 = vpop.f32.mrf.mxu0
        %v6874 = vadd.f32 %v6861, %v6873
        %v6875 = vpop.f32.mrf.mxu0
        %6876 = vdwg.mxu0
        %6877 = vmatpush.bf16.msra.mxu0 %v5602
        %6878 = vmatpush.bf16.msra.mxu0 %v5585
        %6879 = vmatpush.bf16.msra.mxu0 %v5568
        %6880 = vmatpush.bf16.msra.mxu0 %v5551
        %6881 = vmatpush.bf16.msra.mxu0 %v5534
        %6882 = vmatpush.bf16.msra.mxu0 %v5517
        %6883 = vmatpush.bf16.msra.mxu0 %v5500
        %6884 = vmatpush.bf16.msra.mxu0 %v5483
        %6885 = vmatmul.bf16.gmra.mxu0 %v3193
        %v6886 = vpop.f32.mrf.mxu0
        %v6887 = vadd.f32 %v3785, %v6886
        %v6888 = vpop.f32.mrf.mxu0
        %6889 = vdwg.mxu0
        %6890 = vmatpush.bf16.msra.mxu0 %v5738
        %6891 = vmatpush.bf16.msra.mxu0 %v5721
        %6892 = vmatpush.bf16.msra.mxu0 %v5704
        %6893 = vmatpush.bf16.msra.mxu0 %v5687
        %6894 = vmatpush.bf16.msra.mxu0 %v5670
        %6895 = vmatpush.bf16.msra.mxu0 %v5653
        %6896 = vmatpush.bf16.msra.mxu0 %v5636
        %6897 = vmatpush.bf16.msra.mxu0 %v5619
        %6898 = vmatmul.bf16.gmra.mxu0 %v3194
        %v6899 = vpop.f32.mrf.mxu0
        %v6900 = vadd.f32 %v6887, %v6899
        %v6901 = vpop.f32.mrf.mxu0
        %6902 = vdwg.mxu0
        %6903 = vmatpush.bf16.msra.mxu0 %v5874
        %6904 = vmatpush.bf16.msra.mxu0 %v5857
        %6905 = vmatpush.bf16.msra.mxu0 %v5840
        %6906 = vmatpush.bf16.msra.mxu0 %v5823
        %6907 = vmatpush.bf16.msra.mxu0 %v5806
        %6908 = vmatpush.bf16.msra.mxu0 %v5789
        %6909 = vmatpush.bf16.msra.mxu0 %v5772
        %6910 = vmatpush.bf16.msra.mxu0 %v5755
        %6911 = vmatmul.bf16.gmra.mxu0 %v3195
        %v6912 = vpop.f32.mrf.mxu0
        %v6913 = vadd.f32 %v6900, %v6912
        %v6914 = vpop.f32.mrf.mxu0
        %6915 = vdwg.mxu0
        %6916 = vmatpush.bf16.msra.mxu0 %v6010
        %6917 = vmatpush.bf16.msra.mxu0 %v5993
        %6918 = vmatpush.bf16.msra.mxu0 %v5976
        %6919 = vmatpush.bf16.msra.mxu0 %v5959
        %6920 = vmatpush.bf16.msra.mxu0 %v5942
        %6921 = vmatpush.bf16.msra.mxu0 %v5925
        %6922 = vmatpush.bf16.msra.mxu0 %v5908
        %6923 = vmatpush.bf16.msra.mxu0 %v5891
        %6924 = vmatmul.bf16.gmra.mxu0 %v3196
        %v6925 = vpop.f32.mrf.mxu0
        %v6926 = vadd.f32 %v6913, %v6925
        %v6927 = vpop.f32.mrf.mxu0
        %6928 = vdwg.mxu0
        %6929 = vmatpush.bf16.msra.mxu0 %v5603
        %6930 = vmatpush.bf16.msra.mxu0 %v5586
        %6931 = vmatpush.bf16.msra.mxu0 %v5569
        %6932 = vmatpush.bf16.msra.mxu0 %v5552
        %6933 = vmatpush.bf16.msra.mxu0 %v5535
        %6934 = vmatpush.bf16.msra.mxu0 %v5518
        %6935 = vmatpush.bf16.msra.mxu0 %v5501
        %6936 = vmatpush.bf16.msra.mxu0 %v5484
        %6937 = vmatmul.bf16.gmra.mxu0 %v3193
        %v6938 = vpop.f32.mrf.mxu0
        %v6939 = vadd.f32 %v3786, %v6938
        %v6940 = vpop.f32.mrf.mxu0
        %6941 = vdwg.mxu0
        %6942 = vmatpush.bf16.msra.mxu0 %v5739
        %6943 = vmatpush.bf16.msra.mxu0 %v5722
        %6944 = vmatpush.bf16.msra.mxu0 %v5705
        %6945 = vmatpush.bf16.msra.mxu0 %v5688
        %6946 = vmatpush.bf16.msra.mxu0 %v5671
        %6947 = vmatpush.bf16.msra.mxu0 %v5654
        %6948 = vmatpush.bf16.msra.mxu0 %v5637
        %6949 = vmatpush.bf16.msra.mxu0 %v5620
        %6950 = vmatmul.bf16.gmra.mxu0 %v3194
        %v6951 = vpop.f32.mrf.mxu0
        %v6952 = vadd.f32 %v6939, %v6951
        %v6953 = vpop.f32.mrf.mxu0
        %6954 = vdwg.mxu0
        %6955 = vmatpush.bf16.msra.mxu0 %v5875
        %6956 = vmatpush.bf16.msra.mxu0 %v5858
        %6957 = vmatpush.bf16.msra.mxu0 %v5841
        %6958 = vmatpush.bf16.msra.mxu0 %v5824
        %6959 = vmatpush.bf16.msra.mxu0 %v5807
        %6960 = vmatpush.bf16.msra.mxu0 %v5790
        %6961 = vmatpush.bf16.msra.mxu0 %v5773
        %6962 = vmatpush.bf16.msra.mxu0 %v5756
        %6963 = vmatmul.bf16.gmra.mxu0 %v3195
        %v6964 = vpop.f32.mrf.mxu0
        %v6965 = vadd.f32 %v6952, %v6964
        %v6966 = vpop.f32.mrf.mxu0
        %6967 = vdwg.mxu0
        %6968 = vmatpush.bf16.msra.mxu0 %v6011
        %6969 = vmatpush.bf16.msra.mxu0 %v5994
        %6970 = vmatpush.bf16.msra.mxu0 %v5977
        %6971 = vmatpush.bf16.msra.mxu0 %v5960
        %6972 = vmatpush.bf16.msra.mxu0 %v5943
        %6973 = vmatpush.bf16.msra.mxu0 %v5926
        %6974 = vmatpush.bf16.msra.mxu0 %v5909
        %6975 = vmatpush.bf16.msra.mxu0 %v5892
        %6976 = vmatmul.bf16.gmra.mxu0 %v3196
        %v6977 = vpop.f32.mrf.mxu0
        %v6978 = vadd.f32 %v6965, %v6977
        %v6979 = vpop.f32.mrf.mxu0
        %6980 = vdwg.mxu0
        %6981 = vmatpush.bf16.msra.mxu0 %v5604
        %6982 = vmatpush.bf16.msra.mxu0 %v5587
        %6983 = vmatpush.bf16.msra.mxu0 %v5570
        %6984 = vmatpush.bf16.msra.mxu0 %v5553
        %6985 = vmatpush.bf16.msra.mxu0 %v5536
        %6986 = vmatpush.bf16.msra.mxu0 %v5519
        %6987 = vmatpush.bf16.msra.mxu0 %v5502
        %6988 = vmatpush.bf16.msra.mxu0 %v5485
        %6989 = vmatmul.bf16.gmra.mxu0 %v3193
        %v6990 = vpop.f32.mrf.mxu0
        %v6991 = vadd.f32 %v3787, %v6990
        %v6992 = vpop.f32.mrf.mxu0
        %6993 = vdwg.mxu0
        %6994 = vmatpush.bf16.msra.mxu0 %v5740
        %6995 = vmatpush.bf16.msra.mxu0 %v5723
        %6996 = vmatpush.bf16.msra.mxu0 %v5706
        %6997 = vmatpush.bf16.msra.mxu0 %v5689
        %6998 = vmatpush.bf16.msra.mxu0 %v5672
        %6999 = vmatpush.bf16.msra.mxu0 %v5655
        %7000 = vmatpush.bf16.msra.mxu0 %v5638
        %7001 = vmatpush.bf16.msra.mxu0 %v5621
        %7002 = vmatmul.bf16.gmra.mxu0 %v3194
        %v7003 = vpop.f32.mrf.mxu0
        %v7004 = vadd.f32 %v6991, %v7003
        %v7005 = vpop.f32.mrf.mxu0
        %7006 = vdwg.mxu0
        %7007 = vmatpush.bf16.msra.mxu0 %v5876
        %7008 = vmatpush.bf16.msra.mxu0 %v5859
        %7009 = vmatpush.bf16.msra.mxu0 %v5842
        %7010 = vmatpush.bf16.msra.mxu0 %v5825
        %7011 = vmatpush.bf16.msra.mxu0 %v5808
        %7012 = vmatpush.bf16.msra.mxu0 %v5791
        %7013 = vmatpush.bf16.msra.mxu0 %v5774
        %7014 = vmatpush.bf16.msra.mxu0 %v5757
        %7015 = vmatmul.bf16.gmra.mxu0 %v3195
        %v7016 = vpop.f32.mrf.mxu0
        %v7017 = vadd.f32 %v7004, %v7016
        %v7018 = vpop.f32.mrf.mxu0
        %7019 = vdwg.mxu0
        %7020 = vmatpush.bf16.msra.mxu0 %v6012
        %7021 = vmatpush.bf16.msra.mxu0 %v5995
        %7022 = vmatpush.bf16.msra.mxu0 %v5978
        %7023 = vmatpush.bf16.msra.mxu0 %v5961
        %7024 = vmatpush.bf16.msra.mxu0 %v5944
        %7025 = vmatpush.bf16.msra.mxu0 %v5927
        %7026 = vmatpush.bf16.msra.mxu0 %v5910
        %7027 = vmatpush.bf16.msra.mxu0 %v5893
        %7028 = vmatmul.bf16.gmra.mxu0 %v3196
        %v7029 = vpop.f32.mrf.mxu0
        %v7030 = vadd.f32 %v7017, %v7029
        %v7031 = vpop.f32.mrf.mxu0
        %7032 = vdwg.mxu0
        %7033 = vmatpush.bf16.msra.mxu0 %v5605
        %7034 = vmatpush.bf16.msra.mxu0 %v5588
        %7035 = vmatpush.bf16.msra.mxu0 %v5571
        %7036 = vmatpush.bf16.msra.mxu0 %v5554
        %7037 = vmatpush.bf16.msra.mxu0 %v5537
        %7038 = vmatpush.bf16.msra.mxu0 %v5520
        %7039 = vmatpush.bf16.msra.mxu0 %v5503
        %7040 = vmatpush.bf16.msra.mxu0 %v5486
        %7041 = vmatmul.bf16.gmra.mxu0 %v3193
        %v7042 = vpop.f32.mrf.mxu0
        %v7043 = vadd.f32 %v3788, %v7042
        %v7044 = vpop.f32.mrf.mxu0
        %7045 = vdwg.mxu0
        %7046 = vmatpush.bf16.msra.mxu0 %v5741
        %7047 = vmatpush.bf16.msra.mxu0 %v5724
        %7048 = vmatpush.bf16.msra.mxu0 %v5707
        %7049 = vmatpush.bf16.msra.mxu0 %v5690
        %7050 = vmatpush.bf16.msra.mxu0 %v5673
        %7051 = vmatpush.bf16.msra.mxu0 %v5656
        %7052 = vmatpush.bf16.msra.mxu0 %v5639
        %7053 = vmatpush.bf16.msra.mxu0 %v5622
        %7054 = vmatmul.bf16.gmra.mxu0 %v3194
        %v7055 = vpop.f32.mrf.mxu0
        %v7056 = vadd.f32 %v7043, %v7055
        %v7057 = vpop.f32.mrf.mxu0
        %7058 = vdwg.mxu0
        %7059 = vmatpush.bf16.msra.mxu0 %v5877
        %7060 = vmatpush.bf16.msra.mxu0 %v5860
        %7061 = vmatpush.bf16.msra.mxu0 %v5843
        %7062 = vmatpush.bf16.msra.mxu0 %v5826
        %7063 = vmatpush.bf16.msra.mxu0 %v5809
        %7064 = vmatpush.bf16.msra.mxu0 %v5792
        %7065 = vmatpush.bf16.msra.mxu0 %v5775
        %7066 = vmatpush.bf16.msra.mxu0 %v5758
        %7067 = vmatmul.bf16.gmra.mxu0 %v3195
        %v7068 = vpop.f32.mrf.mxu0
        %v7069 = vadd.f32 %v7056, %v7068
        %v7070 = vpop.f32.mrf.mxu0
        %7071 = vdwg.mxu0
        %7072 = vmatpush.bf16.msra.mxu0 %v6013
        %7073 = vmatpush.bf16.msra.mxu0 %v5996
        %7074 = vmatpush.bf16.msra.mxu0 %v5979
        %7075 = vmatpush.bf16.msra.mxu0 %v5962
        %7076 = vmatpush.bf16.msra.mxu0 %v5945
        %7077 = vmatpush.bf16.msra.mxu0 %v5928
        %7078 = vmatpush.bf16.msra.mxu0 %v5911
        %7079 = vmatpush.bf16.msra.mxu0 %v5894
        %7080 = vmatmul.bf16.gmra.mxu0 %v3196
        %v7081 = vpop.f32.mrf.mxu0
        %v7082 = vadd.f32 %v7069, %v7081
        %v7083 = vpop.f32.mrf.mxu0
        %7084 = vdwg.mxu0
        %7085 = vmatpush.bf16.msra.mxu0 %v5606
        %7086 = vmatpush.bf16.msra.mxu0 %v5589
        %7087 = vmatpush.bf16.msra.mxu0 %v5572
        %7088 = vmatpush.bf16.msra.mxu0 %v5555
        %7089 = vmatpush.bf16.msra.mxu0 %v5538
        %7090 = vmatpush.bf16.msra.mxu0 %v5521
        %7091 = vmatpush.bf16.msra.mxu0 %v5504
        %7092 = vmatpush.bf16.msra.mxu0 %v5487
        %7093 = vmatmul.bf16.gmra.mxu0 %v3193
        %v7094 = vpop.f32.mrf.mxu0
        %v7095 = vadd.f32 %v3789, %v7094
        %v7096 = vpop.f32.mrf.mxu0
        %7097 = vdwg.mxu0
        %7098 = vmatpush.bf16.msra.mxu0 %v5742
        %7099 = vmatpush.bf16.msra.mxu0 %v5725
        %7100 = vmatpush.bf16.msra.mxu0 %v5708
        %7101 = vmatpush.bf16.msra.mxu0 %v5691
        %7102 = vmatpush.bf16.msra.mxu0 %v5674
        %7103 = vmatpush.bf16.msra.mxu0 %v5657
        %7104 = vmatpush.bf16.msra.mxu0 %v5640
        %7105 = vmatpush.bf16.msra.mxu0 %v5623
        %7106 = vmatmul.bf16.gmra.mxu0 %v3194
        %v7107 = vpop.f32.mrf.mxu0
        %v7108 = vadd.f32 %v7095, %v7107
        %v7109 = vpop.f32.mrf.mxu0
        %7110 = vdwg.mxu0
        %7111 = vmatpush.bf16.msra.mxu0 %v5878
        %7112 = vmatpush.bf16.msra.mxu0 %v5861
        %7113 = vmatpush.bf16.msra.mxu0 %v5844
        %7114 = vmatpush.bf16.msra.mxu0 %v5827
        %7115 = vmatpush.bf16.msra.mxu0 %v5810
        %7116 = vmatpush.bf16.msra.mxu0 %v5793
        %7117 = vmatpush.bf16.msra.mxu0 %v5776
        %7118 = vmatpush.bf16.msra.mxu0 %v5759
        %7119 = vmatmul.bf16.gmra.mxu0 %v3195
        %v7120 = vpop.f32.mrf.mxu0
        %v7121 = vadd.f32 %v7108, %v7120
        %v7122 = vpop.f32.mrf.mxu0
        %7123 = vdwg.mxu0
        %7124 = vmatpush.bf16.msra.mxu0 %v6014
        %7125 = vmatpush.bf16.msra.mxu0 %v5997
        %7126 = vmatpush.bf16.msra.mxu0 %v5980
        %7127 = vmatpush.bf16.msra.mxu0 %v5963
        %7128 = vmatpush.bf16.msra.mxu0 %v5946
        %7129 = vmatpush.bf16.msra.mxu0 %v5929
        %7130 = vmatpush.bf16.msra.mxu0 %v5912
        %7131 = vmatpush.bf16.msra.mxu0 %v5895
        %7132 = vmatmul.bf16.gmra.mxu0 %v3196
        %v7133 = vpop.f32.mrf.mxu0
        %v7134 = vadd.f32 %v7121, %v7133
        %v7135 = vpop.f32.mrf.mxu0
        %7136 = vdwg.mxu0
        %7137 = vmatpush.bf16.msra.mxu0 %v5607
        %7138 = vmatpush.bf16.msra.mxu0 %v5590
        %7139 = vmatpush.bf16.msra.mxu0 %v5573
        %7140 = vmatpush.bf16.msra.mxu0 %v5556
        %7141 = vmatpush.bf16.msra.mxu0 %v5539
        %7142 = vmatpush.bf16.msra.mxu0 %v5522
        %7143 = vmatpush.bf16.msra.mxu0 %v5505
        %7144 = vmatpush.bf16.msra.mxu0 %v5488
        %7145 = vmatmul.bf16.gmra.mxu0 %v3193
        %v7146 = vpop.f32.mrf.mxu0
        %v7147 = vadd.f32 %v3790, %v7146
        %v7148 = vpop.f32.mrf.mxu0
        %7149 = vdwg.mxu0
        %7150 = vmatpush.bf16.msra.mxu0 %v5743
        %7151 = vmatpush.bf16.msra.mxu0 %v5726
        %7152 = vmatpush.bf16.msra.mxu0 %v5709
        %7153 = vmatpush.bf16.msra.mxu0 %v5692
        %7154 = vmatpush.bf16.msra.mxu0 %v5675
        %7155 = vmatpush.bf16.msra.mxu0 %v5658
        %7156 = vmatpush.bf16.msra.mxu0 %v5641
        %7157 = vmatpush.bf16.msra.mxu0 %v5624
        %7158 = vmatmul.bf16.gmra.mxu0 %v3194
        %v7159 = vpop.f32.mrf.mxu0
        %v7160 = vadd.f32 %v7147, %v7159
        %v7161 = vpop.f32.mrf.mxu0
        %7162 = vdwg.mxu0
        %7163 = vmatpush.bf16.msra.mxu0 %v5879
        %7164 = vmatpush.bf16.msra.mxu0 %v5862
        %7165 = vmatpush.bf16.msra.mxu0 %v5845
        %7166 = vmatpush.bf16.msra.mxu0 %v5828
        %7167 = vmatpush.bf16.msra.mxu0 %v5811
        %7168 = vmatpush.bf16.msra.mxu0 %v5794
        %7169 = vmatpush.bf16.msra.mxu0 %v5777
        %7170 = vmatpush.bf16.msra.mxu0 %v5760
        %7171 = vmatmul.bf16.gmra.mxu0 %v3195
        %v7172 = vpop.f32.mrf.mxu0
        %v7173 = vadd.f32 %v7160, %v7172
        %v7174 = vpop.f32.mrf.mxu0
        %7175 = vdwg.mxu0
        %7176 = vmatpush.bf16.msra.mxu0 %v6015
        %7177 = vmatpush.bf16.msra.mxu0 %v5998
        %7178 = vmatpush.bf16.msra.mxu0 %v5981
        %7179 = vmatpush.bf16.msra.mxu0 %v5964
        %7180 = vmatpush.bf16.msra.mxu0 %v5947
        %7181 = vmatpush.bf16.msra.mxu0 %v5930
        %7182 = vmatpush.bf16.msra.mxu0 %v5913
        %7183 = vmatpush.bf16.msra.mxu0 %v5896
        %7184 = vmatmul.bf16.gmra.mxu0 %v3196
        %v7185 = vpop.f32.mrf.mxu0
        %v7186 = vadd.f32 %v7173, %v7185
        %v7187 = vpop.f32.mrf.mxu0
        %7188 = vdwg.mxu0
        %7189 = vmatpush.bf16.msra.mxu0 %v5608
        %7190 = vmatpush.bf16.msra.mxu0 %v5591
        %7191 = vmatpush.bf16.msra.mxu0 %v5574
        %7192 = vmatpush.bf16.msra.mxu0 %v5557
        %7193 = vmatpush.bf16.msra.mxu0 %v5540
        %7194 = vmatpush.bf16.msra.mxu0 %v5523
        %7195 = vmatpush.bf16.msra.mxu0 %v5506
        %7196 = vmatpush.bf16.msra.mxu0 %v5489
        %7197 = vmatmul.bf16.gmra.mxu0 %v3193
        %v7198 = vpop.f32.mrf.mxu0
        %v7199 = vadd.f32 %v3791, %v7198
        %v7200 = vpop.f32.mrf.mxu0
        %7201 = vdwg.mxu0
        %7202 = vmatpush.bf16.msra.mxu0 %v5744
        %7203 = vmatpush.bf16.msra.mxu0 %v5727
        %7204 = vmatpush.bf16.msra.mxu0 %v5710
        %7205 = vmatpush.bf16.msra.mxu0 %v5693
        %7206 = vmatpush.bf16.msra.mxu0 %v5676
        %7207 = vmatpush.bf16.msra.mxu0 %v5659
        %7208 = vmatpush.bf16.msra.mxu0 %v5642
        %7209 = vmatpush.bf16.msra.mxu0 %v5625
        %7210 = vmatmul.bf16.gmra.mxu0 %v3194
        %v7211 = vpop.f32.mrf.mxu0
        %v7212 = vadd.f32 %v7199, %v7211
        %v7213 = vpop.f32.mrf.mxu0
        %7214 = vdwg.mxu0
        %7215 = vmatpush.bf16.msra.mxu0 %v5880
        %7216 = vmatpush.bf16.msra.mxu0 %v5863
        %7217 = vmatpush.bf16.msra.mxu0 %v5846
        %7218 = vmatpush.bf16.msra.mxu0 %v5829
        %7219 = vmatpush.bf16.msra.mxu0 %v5812
        %7220 = vmatpush.bf16.msra.mxu0 %v5795
        %7221 = vmatpush.bf16.msra.mxu0 %v5778
        %7222 = vmatpush.bf16.msra.mxu0 %v5761
        %7223 = vmatmul.bf16.gmra.mxu0 %v3195
        %v7224 = vpop.f32.mrf.mxu0
        %v7225 = vadd.f32 %v7212, %v7224
        %v7226 = vpop.f32.mrf.mxu0
        %7227 = vdwg.mxu0
        %7228 = vmatpush.bf16.msra.mxu0 %v6016
        %7229 = vmatpush.bf16.msra.mxu0 %v5999
        %7230 = vmatpush.bf16.msra.mxu0 %v5982
        %7231 = vmatpush.bf16.msra.mxu0 %v5965
        %7232 = vmatpush.bf16.msra.mxu0 %v5948
        %7233 = vmatpush.bf16.msra.mxu0 %v5931
        %7234 = vmatpush.bf16.msra.mxu0 %v5914
        %7235 = vmatpush.bf16.msra.mxu0 %v5897
        %7236 = vmatmul.bf16.gmra.mxu0 %v3196
        %v7237 = vpop.f32.mrf.mxu0
        %v7238 = vadd.f32 %v7225, %v7237
        %v7239 = vpop.f32.mrf.mxu0
        %7240 = vdwg.mxu0
        %7241 = vmatpush.bf16.msra.mxu0 %v5609
        %7242 = vmatpush.bf16.msra.mxu0 %v5592
        %7243 = vmatpush.bf16.msra.mxu0 %v5575
        %7244 = vmatpush.bf16.msra.mxu0 %v5558
        %7245 = vmatpush.bf16.msra.mxu0 %v5541
        %7246 = vmatpush.bf16.msra.mxu0 %v5524
        %7247 = vmatpush.bf16.msra.mxu0 %v5507
        %7248 = vmatpush.bf16.msra.mxu0 %v5490
        %7249 = vmatmul.bf16.gmra.mxu0 %v3193
        %v7250 = vpop.f32.mrf.mxu0
        %v7251 = vadd.f32 %v3792, %v7250
        %v7252 = vpop.f32.mrf.mxu0
        %7253 = vdwg.mxu0
        %7254 = vmatpush.bf16.msra.mxu0 %v5745
        %7255 = vmatpush.bf16.msra.mxu0 %v5728
        %7256 = vmatpush.bf16.msra.mxu0 %v5711
        %7257 = vmatpush.bf16.msra.mxu0 %v5694
        %7258 = vmatpush.bf16.msra.mxu0 %v5677
        %7259 = vmatpush.bf16.msra.mxu0 %v5660
        %7260 = vmatpush.bf16.msra.mxu0 %v5643
        %7261 = vmatpush.bf16.msra.mxu0 %v5626
        %7262 = vmatmul.bf16.gmra.mxu0 %v3194
        %v7263 = vpop.f32.mrf.mxu0
        %v7264 = vadd.f32 %v7251, %v7263
        %v7265 = vpop.f32.mrf.mxu0
        %7266 = vdwg.mxu0
        %7267 = vmatpush.bf16.msra.mxu0 %v5881
        %7268 = vmatpush.bf16.msra.mxu0 %v5864
        %7269 = vmatpush.bf16.msra.mxu0 %v5847
        %7270 = vmatpush.bf16.msra.mxu0 %v5830
        %7271 = vmatpush.bf16.msra.mxu0 %v5813
        %7272 = vmatpush.bf16.msra.mxu0 %v5796
        %7273 = vmatpush.bf16.msra.mxu0 %v5779
        %7274 = vmatpush.bf16.msra.mxu0 %v5762
        %7275 = vmatmul.bf16.gmra.mxu0 %v3195
        %v7276 = vpop.f32.mrf.mxu0
        %v7277 = vadd.f32 %v7264, %v7276
        %v7278 = vpop.f32.mrf.mxu0
        %7279 = vdwg.mxu0
        %7280 = vmatpush.bf16.msra.mxu0 %v6017
        %7281 = vmatpush.bf16.msra.mxu0 %v6000
        %7282 = vmatpush.bf16.msra.mxu0 %v5983
        %7283 = vmatpush.bf16.msra.mxu0 %v5966
        %7284 = vmatpush.bf16.msra.mxu0 %v5949
        %7285 = vmatpush.bf16.msra.mxu0 %v5932
        %7286 = vmatpush.bf16.msra.mxu0 %v5915
        %7287 = vmatpush.bf16.msra.mxu0 %v5898
        %7288 = vmatmul.bf16.gmra.mxu0 %v3196
        %v7289 = vpop.f32.mrf.mxu0
        %v7290 = vadd.f32 %v7277, %v7289
        %v7291 = vpop.f32.mrf.mxu0
        %7292 = vdwg.mxu0
        %7293 = vmatpush.bf16.msra.mxu0 %v5610
        %7294 = vmatpush.bf16.msra.mxu0 %v5593
        %7295 = vmatpush.bf16.msra.mxu0 %v5576
        %7296 = vmatpush.bf16.msra.mxu0 %v5559
        %7297 = vmatpush.bf16.msra.mxu0 %v5542
        %7298 = vmatpush.bf16.msra.mxu0 %v5525
        %7299 = vmatpush.bf16.msra.mxu0 %v5508
        %7300 = vmatpush.bf16.msra.mxu0 %v5491
        %7301 = vmatmul.bf16.gmra.mxu0 %v3193
        %v7302 = vpop.f32.mrf.mxu0
        %v7303 = vadd.f32 %v3793, %v7302
        %v7304 = vpop.f32.mrf.mxu0
        %7305 = vdwg.mxu0
        %7306 = vmatpush.bf16.msra.mxu0 %v5746
        %7307 = vmatpush.bf16.msra.mxu0 %v5729
        %7308 = vmatpush.bf16.msra.mxu0 %v5712
        %7309 = vmatpush.bf16.msra.mxu0 %v5695
        %7310 = vmatpush.bf16.msra.mxu0 %v5678
        %7311 = vmatpush.bf16.msra.mxu0 %v5661
        %7312 = vmatpush.bf16.msra.mxu0 %v5644
        %7313 = vmatpush.bf16.msra.mxu0 %v5627
        %7314 = vmatmul.bf16.gmra.mxu0 %v3194
        %v7315 = vpop.f32.mrf.mxu0
        %v7316 = vadd.f32 %v7303, %v7315
        %v7317 = vpop.f32.mrf.mxu0
        %7318 = vdwg.mxu0
        %7319 = vmatpush.bf16.msra.mxu0 %v5882
        %7320 = vmatpush.bf16.msra.mxu0 %v5865
        %7321 = vmatpush.bf16.msra.mxu0 %v5848
        %7322 = vmatpush.bf16.msra.mxu0 %v5831
        %7323 = vmatpush.bf16.msra.mxu0 %v5814
        %7324 = vmatpush.bf16.msra.mxu0 %v5797
        %7325 = vmatpush.bf16.msra.mxu0 %v5780
        %7326 = vmatpush.bf16.msra.mxu0 %v5763
        %7327 = vmatmul.bf16.gmra.mxu0 %v3195
        %v7328 = vpop.f32.mrf.mxu0
        %v7329 = vadd.f32 %v7316, %v7328
        %v7330 = vpop.f32.mrf.mxu0
        %7331 = vdwg.mxu0
        %7332 = vmatpush.bf16.msra.mxu0 %v6018
        %7333 = vmatpush.bf16.msra.mxu0 %v6001
        %7334 = vmatpush.bf16.msra.mxu0 %v5984
        %7335 = vmatpush.bf16.msra.mxu0 %v5967
        %7336 = vmatpush.bf16.msra.mxu0 %v5950
        %7337 = vmatpush.bf16.msra.mxu0 %v5933
        %7338 = vmatpush.bf16.msra.mxu0 %v5916
        %7339 = vmatpush.bf16.msra.mxu0 %v5899
        %7340 = vmatmul.bf16.gmra.mxu0 %v3196
        %v7341 = vpop.f32.mrf.mxu0
        %v7342 = vadd.f32 %v7329, %v7341
        %v7343 = vpop.f32.mrf.mxu0
        %7344 = vdwg.mxu0
        %7345 = vmatpush.bf16.msra.mxu0 %v5611
        %7346 = vmatpush.bf16.msra.mxu0 %v5594
        %7347 = vmatpush.bf16.msra.mxu0 %v5577
        %7348 = vmatpush.bf16.msra.mxu0 %v5560
        %7349 = vmatpush.bf16.msra.mxu0 %v5543
        %7350 = vmatpush.bf16.msra.mxu0 %v5526
        %7351 = vmatpush.bf16.msra.mxu0 %v5509
        %7352 = vmatpush.bf16.msra.mxu0 %v5492
        %7353 = vmatmul.bf16.gmra.mxu0 %v3193
        %v7354 = vpop.f32.mrf.mxu0
        %v7355 = vadd.f32 %v3794, %v7354
        %v7356 = vpop.f32.mrf.mxu0
        %7357 = vdwg.mxu0
        %7358 = vmatpush.bf16.msra.mxu0 %v5747
        %7359 = vmatpush.bf16.msra.mxu0 %v5730
        %7360 = vmatpush.bf16.msra.mxu0 %v5713
        %7361 = vmatpush.bf16.msra.mxu0 %v5696
        %7362 = vmatpush.bf16.msra.mxu0 %v5679
        %7363 = vmatpush.bf16.msra.mxu0 %v5662
        %7364 = vmatpush.bf16.msra.mxu0 %v5645
        %7365 = vmatpush.bf16.msra.mxu0 %v5628
        %7366 = vmatmul.bf16.gmra.mxu0 %v3194
        %v7367 = vpop.f32.mrf.mxu0
        %v7368 = vadd.f32 %v7355, %v7367
        %v7369 = vpop.f32.mrf.mxu0
        %7370 = vdwg.mxu0
        %7371 = vmatpush.bf16.msra.mxu0 %v5883
        %7372 = vmatpush.bf16.msra.mxu0 %v5866
        %7373 = vmatpush.bf16.msra.mxu0 %v5849
        %7374 = vmatpush.bf16.msra.mxu0 %v5832
        %7375 = vmatpush.bf16.msra.mxu0 %v5815
        %7376 = vmatpush.bf16.msra.mxu0 %v5798
        %7377 = vmatpush.bf16.msra.mxu0 %v5781
        %7378 = vmatpush.bf16.msra.mxu0 %v5764
        %7379 = vmatmul.bf16.gmra.mxu0 %v3195
        %v7380 = vpop.f32.mrf.mxu0
        %v7381 = vadd.f32 %v7368, %v7380
        %v7382 = vpop.f32.mrf.mxu0
        %7383 = vdwg.mxu0
        %7384 = vmatpush.bf16.msra.mxu0 %v6019
        %7385 = vmatpush.bf16.msra.mxu0 %v6002
        %7386 = vmatpush.bf16.msra.mxu0 %v5985
        %7387 = vmatpush.bf16.msra.mxu0 %v5968
        %7388 = vmatpush.bf16.msra.mxu0 %v5951
        %7389 = vmatpush.bf16.msra.mxu0 %v5934
        %7390 = vmatpush.bf16.msra.mxu0 %v5917
        %7391 = vmatpush.bf16.msra.mxu0 %v5900
        %7392 = vmatmul.bf16.gmra.mxu0 %v3196
        %v7393 = vpop.f32.mrf.mxu0
        %v7394 = vadd.f32 %v7381, %v7393
        %v7395 = vpop.f32.mrf.mxu0
        %7396 = vdwg.mxu0
        %7397 = vmatpush.bf16.msra.mxu0 %v5612
        %7398 = vmatpush.bf16.msra.mxu0 %v5595
        %7399 = vmatpush.bf16.msra.mxu0 %v5578
        %7400 = vmatpush.bf16.msra.mxu0 %v5561
        %7401 = vmatpush.bf16.msra.mxu0 %v5544
        %7402 = vmatpush.bf16.msra.mxu0 %v5527
        %7403 = vmatpush.bf16.msra.mxu0 %v5510
        %7404 = vmatpush.bf16.msra.mxu0 %v5493
        %7405 = vmatmul.bf16.gmra.mxu0 %v3193
        %v7406 = vpop.f32.mrf.mxu0
        %v7407 = vadd.f32 %v3795, %v7406
        %v7408 = vpop.f32.mrf.mxu0
        %7409 = vdwg.mxu0
        %7410 = vmatpush.bf16.msra.mxu0 %v5748
        %7411 = vmatpush.bf16.msra.mxu0 %v5731
        %7412 = vmatpush.bf16.msra.mxu0 %v5714
        %7413 = vmatpush.bf16.msra.mxu0 %v5697
        %7414 = vmatpush.bf16.msra.mxu0 %v5680
        %7415 = vmatpush.bf16.msra.mxu0 %v5663
        %7416 = vmatpush.bf16.msra.mxu0 %v5646
        %7417 = vmatpush.bf16.msra.mxu0 %v5629
        %7418 = vmatmul.bf16.gmra.mxu0 %v3194
        %v7419 = vpop.f32.mrf.mxu0
        %v7420 = vadd.f32 %v7407, %v7419
        %v7421 = vpop.f32.mrf.mxu0
        %7422 = vdwg.mxu0
        %7423 = vmatpush.bf16.msra.mxu0 %v5884
        %7424 = vmatpush.bf16.msra.mxu0 %v5867
        %7425 = vmatpush.bf16.msra.mxu0 %v5850
        %7426 = vmatpush.bf16.msra.mxu0 %v5833
        %7427 = vmatpush.bf16.msra.mxu0 %v5816
        %7428 = vmatpush.bf16.msra.mxu0 %v5799
        %7429 = vmatpush.bf16.msra.mxu0 %v5782
        %7430 = vmatpush.bf16.msra.mxu0 %v5765
        %7431 = vmatmul.bf16.gmra.mxu0 %v3195
        %v7432 = vpop.f32.mrf.mxu0
        %v7433 = vadd.f32 %v7420, %v7432
        %v7434 = vpop.f32.mrf.mxu0
        %7435 = vdwg.mxu0
        %7436 = vmatpush.bf16.msra.mxu0 %v6020
        %7437 = vmatpush.bf16.msra.mxu0 %v6003
        %7438 = vmatpush.bf16.msra.mxu0 %v5986
        %7439 = vmatpush.bf16.msra.mxu0 %v5969
        %7440 = vmatpush.bf16.msra.mxu0 %v5952
        %7441 = vmatpush.bf16.msra.mxu0 %v5935
        %7442 = vmatpush.bf16.msra.mxu0 %v5918
        %7443 = vmatpush.bf16.msra.mxu0 %v5901
        %7444 = vmatmul.bf16.gmra.mxu0 %v3196
        %v7445 = vpop.f32.mrf.mxu0
        %v7446 = vadd.f32 %v7433, %v7445
        %v7447 = vpop.f32.mrf.mxu0
        %7448 = vdwg.mxu0
        %7449 = vst [vmem:[%s398] sm:$0xff] %v6614
        %7450 = vst [vmem:[%s398 + $0x8] sm:$0xff] %v6666
        %7451 = vst [vmem:[%s398 + $0x10] sm:$0xff] %v6718
        %7452 = vst [vmem:[%s398 + $0x18] sm:$0xff] %v6770
        %7453 = vst [vmem:[%s398 + $0x20] sm:$0xff] %v6822
        %7454 = vst [vmem:[%s398 + $0x28] sm:$0xff] %v6874
        %7455 = vst [vmem:[%s398 + $0x30] sm:$0xff] %v6926
        %7456 = vst [vmem:[%s398 + $0x38] sm:$0xff] %v6978
        %7457 = vst [vmem:[%s398 + $0x40] sm:$0xff] %v7030
        %7458 = vst [vmem:[%s398 + $0x48] sm:$0xff] %v7082
        %7459 = vst [vmem:[%s398 + $0x50] sm:$0xff] %v7134
        %7460 = vst [vmem:[%s398 + $0x58] sm:$0xff] %v7186
        %7461 = vst [vmem:[%s398 + $0x60] sm:$0xff] %v7238
        %7462 = vst [vmem:[%s398 + $0x68] sm:$0xff] %v7290
        %7463 = vst [vmem:[%s398 + $0x70] sm:$0xff] %v7342
        %7464 = vst [vmem:[%s398 + $0x78] sm:$0xff] %v7394
        %7465 = vst [vmem:[%s398 + $0x80] sm:$0xff] %v7446
        %s7466 = smul.u32 17, %s21
        %p7467 = scmp.lt.s32.totalorder %s7466, 33
        %s7468 = scalar_select %p7467, %s7466, 33
        %s7469 = smul.addr %s7468, 8
        %s7470 = scalar_lea.vmem %s7, %s7469
        // Predicated region
        $region73: #{pose_interpolator_fc_forward.1} parent=47 // pred_check
          %p7471 = pneg %p196
        $region74: #{pose_interpolator_fc_forward.1} parent=47 // pred_check_branch
          %7473 = sbr.rel (%p7471) target = $region76
        $region75: #{pose_interpolator_fc_forward.1} parent=47 // pred_region
          %s7474 = smul.u32 17, %s21
        $region76: #{pose_interpolator_fc_forward.1} parent=47 // pred_fallthru
          _
      $region48: #{pose_interpolator_fc_forward.1} parent=5 // pred_fallthru
        _
      %p7475 = scmp.le.s32.totalorder 2, %s16
      // Predicated region
      $region77: #{pose_interpolator_fc_forward.1} parent=5 // pred_check
        %p7476 = pneg %p7475
      $region78: #{pose_interpolator_fc_forward.1} parent=5 // pred_check_branch
        %7478 = sbr.rel (%p7476) target = $region80
      $region79: #{pose_interpolator_fc_forward.1} parent=5 // pred_region
        %s7479 = ssub.s32 %s16, 2
        // Predicated region
        $region81: #{pose_interpolator_fc_forward.1} parent=79 // pred_check
          %p7480 = pneg %p202
        $region82: #{pose_interpolator_fc_forward.1} parent=79 // pred_check_branch
          %7482 = sbr.rel (%p7480) target = $region84
        $region83: #{pose_interpolator_fc_forward.1} parent=79 // pred_region
          %s7483 = smul.u32 17, %s22
          %p7484 = scmp.lt.s32.totalorder %s7483, 33
          %s7485 = scalar_select %p7484, %s7483, 33
          %s7486 = smul.addr %s7485, 8
          %s7487 = scalar_lea.vmem %s7, %s7486
        $region84: #{pose_interpolator_fc_forward.1} parent=79 // pred_fallthru
          _
      $region80: #{pose_interpolator_fc_forward.1} parent=5 // pred_fallthru
        _
    $region6: #{pose_interpolator_fc_forward.1} parent=1 // loop_footer
      %s20 = sadd.s32 1, %s16
    $region7: #{pose_interpolator_fc_forward.1} parent=1 // loop_footer_branch
      %15 = sbr.rel target = $region3
    $region8: #{pose_interpolator_fc_forward.1} parent=1 // loop_exit
      _
    %7488 = vsyncpa [#allocation3], 1
    %s7489 = scalar_lea.sflag [#allocation3], 1
    %7490 = vsyncpa %s7489, 1
    %7491 = vsyncpa [#allocation5], 1
    %7492 = vsyncpa [#allocation8], 1

</llo_original>
